<compile_context>
chip_gen: v7x
topology: tpu7x:2x2x1
jax: 0.10.0
libtpu: 0.0.40
codegen_flags: <defaults>
</compile_context>

<pallas_src>
import functools

import jax
import jax.numpy as jnp
from jax.experimental import pallas as pl
from jax.experimental.pallas import tpu as pltpu

NEG_SLOPE = 0.01                  # torch.nn.LeakyReLU default
_SUBLANE = 8
_LANE = 128
_DEF_TILE = 256                   # MXU-aligned batch tile (v6e/v7x 256x256 MXU)
_F32 = jnp.float32

INPUT_SIZE = 16 * 2
OUTPUT_POSE3D = 16 * 3
OUTPUT_CAMERA = 6
OUTPUT_TOTAL = OUTPUT_POSE3D + OUTPUT_CAMERA
OUT_PAD = _LANE                   # lane-dense head output (54 -> 128)

_N_BLOCKS = 5
_BLOCK_ORDER = ("linear_stage", "pose3d_stages1", "pose3d_stages2",
                "camera_stages1", "camera_stages2")


def _leaky_relu(v):
    return jnp.where(v >= 0, v, NEG_SLOPE * v)


def _round_up(n, m):
    return ((n + m - 1) // m) * m


# ------------------------------------------------------------------ kernel ---
def _regression_kernel(x_ref, w_in_ref, b_in_ref, w_blk_ref, b_blk_ref,
                       w21_ref, b21_ref, w_head_ref, b_head_ref, o_ref):
    """Whole Regression forward for one batch tile; activations stay in VMEM."""

    def mm(a, w):
        # MXU matmul with f32 accumulation; `a` is cast only when weights are bf16.
        return jnp.dot(a.astype(w.dtype), w, preferred_element_type=jnp.float32)

    def res_block(h, i):
        # repnet `Linear`: LeakyReLU(h + W2 @ LeakyReLU(W1 @ h + b1) + b2)
        y = _leaky_relu(mm(h, w_blk_ref[i, 0]) + b_blk_ref[i, 0])
        return _leaky_relu(h + mm(y, w_blk_ref[i, 1]) + b_blk_ref[i, 1])

    h = _leaky_relu(mm(x_ref[...], w_in_ref[...]) + b_in_ref[...])   # w1
    h = res_block(h, 0)                                              # linear_stage

    y2 = res_block(res_block(h, 1), 2)                               # pose3d stages
    y2 = _leaky_relu(mm(y2, w21_ref[...]) + b21_ref[...])            # w21
    head = mm(y2, w_head_ref[0])                                     # w22 -> cols 0..47

    y3 = res_block(res_block(h, 3), 4)                               # camera stages
    head = head + mm(y3, w_head_ref[1]) + b_head_ref[...]            # w3  -> cols 48..53

    o_ref[...] = head.astype(o_ref.dtype)


# ----------------------------------------------------------- tiling helpers ---
def _choose_tm(batch, requested=None):
    """MXU-aligned batch tile: up to 256 rows, multiple of 8, no forced split."""
    tm = _DEF_TILE if requested is None else requested
    tm = min(tm, _round_up(batch, _SUBLANE))
    return max(_SUBLANE, _round_up(tm, _SUBLANE))


def _physical_vmem_bytes():
    try:
        return int(pltpu.get_tpu_info().vmem_capacity_bytes)
    except Exception:
        return 64 << 20           # conservative (v7x per-TensorCore)


def _vmem_limit_bytes(tm, d_in, hp, wbytes, single_buffer):
    nbuf = 1 if single_buffer else 2
    weights = (d_in * hp + 11 * hp * hp + 2 * hp * OUT_PAD) * wbytes * nbuf
    biases = (13 * hp + OUT_PAD) * 4 * nbuf
    io = (tm * d_in + tm * OUT_PAD) * 4 * 2          # x/out tiles, double-buffered
    temps = 6 * tm * hp * 4                          # live f32 activations
    total = int((weights + biases + io + temps) * 1.25) + (4 << 20)
    cap = _physical_vmem_bytes() - (8 << 20)         # generation-aware headroom
    return int(min(max(total, 32 << 20), cap))


def _resident_spec(shape, single_buffer):
    """Constant-index (VMEM-resident) input; single-buffered when supported."""
    zeros = (0,) * len(shape)
    index_map = lambda i, _z=zeros: _z
    if single_buffer:
        return pl.BlockSpec(shape, index_map, pipeline_mode=pl.Buffered(1))
    return pl.BlockSpec(shape, index_map)


# ----------------------------------------------------------------- forward ---
def regression_forward(x, p, *, tm=None, single_buffer=True):
    """Fused Pallas forward of Regression; `p` is prepare_params() output."""
    batch, d_in = x.shape
    hp = p["w_blocks"].shape[-1]
    assert d_in == p["w_in"].shape[0]

    tm = _choose_tm(batch, tm)
    grid = (pl.cdiv(batch, tm),)
    wbytes = jnp.dtype(p["w_blocks"].dtype).itemsize
    vmem = _vmem_limit_bytes(tm, d_in, hp, wbytes, single_buffer)
    res = functools.partial(_resident_spec, single_buffer=single_buffer)

    out = pl.pallas_call(
        _regression_kernel,
        out_shape=jax.ShapeDtypeStruct((batch, OUT_PAD), x.dtype),
        grid_spec=pltpu.PrefetchScalarGridSpec(
            num_scalar_prefetch=0,
            grid=grid,
            in_specs=[
                pl.BlockSpec((tm, d_in), lambda i: (i, 0)),   # x tile
                res((d_in, hp)),                              # w1
                res((1, hp)),                                 # b1
                res((_N_BLOCKS, 2, hp, hp)),                  # residual-block weights
                res((_N_BLOCKS, 2, 1, hp)),                   # residual-block biases
                res((hp, hp)),                                # w21
                res((1, hp)),                                 # b21
                res((2, hp, OUT_PAD)),                        # [w22 | w3] lane-padded
                res((1, OUT_PAD)),                            # [b22 | b3] lane-padded
            ],
            out_specs=pl.BlockSpec((tm, OUT_PAD), lambda i: (i, 0)),
        ),
        compiler_params=pltpu.CompilerParams(
            dimension_semantics=("parallel",),
            vmem_limit_bytes=vmem,
        ),
    )(x, p["w_in"], p["b_in"], p["w_blocks"], p["b_blocks"],
      p["w21"], p["b21"], p["w_head"], p["b_head"])

    # torch.cat((y2, y3), 1): heads were already written at lane offsets 0..53.
    return out[:, :OUTPUT_TOTAL]


# ------------------------------------------------------------------ params ---
def _init_linear(key, d_in, d_out):
    """torch.nn.Linear default init; weight stored transposed as (in, out)."""
    kw, kb = jax.random.split(key)
    bound = 1.0 / (d_in ** 0.5)
    w = jax.random.uniform(kw, (d_out, d_in), _F32, -bound, bound).T
    b = jax.random.uniform(kb, (d_out,), _F32, -bound, bound)
    return w, b


def _init_block(key, h):
    k1, k2 = jax.random.split(key)
    return _init_linear(k1, h, h) + _init_linear(k2, h, h)


def init_params(key, linear_size):
    h = linear_size
    keys = jax.random.split(key, 9)
    return {
        "w1": _init_linear(keys[0], INPUT_SIZE, h),
        "linear_stage": _init_block(keys[1], h),
        "pose3d_stages1": _init_block(keys[2], h),
        "pose3d_stages2": _init_block(keys[3], h),
        "w21": _init_linear(keys[4], h, h),
        "w22": _init_linear(keys[5], h, OUTPUT_POSE3D),
        "camera_stages1": _init_block(keys[6], h),
        "camera_stages2": _init_block(keys[7], h),
        "w3": _init_linear(keys[8], h, OUTPUT_CAMERA),
    }


def prepare_params(params, weight_dtype=None):
    """One-time prep: zero-pad hidden dim to a multiple of 128, stack per-layer
    tensors, place both heads in one lane-dense (hp, 128) pair, optional bf16.
    Padded lanes have zero weights AND zero biases, so they stay exactly zero
    through LeakyReLU / residual adds (numerically identical to unpadded)."""
    wdt = _F32 if weight_dtype is None else weight_dtype
    h = params["w1"][0].shape[1]
    hp = _round_up(h, _LANE)

    def pad_w(w, rows, cols):
        return jnp.pad(w, ((0, rows - w.shape[0]),
                           (0, cols - w.shape[1]))).astype(wdt)

    def pad_b(b, cols):
        b = b.reshape(1, -1)
        return jnp.pad(b, ((0, 0), (0, cols - b.shape[1]))).astype(_F32)

    w_in, b_in = params["w1"]
    w21, b21 = params["w21"]
    w22, b22 = params["w22"]
    w3, b3 = params["w3"]

    w_blocks = jnp.stack([
        jnp.stack([pad_w(params[n][0], hp, hp), pad_w(params[n][2], hp, hp)])
        for n in _BLOCK_ORDER])                                 # (5, 2, hp, hp)
    b_blocks = jnp.stack([
        jnp.stack([pad_b(params[n][1], hp), pad_b(params[n][3], hp)])
        for n in _BLOCK_ORDER])                                 # (5, 2, 1, hp)

    w_head = jnp.zeros((2, hp, OUT_PAD), wdt)
    w_head = w_head.at[0, :h, :OUTPUT_POSE3D].set(w22.astype(wdt))
    w_head = w_head.at[1, :h, OUTPUT_POSE3D:OUTPUT_TOTAL].set(w3.astype(wdt))
    b_head = jnp.zeros((1, OUT_PAD), _F32)
    b_head = b_head.at[0, :OUTPUT_POSE3D].set(b22.astype(_F32))
    b_head = b_head.at[0, OUTPUT_POSE3D:OUTPUT_TOTAL].set(b3.astype(_F32))

    return {
        "w_in": pad_w(w_in, INPUT_SIZE, hp), "b_in": pad_b(b_in, hp),
        "w_blocks": w_blocks, "b_blocks": b_blocks,
        "w21": pad_w(w21, hp, hp), "b21": pad_b(b21, hp),
        "w_head": w_head, "b_head": b_head,
    }


# --------------------------------------------------------------- reference ---
def reference_forward(x, params):
    """Pure-JAX f32 reference mirroring the torch module."""
    def lin(h, w, b):
        return h @ w + b

    def block(h, w1, b1, w2, b2):
        y = _leaky_relu(lin(h, w1, b1))
        return _leaky_relu(h + lin(y, w2, b2))

    h = _leaky_relu(lin(x, *params["w1"]))
    h = block(h, *params["linear_stage"])
    y2 = block(h, *params["pose3d_stages1"])
    y2 = block(y2, *params["pose3d_stages2"])
    y2 = _leaky_relu(lin(y2, *params["w21"]))
    y2 = lin(y2, *params["w22"])
    y3 = block(h, *params["camera_stages1"])
    y3 = block(y3, *params["camera_stages2"])
    y3 = lin(y3, *params["w3"])
    return jnp.concatenate([y2, y3], axis=1)


# -------------------------------------------------------------------- main ---
if __name__ == "__main__":
    key = jax.random.PRNGKey(0)
    kx, kp = jax.random.split(key)

    batch = 16
    linear_size = 120          # small demo hidden size; exercises the 120->128 pad
    x = jax.random.normal(kx, (batch, INPUT_SIZE), _F32)
    params = init_params(kp, linear_size)
    ref = reference_forward(x, params)

    def run(prepared, single_buffer):
        fwd = jax.jit(functools.partial(regression_forward,
                                        single_buffer=single_buffer))
        return jax.block_until_ready(fwd(x, prepared))

    p_f32 = prepare_params(params)
    try:
        out_f32 = run(p_f32, True)
        single_buffer = True
    except Exception:
        # pipeline_mode=pl.Buffered(1) not supported on this jax/libtpu combo:
        # fall back to default double-buffered resident weights (same math).
        out_f32 = run(p_f32, False)
        single_buffer = False

    assert out_f32.shape == (batch, OUTPUT_TOTAL)
    assert jnp.allclose(out_f32, ref, atol=3e-3, rtol=3e-3), "f32 mismatch"

    # bf16 weights (f32 accumulation / f32 residual in-kernel): sanity check.
    out_bf16 = run(prepare_params(params, jnp.bfloat16), single_buffer)
    assert out_bf16.shape == out_f32.shape
    assert bool(jnp.all(jnp.isfinite(out_bf16)))
    assert jnp.allclose(out_bf16, ref, atol=5e-1, rtol=2e-1), "bf16 mismatch"

    print("KERNEL_OK")
</pallas_src>

<mosaic_0001>
module attributes {stable_mosaic.version = 11 : i64} {
  func.func @_regression_kernel(%arg0: i32, %arg1: memref<16x32xf32, #tpu.memory_space<vmem>>, %arg2: memref<32x128xf32, #tpu.memory_space<vmem>>, %arg3: memref<1x128xf32, #tpu.memory_space<vmem>>, %arg4: memref<5x2x128x128xf32, #tpu.memory_space<vmem>>, %arg5: memref<5x2x1x128xf32, #tpu.memory_space<vmem>>, %arg6: memref<128x128xf32, #tpu.memory_space<vmem>>, %arg7: memref<1x128xf32, #tpu.memory_space<vmem>>, %arg8: memref<2x128x128xf32, #tpu.memory_space<vmem>>, %arg9: memref<1x128xf32, #tpu.memory_space<vmem>>, %arg10: memref<16x128xf32, #tpu.memory_space<vmem>>) attributes {dimension_semantics = [#tpu.dimension_semantics<parallel>], iteration_bounds = array<i64: 1>, scalar_prefetch = 0 : i64, scratch_operands = 0 : i64, tpu.core_type = #tpu.core_type<tc>, window_params = [{transform_indices = @transform_0, window_bounds = array<i64: 16, 32>}, {pipeline_mode = #tpu.pipeline_mode<synchronous>, transform_indices = @transform_1, window_bounds = array<i64: 32, 128>}, {pipeline_mode = #tpu.pipeline_mode<synchronous>, transform_indices = @transform_2, window_bounds = array<i64: 1, 128>}, {pipeline_mode = #tpu.pipeline_mode<synchronous>, transform_indices = @transform_3, window_bounds = array<i64: 5, 2, 128, 128>}, {pipeline_mode = #tpu.pipeline_mode<synchronous>, transform_indices = @transform_4, window_bounds = array<i64: 5, 2, 1, 128>}, {pipeline_mode = #tpu.pipeline_mode<synchronous>, transform_indices = @transform_5, window_bounds = array<i64: 128, 128>}, {pipeline_mode = #tpu.pipeline_mode<synchronous>, transform_indices = @transform_6, window_bounds = array<i64: 1, 128>}, {pipeline_mode = #tpu.pipeline_mode<synchronous>, transform_indices = @transform_7, window_bounds = array<i64: 2, 128, 128>}, {pipeline_mode = #tpu.pipeline_mode<synchronous>, transform_indices = @transform_8, window_bounds = array<i64: 1, 128>}, {transform_indices = @transform_9, window_bounds = array<i64: 16, 128>}]} {
    %c0 = arith.constant 0 : index
    %c0_0 = arith.constant 0 : index
    %0 = vector.load %arg1[%c0, %c0_0] : memref<16x32xf32, #tpu.memory_space<vmem>>, vector<16x32xf32>
    %c0_1 = arith.constant 0 : index
    %c0_2 = arith.constant 0 : index
    %1 = vector.load %arg2[%c0_1, %c0_2] : memref<32x128xf32, #tpu.memory_space<vmem>>, vector<32x128xf32>
    %cst = arith.constant dense<0.000000e+00> : vector<16x128xf32>
    %2 = tpu.matmul %0, %1, %cst {dimension_numbers = #tpu.dot_dimension_numbers<[1], [0], [0], [1], [0, 0, 1, 1], [], []>} : vector<16x32xf32>, vector<32x128xf32>, vector<16x128xf32> -> vector<16x128xf32>
    %c0_3 = arith.constant 0 : index
    %c0_4 = arith.constant 0 : index
    %3 = vector.load %arg3[%c0_3, %c0_4] : memref<1x128xf32, #tpu.memory_space<vmem>>, vector<1x128xf32>
    %4 = vector.broadcast %3 : vector<1x128xf32> to vector<16x128xf32>
    %5 = arith.addf %2, %4 : vector<16x128xf32>
    %cst_5 = arith.constant 0.000000e+00 : f32
    %6 = vector.broadcast %cst_5 : f32 to vector<16x128xf32>
    %7 = arith.cmpf oge, %5, %6 : vector<16x128xf32>
    %cst_6 = arith.constant 0.00999999977 : f32
    %8 = vector.broadcast %cst_6 : f32 to vector<16x128xf32>
    %9 = arith.mulf %8, %5 : vector<16x128xf32>
    %10 = arith.select %7, %5, %9 : vector<16x128xi1>, vector<16x128xf32>
    %c0_7 = arith.constant 0 : index
    %c0_8 = arith.constant 0 : index
    %c0_9 = arith.constant 0 : index
    %c0_10 = arith.constant 0 : index
    %11 = vector.load %arg4[%c0_7, %c0_8, %c0_9, %c0_10] : memref<5x2x128x128xf32, #tpu.memory_space<vmem>>, vector<1x1x128x128xf32>
    %12 = vector.shape_cast %11 : vector<1x1x128x128xf32> to vector<128x128xf32>
    %cst_11 = arith.constant dense<0.000000e+00> : vector<16x128xf32>
    %13 = tpu.matmul %10, %12, %cst_11 {dimension_numbers = #tpu.dot_dimension_numbers<[1], [0], [0], [1], [0, 0, 1, 1], [], []>} : vector<16x128xf32>, vector<128x128xf32>, vector<16x128xf32> -> vector<16x128xf32>
    %c0_12 = arith.constant 0 : index
    %c0_13 = arith.constant 0 : index
    %c0_14 = arith.constant 0 : index
    %c0_15 = arith.constant 0 : index
    %14 = vector.load %arg5[%c0_12, %c0_13, %c0_14, %c0_15] : memref<5x2x1x128xf32, #tpu.memory_space<vmem>>, vector<1x1x1x128xf32>
    %15 = vector.shape_cast %14 : vector<1x1x1x128xf32> to vector<1x128xf32>
    %16 = vector.broadcast %15 : vector<1x128xf32> to vector<16x128xf32>
    %17 = arith.addf %13, %16 : vector<16x128xf32>
    %cst_16 = arith.constant 0.000000e+00 : f32
    %18 = vector.broadcast %cst_16 : f32 to vector<16x128xf32>
    %19 = arith.cmpf oge, %17, %18 : vector<16x128xf32>
    %cst_17 = arith.constant 0.00999999977 : f32
    %20 = vector.broadcast %cst_17 : f32 to vector<16x128xf32>
    %21 = arith.mulf %20, %17 : vector<16x128xf32>
    %22 = arith.select %19, %17, %21 : vector<16x128xi1>, vector<16x128xf32>
    %c0_18 = arith.constant 0 : index
    %c1 = arith.constant 1 : index
    %c0_19 = arith.constant 0 : index
    %c0_20 = arith.constant 0 : index
    %23 = vector.load %arg4[%c0_18, %c1, %c0_19, %c0_20] : memref<5x2x128x128xf32, #tpu.memory_space<vmem>>, vector<1x1x128x128xf32>
    %24 = vector.shape_cast %23 : vector<1x1x128x128xf32> to vector<128x128xf32>
    %cst_21 = arith.constant dense<0.000000e+00> : vector<16x128xf32>
    %25 = tpu.matmul %22, %24, %cst_21 {dimension_numbers = #tpu.dot_dimension_numbers<[1], [0], [0], [1], [0, 0, 1, 1], [], []>} : vector<16x128xf32>, vector<128x128xf32>, vector<16x128xf32> -> vector<16x128xf32>
    %26 = arith.addf %10, %25 : vector<16x128xf32>
    %c0_22 = arith.constant 0 : index
    %c1_23 = arith.constant 1 : index
    %c0_24 = arith.constant 0 : index
    %c0_25 = arith.constant 0 : index
    %27 = vector.load %arg5[%c0_22, %c1_23, %c0_24, %c0_25] : memref<5x2x1x128xf32, #tpu.memory_space<vmem>>, vector<1x1x1x128xf32>
    %28 = vector.shape_cast %27 : vector<1x1x1x128xf32> to vector<1x128xf32>
    %29 = vector.broadcast %28 : vector<1x128xf32> to vector<16x128xf32>
    %30 = arith.addf %26, %29 : vector<16x128xf32>
    %cst_26 = arith.constant 0.000000e+00 : f32
    %31 = vector.broadcast %cst_26 : f32 to vector<16x128xf32>
    %32 = arith.cmpf oge, %30, %31 : vector<16x128xf32>
    %cst_27 = arith.constant 0.00999999977 : f32
    %33 = vector.broadcast %cst_27 : f32 to vector<16x128xf32>
    %34 = arith.mulf %33, %30 : vector<16x128xf32>
    %35 = arith.select %32, %30, %34 : vector<16x128xi1>, vector<16x128xf32>
    %c1_28 = arith.constant 1 : index
    %c0_29 = arith.constant 0 : index
    %c0_30 = arith.constant 0 : index
    %c0_31 = arith.constant 0 : index
    %36 = vector.load %arg4[%c1_28, %c0_29, %c0_30, %c0_31] : memref<5x2x128x128xf32, #tpu.memory_space<vmem>>, vector<1x1x128x128xf32>
    %37 = vector.shape_cast %36 : vector<1x1x128x128xf32> to vector<128x128xf32>
    %cst_32 = arith.constant dense<0.000000e+00> : vector<16x128xf32>
    %38 = tpu.matmul %35, %37, %cst_32 {dimension_numbers = #tpu.dot_dimension_numbers<[1], [0], [0], [1], [0, 0, 1, 1], [], []>} : vector<16x128xf32>, vector<128x128xf32>, vector<16x128xf32> -> vector<16x128xf32>
    %c1_33 = arith.constant 1 : index
    %c0_34 = arith.constant 0 : index
    %c0_35 = arith.constant 0 : index
    %c0_36 = arith.constant 0 : index
    %39 = vector.load %arg5[%c1_33, %c0_34, %c0_35, %c0_36] : memref<5x2x1x128xf32, #tpu.memory_space<vmem>>, vector<1x1x1x128xf32>
    %40 = vector.shape_cast %39 : vector<1x1x1x128xf32> to vector<1x128xf32>
    %41 = vector.broadcast %40 : vector<1x128xf32> to vector<16x128xf32>
    %42 = arith.addf %38, %41 : vector<16x128xf32>
    %cst_37 = arith.constant 0.000000e+00 : f32
    %43 = vector.broadcast %cst_37 : f32 to vector<16x128xf32>
    %44 = arith.cmpf oge, %42, %43 : vector<16x128xf32>
    %cst_38 = arith.constant 0.00999999977 : f32
    %45 = vector.broadcast %cst_38 : f32 to vector<16x128xf32>
    %46 = arith.mulf %45, %42 : vector<16x128xf32>
    %47 = arith.select %44, %42, %46 : vector<16x128xi1>, vector<16x128xf32>
    %c1_39 = arith.constant 1 : index
    %c1_40 = arith.constant 1 : index
    %c0_41 = arith.constant 0 : index
    %c0_42 = arith.constant 0 : index
    %48 = vector.load %arg4[%c1_39, %c1_40, %c0_41, %c0_42] : memref<5x2x128x128xf32, #tpu.memory_space<vmem>>, vector<1x1x128x128xf32>
    %49 = vector.shape_cast %48 : vector<1x1x128x128xf32> to vector<128x128xf32>
    %cst_43 = arith.constant dense<0.000000e+00> : vector<16x128xf32>
    %50 = tpu.matmul %47, %49, %cst_43 {dimension_numbers = #tpu.dot_dimension_numbers<[1], [0], [0], [1], [0, 0, 1, 1], [], []>} : vector<16x128xf32>, vector<128x128xf32>, vector<16x128xf32> -> vector<16x128xf32>
    %51 = arith.addf %35, %50 : vector<16x128xf32>
    %c1_44 = arith.constant 1 : index
    %c1_45 = arith.constant 1 : index
    %c0_46 = arith.constant 0 : index
    %c0_47 = arith.constant 0 : index
    %52 = vector.load %arg5[%c1_44, %c1_45, %c0_46, %c0_47] : memref<5x2x1x128xf32, #tpu.memory_space<vmem>>, vector<1x1x1x128xf32>
    %53 = vector.shape_cast %52 : vector<1x1x1x128xf32> to vector<1x128xf32>
    %54 = vector.broadcast %53 : vector<1x128xf32> to vector<16x128xf32>
    %55 = arith.addf %51, %54 : vector<16x128xf32>
    %cst_48 = arith.constant 0.000000e+00 : f32
    %56 = vector.broadcast %cst_48 : f32 to vector<16x128xf32>
    %57 = arith.cmpf oge, %55, %56 : vector<16x128xf32>
    %cst_49 = arith.constant 0.00999999977 : f32
    %58 = vector.broadcast %cst_49 : f32 to vector<16x128xf32>
    %59 = arith.mulf %58, %55 : vector<16x128xf32>
    %60 = arith.select %57, %55, %59 : vector<16x128xi1>, vector<16x128xf32>
    %c2 = arith.constant 2 : index
    %c0_50 = arith.constant 0 : index
    %c0_51 = arith.constant 0 : index
    %c0_52 = arith.constant 0 : index
    %61 = vector.load %arg4[%c2, %c0_50, %c0_51, %c0_52] : memref<5x2x128x128xf32, #tpu.memory_space<vmem>>, vector<1x1x128x128xf32>
    %62 = vector.shape_cast %61 : vector<1x1x128x128xf32> to vector<128x128xf32>
    %cst_53 = arith.constant dense<0.000000e+00> : vector<16x128xf32>
    %63 = tpu.matmul %60, %62, %cst_53 {dimension_numbers = #tpu.dot_dimension_numbers<[1], [0], [0], [1], [0, 0, 1, 1], [], []>} : vector<16x128xf32>, vector<128x128xf32>, vector<16x128xf32> -> vector<16x128xf32>
    %c2_54 = arith.constant 2 : index
    %c0_55 = arith.constant 0 : index
    %c0_56 = arith.constant 0 : index
    %c0_57 = arith.constant 0 : index
    %64 = vector.load %arg5[%c2_54, %c0_55, %c0_56, %c0_57] : memref<5x2x1x128xf32, #tpu.memory_space<vmem>>, vector<1x1x1x128xf32>
    %65 = vector.shape_cast %64 : vector<1x1x1x128xf32> to vector<1x128xf32>
    %66 = vector.broadcast %65 : vector<1x128xf32> to vector<16x128xf32>
    %67 = arith.addf %63, %66 : vector<16x128xf32>
    %cst_58 = arith.constant 0.000000e+00 : f32
    %68 = vector.broadcast %cst_58 : f32 to vector<16x128xf32>
    %69 = arith.cmpf oge, %67, %68 : vector<16x128xf32>
    %cst_59 = arith.constant 0.00999999977 : f32
    %70 = vector.broadcast %cst_59 : f32 to vector<16x128xf32>
    %71 = arith.mulf %70, %67 : vector<16x128xf32>
    %72 = arith.select %69, %67, %71 : vector<16x128xi1>, vector<16x128xf32>
    %c2_60 = arith.constant 2 : index
    %c1_61 = arith.constant 1 : index
    %c0_62 = arith.constant 0 : index
    %c0_63 = arith.constant 0 : index
    %73 = vector.load %arg4[%c2_60, %c1_61, %c0_62, %c0_63] : memref<5x2x128x128xf32, #tpu.memory_space<vmem>>, vector<1x1x128x128xf32>
    %74 = vector.shape_cast %73 : vector<1x1x128x128xf32> to vector<128x128xf32>
    %cst_64 = arith.constant dense<0.000000e+00> : vector<16x128xf32>
    %75 = tpu.matmul %72, %74, %cst_64 {dimension_numbers = #tpu.dot_dimension_numbers<[1], [0], [0], [1], [0, 0, 1, 1], [], []>} : vector<16x128xf32>, vector<128x128xf32>, vector<16x128xf32> -> vector<16x128xf32>
    %76 = arith.addf %60, %75 : vector<16x128xf32>
    %c2_65 = arith.constant 2 : index
    %c1_66 = arith.constant 1 : index
    %c0_67 = arith.constant 0 : index
    %c0_68 = arith.constant 0 : index
    %77 = vector.load %arg5[%c2_65, %c1_66, %c0_67, %c0_68] : memref<5x2x1x128xf32, #tpu.memory_space<vmem>>, vector<1x1x1x128xf32>
    %78 = vector.shape_cast %77 : vector<1x1x1x128xf32> to vector<1x128xf32>
    %79 = vector.broadcast %78 : vector<1x128xf32> to vector<16x128xf32>
    %80 = arith.addf %76, %79 : vector<16x128xf32>
    %cst_69 = arith.constant 0.000000e+00 : f32
    %81 = vector.broadcast %cst_69 : f32 to vector<16x128xf32>
    %82 = arith.cmpf oge, %80, %81 : vector<16x128xf32>
    %cst_70 = arith.constant 0.00999999977 : f32
    %83 = vector.broadcast %cst_70 : f32 to vector<16x128xf32>
    %84 = arith.mulf %83, %80 : vector<16x128xf32>
    %85 = arith.select %82, %80, %84 : vector<16x128xi1>, vector<16x128xf32>
    %c0_71 = arith.constant 0 : index
    %c0_72 = arith.constant 0 : index
    %86 = vector.load %arg6[%c0_71, %c0_72] : memref<128x128xf32, #tpu.memory_space<vmem>>, vector<128x128xf32>
    %cst_73 = arith.constant dense<0.000000e+00> : vector<16x128xf32>
    %87 = tpu.matmul %85, %86, %cst_73 {dimension_numbers = #tpu.dot_dimension_numbers<[1], [0], [0], [1], [0, 0, 1, 1], [], []>} : vector<16x128xf32>, vector<128x128xf32>, vector<16x128xf32> -> vector<16x128xf32>
    %c0_74 = arith.constant 0 : index
    %c0_75 = arith.constant 0 : index
    %88 = vector.load %arg7[%c0_74, %c0_75] : memref<1x128xf32, #tpu.memory_space<vmem>>, vector<1x128xf32>
    %89 = vector.broadcast %88 : vector<1x128xf32> to vector<16x128xf32>
    %90 = arith.addf %87, %89 : vector<16x128xf32>
    %cst_76 = arith.constant 0.000000e+00 : f32
    %91 = vector.broadcast %cst_76 : f32 to vector<16x128xf32>
    %92 = arith.cmpf oge, %90, %91 : vector<16x128xf32>
    %cst_77 = arith.constant 0.00999999977 : f32
    %93 = vector.broadcast %cst_77 : f32 to vector<16x128xf32>
    %94 = arith.mulf %93, %90 : vector<16x128xf32>
    %95 = arith.select %92, %90, %94 : vector<16x128xi1>, vector<16x128xf32>
    %c0_78 = arith.constant 0 : index
    %c0_79 = arith.constant 0 : index
    %c0_80 = arith.constant 0 : index
    %96 = vector.load %arg8[%c0_78, %c0_79, %c0_80] : memref<2x128x128xf32, #tpu.memory_space<vmem>>, vector<1x128x128xf32>
    %97 = vector.shape_cast %96 : vector<1x128x128xf32> to vector<128x128xf32>
    %cst_81 = arith.constant dense<0.000000e+00> : vector<16x128xf32>
    %98 = tpu.matmul %95, %97, %cst_81 {dimension_numbers = #tpu.dot_dimension_numbers<[1], [0], [0], [1], [0, 0, 1, 1], [], []>} : vector<16x128xf32>, vector<128x128xf32>, vector<16x128xf32> -> vector<16x128xf32>
    %c3 = arith.constant 3 : index
    %c0_82 = arith.constant 0 : index
    %c0_83 = arith.constant 0 : index
    %c0_84 = arith.constant 0 : index
    %99 = vector.load %arg4[%c3, %c0_82, %c0_83, %c0_84] : memref<5x2x128x128xf32, #tpu.memory_space<vmem>>, vector<1x1x128x128xf32>
    %100 = vector.shape_cast %99 : vector<1x1x128x128xf32> to vector<128x128xf32>
    %cst_85 = arith.constant dense<0.000000e+00> : vector<16x128xf32>
    %101 = tpu.matmul %35, %100, %cst_85 {dimension_numbers = #tpu.dot_dimension_numbers<[1], [0], [0], [1], [0, 0, 1, 1], [], []>} : vector<16x128xf32>, vector<128x128xf32>, vector<16x128xf32> -> vector<16x128xf32>
    %c3_86 = arith.constant 3 : index
    %c0_87 = arith.constant 0 : index
    %c0_88 = arith.constant 0 : index
    %c0_89 = arith.constant 0 : index
    %102 = vector.load %arg5[%c3_86, %c0_87, %c0_88, %c0_89] : memref<5x2x1x128xf32, #tpu.memory_space<vmem>>, vector<1x1x1x128xf32>
    %103 = vector.shape_cast %102 : vector<1x1x1x128xf32> to vector<1x128xf32>
    %104 = vector.broadcast %103 : vector<1x128xf32> to vector<16x128xf32>
    %105 = arith.addf %101, %104 : vector<16x128xf32>
    %cst_90 = arith.constant 0.000000e+00 : f32
    %106 = vector.broadcast %cst_90 : f32 to vector<16x128xf32>
    %107 = arith.cmpf oge, %105, %106 : vector<16x128xf32>
    %cst_91 = arith.constant 0.00999999977 : f32
    %108 = vector.broadcast %cst_91 : f32 to vector<16x128xf32>
    %109 = arith.mulf %108, %105 : vector<16x128xf32>
    %110 = arith.select %107, %105, %109 : vector<16x128xi1>, vector<16x128xf32>
    %c3_92 = arith.constant 3 : index
    %c1_93 = arith.constant 1 : index
    %c0_94 = arith.constant 0 : index
    %c0_95 = arith.constant 0 : index
    %111 = vector.load %arg4[%c3_92, %c1_93, %c0_94, %c0_95] : memref<5x2x128x128xf32, #tpu.memory_space<vmem>>, vector<1x1x128x128xf32>
    %112 = vector.shape_cast %111 : vector<1x1x128x128xf32> to vector<128x128xf32>
    %cst_96 = arith.constant dense<0.000000e+00> : vector<16x128xf32>
    %113 = tpu.matmul %110, %112, %cst_96 {dimension_numbers = #tpu.dot_dimension_numbers<[1], [0], [0], [1], [0, 0, 1, 1], [], []>} : vector<16x128xf32>, vector<128x128xf32>, vector<16x128xf32> -> vector<16x128xf32>
    %114 = arith.addf %35, %113 : vector<16x128xf32>
    %c3_97 = arith.constant 3 : index
    %c1_98 = arith.constant 1 : index
    %c0_99 = arith.constant 0 : index
    %c0_100 = arith.constant 0 : index
    %115 = vector.load %arg5[%c3_97, %c1_98, %c0_99, %c0_100] : memref<5x2x1x128xf32, #tpu.memory_space<vmem>>, vector<1x1x1x128xf32>
    %116 = vector.shape_cast %115 : vector<1x1x1x128xf32> to vector<1x128xf32>
    %117 = vector.broadcast %116 : vector<1x128xf32> to vector<16x128xf32>
    %118 = arith.addf %114, %117 : vector<16x128xf32>
    %cst_101 = arith.constant 0.000000e+00 : f32
    %119 = vector.broadcast %cst_101 : f32 to vector<16x128xf32>
    %120 = arith.cmpf oge, %118, %119 : vector<16x128xf32>
    %cst_102 = arith.constant 0.00999999977 : f32
    %121 = vector.broadcast %cst_102 : f32 to vector<16x128xf32>
    %122 = arith.mulf %121, %118 : vector<16x128xf32>
    %123 = arith.select %120, %118, %122 : vector<16x128xi1>, vector<16x128xf32>
    %c4 = arith.constant 4 : index
    %c0_103 = arith.constant 0 : index
    %c0_104 = arith.constant 0 : index
    %c0_105 = arith.constant 0 : index
    %124 = vector.load %arg4[%c4, %c0_103, %c0_104, %c0_105] : memref<5x2x128x128xf32, #tpu.memory_space<vmem>>, vector<1x1x128x128xf32>
    %125 = vector.shape_cast %124 : vector<1x1x128x128xf32> to vector<128x128xf32>
    %cst_106 = arith.constant dense<0.000000e+00> : vector<16x128xf32>
    %126 = tpu.matmul %123, %125, %cst_106 {dimension_numbers = #tpu.dot_dimension_numbers<[1], [0], [0], [1], [0, 0, 1, 1], [], []>} : vector<16x128xf32>, vector<128x128xf32>, vector<16x128xf32> -> vector<16x128xf32>
    %c4_107 = arith.constant 4 : index
    %c0_108 = arith.constant 0 : index
    %c0_109 = arith.constant 0 : index
    %c0_110 = arith.constant 0 : index
    %127 = vector.load %arg5[%c4_107, %c0_108, %c0_109, %c0_110] : memref<5x2x1x128xf32, #tpu.memory_space<vmem>>, vector<1x1x1x128xf32>
    %128 = vector.shape_cast %127 : vector<1x1x1x128xf32> to vector<1x128xf32>
    %129 = vector.broadcast %128 : vector<1x128xf32> to vector<16x128xf32>
    %130 = arith.addf %126, %129 : vector<16x128xf32>
    %cst_111 = arith.constant 0.000000e+00 : f32
    %131 = vector.broadcast %cst_111 : f32 to vector<16x128xf32>
    %132 = arith.cmpf oge, %130, %131 : vector<16x128xf32>
    %cst_112 = arith.constant 0.00999999977 : f32
    %133 = vector.broadcast %cst_112 : f32 to vector<16x128xf32>
    %134 = arith.mulf %133, %130 : vector<16x128xf32>
    %135 = arith.select %132, %130, %134 : vector<16x128xi1>, vector<16x128xf32>
    %c4_113 = arith.constant 4 : index
    %c1_114 = arith.constant 1 : index
    %c0_115 = arith.constant 0 : index
    %c0_116 = arith.constant 0 : index
    %136 = vector.load %arg4[%c4_113, %c1_114, %c0_115, %c0_116] : memref<5x2x128x128xf32, #tpu.memory_space<vmem>>, vector<1x1x128x128xf32>
    %137 = vector.shape_cast %136 : vector<1x1x128x128xf32> to vector<128x128xf32>
    %cst_117 = arith.constant dense<0.000000e+00> : vector<16x128xf32>
    %138 = tpu.matmul %135, %137, %cst_117 {dimension_numbers = #tpu.dot_dimension_numbers<[1], [0], [0], [1], [0, 0, 1, 1], [], []>} : vector<16x128xf32>, vector<128x128xf32>, vector<16x128xf32> -> vector<16x128xf32>
    %139 = arith.addf %123, %138 : vector<16x128xf32>
    %c4_118 = arith.constant 4 : index
    %c1_119 = arith.constant 1 : index
    %c0_120 = arith.constant 0 : index
    %c0_121 = arith.constant 0 : index
    %140 = vector.load %arg5[%c4_118, %c1_119, %c0_120, %c0_121] : memref<5x2x1x128xf32, #tpu.memory_space<vmem>>, vector<1x1x1x128xf32>
    %141 = vector.shape_cast %140 : vector<1x1x1x128xf32> to vector<1x128xf32>
    %142 = vector.broadcast %141 : vector<1x128xf32> to vector<16x128xf32>
    %143 = arith.addf %139, %142 : vector<16x128xf32>
    %cst_122 = arith.constant 0.000000e+00 : f32
    %144 = vector.broadcast %cst_122 : f32 to vector<16x128xf32>
    %145 = arith.cmpf oge, %143, %144 : vector<16x128xf32>
    %cst_123 = arith.constant 0.00999999977 : f32
    %146 = vector.broadcast %cst_123 : f32 to vector<16x128xf32>
    %147 = arith.mulf %146, %143 : vector<16x128xf32>
    %148 = arith.select %145, %143, %147 : vector<16x128xi1>, vector<16x128xf32>
    %c1_124 = arith.constant 1 : index
    %c0_125 = arith.constant 0 : index
    %c0_126 = arith.constant 0 : index
    %149 = vector.load %arg8[%c1_124, %c0_125, %c0_126] : memref<2x128x128xf32, #tpu.memory_space<vmem>>, vector<1x128x128xf32>
    %150 = vector.shape_cast %149 : vector<1x128x128xf32> to vector<128x128xf32>
    %cst_127 = arith.constant dense<0.000000e+00> : vector<16x128xf32>
    %151 = tpu.matmul %148, %150, %cst_127 {dimension_numbers = #tpu.dot_dimension_numbers<[1], [0], [0], [1], [0, 0, 1, 1], [], []>} : vector<16x128xf32>, vector<128x128xf32>, vector<16x128xf32> -> vector<16x128xf32>
    %152 = arith.addf %98, %151 : vector<16x128xf32>
    %c0_128 = arith.constant 0 : index
    %c0_129 = arith.constant 0 : index
    %153 = vector.load %arg9[%c0_128, %c0_129] : memref<1x128xf32, #tpu.memory_space<vmem>>, vector<1x128xf32>
    %154 = vector.broadcast %153 : vector<1x128xf32> to vector<16x128xf32>
    %155 = arith.addf %152, %154 : vector<16x128xf32>
    %c0_130 = arith.constant 0 : index
    %c0_131 = arith.constant 0 : index
    %156 = vector.load %arg10[%c0_130, %c0_131] : memref<16x128xf32, #tpu.memory_space<vmem>>, vector<16x128xf32>
    tpu.vector_store %arg10[%c0_130, %c0_131], %155 {strides = array<i32>} : memref<16x128xf32, #tpu.memory_space<vmem>>, vector<16x128xf32>,
    return
  }
  func.func @transform_0(%arg0: i32) -> (i32, i32) {
    %c0_i32 = arith.constant 0 : i32
    %c0_i32_0 = arith.constant 0 : i32
    return %arg0, %c0_i32 : i32, i32
  }
  func.func @transform_1(%arg0: i32) -> (i32, i32) {
    %c0_i32 = arith.constant 0 : i32
    %c0_i32_0 = arith.constant 0 : i32
    %c0_i32_1 = arith.constant 0 : i32
    return %c0_i32, %c0_i32_0 : i32, i32
  }
  func.func @transform_2(%arg0: i32) -> (i32, i32) {
    %c0_i32 = arith.constant 0 : i32
    %c0_i32_0 = arith.constant 0 : i32
    %c0_i32_1 = arith.constant 0 : i32
    return %c0_i32, %c0_i32_0 : i32, i32
  }
  func.func @transform_3(%arg0: i32) -> (i32, i32, i32, i32) {
    %c0_i32 = arith.constant 0 : i32
    %c0_i32_0 = arith.constant 0 : i32
    %c0_i32_1 = arith.constant 0 : i32
    %c0_i32_2 = arith.constant 0 : i32
    %c0_i32_3 = arith.constant 0 : i32
    return %c0_i32, %c0_i32_0, %c0_i32_1, %c0_i32_2 : i32, i32, i32, i32
  }
  func.func @transform_4(%arg0: i32) -> (i32, i32, i32, i32) {
    %c0_i32 = arith.constant 0 : i32
    %c0_i32_0 = arith.constant 0 : i32
    %c0_i32_1 = arith.constant 0 : i32
    %c0_i32_2 = arith.constant 0 : i32
    %c0_i32_3 = arith.constant 0 : i32
    return %c0_i32, %c0_i32_0, %c0_i32_1, %c0_i32_2 : i32, i32, i32, i32
  }
  func.func @transform_5(%arg0: i32) -> (i32, i32) {
    %c0_i32 = arith.constant 0 : i32
    %c0_i32_0 = arith.constant 0 : i32
    %c0_i32_1 = arith.constant 0 : i32
    return %c0_i32, %c0_i32_0 : i32, i32
  }
  func.func @transform_6(%arg0: i32) -> (i32, i32) {
    %c0_i32 = arith.constant 0 : i32
    %c0_i32_0 = arith.constant 0 : i32
    %c0_i32_1 = arith.constant 0 : i32
    return %c0_i32, %c0_i32_0 : i32, i32
  }
  func.func @transform_7(%arg0: i32) -> (i32, i32, i32) {
    %c0_i32 = arith.constant 0 : i32
    %c0_i32_0 = arith.constant 0 : i32
    %c0_i32_1 = arith.constant 0 : i32
    %c0_i32_2 = arith.constant 0 : i32
    return %c0_i32, %c0_i32_0, %c0_i32_1 : i32, i32, i32
  }
  func.func @transform_8(%arg0: i32) -> (i32, i32) {
    %c0_i32 = arith.constant 0 : i32
    %c0_i32_0 = arith.constant 0 : i32
    %c0_i32_1 = arith.constant 0 : i32
    return %c0_i32, %c0_i32_0 : i32, i32
  }
  func.func @transform_9(%arg0: i32) -> (i32, i32) {
    %c0_i32 = arith.constant 0 : i32
    %c0_i32_0 = arith.constant 0 : i32
    return %arg0, %c0_i32 : i32, i32
  }
}

module attributes {stable_mosaic.version = 11 : i64} {
  func.func @_regression_kernel(%arg0: i32, %arg1: memref<16x32xf32, #tpu.memory_space<vmem>>, %arg2: memref<32x128xf32, #tpu.memory_space<vmem>>, %arg3: memref<1x128xf32, #tpu.memory_space<vmem>>, %arg4: memref<5x2x128x128xf32, #tpu.memory_space<vmem>>, %arg5: memref<5x2x1x128xf32, #tpu.memory_space<vmem>>, %arg6: memref<128x128xf32, #tpu.memory_space<vmem>>, %arg7: memref<1x128xf32, #tpu.memory_space<vmem>>, %arg8: memref<2x128x128xf32, #tpu.memory_space<vmem>>, %arg9: memref<1x128xf32, #tpu.memory_space<vmem>>, %arg10: memref<16x128xf32, #tpu.memory_space<vmem>>) attributes {dimension_semantics = [#tpu.dimension_semantics<parallel>], iteration_bounds = array<i64: 1>, scalar_prefetch = 0 : i64, scratch_operands = 0 : i64, tpu.core_type = #tpu.core_type<tc>, window_params = [{transform_indices = @transform_0, window_bounds = array<i64: 16, 32>}, {pipeline_mode = #tpu.pipeline_mode<synchronous>, transform_indices = @transform_1, window_bounds = array<i64: 32, 128>}, {pipeline_mode = #tpu.pipeline_mode<synchronous>, transform_indices = @transform_2, window_bounds = array<i64: 1, 128>}, {pipeline_mode = #tpu.pipeline_mode<synchronous>, transform_indices = @transform_3, window_bounds = array<i64: 5, 2, 128, 128>}, {pipeline_mode = #tpu.pipeline_mode<synchronous>, transform_indices = @transform_4, window_bounds = array<i64: 5, 2, 1, 128>}, {pipeline_mode = #tpu.pipeline_mode<synchronous>, transform_indices = @transform_5, window_bounds = array<i64: 128, 128>}, {pipeline_mode = #tpu.pipeline_mode<synchronous>, transform_indices = @transform_6, window_bounds = array<i64: 1, 128>}, {pipeline_mode = #tpu.pipeline_mode<synchronous>, transform_indices = @transform_7, window_bounds = array<i64: 2, 128, 128>}, {pipeline_mode = #tpu.pipeline_mode<synchronous>, transform_indices = @transform_8, window_bounds = array<i64: 1, 128>}, {transform_indices = @transform_9, window_bounds = array<i64: 16, 128>}]} {
    %c0 = arith.constant 0 : index
    %c0_0 = arith.constant 0 : index
    %0 = vector.load %arg1[%c0, %c0_0] : memref<16x32xf32, #tpu.memory_space<vmem>>, vector<16x32xf32>
    %c0_1 = arith.constant 0 : index
    %c0_2 = arith.constant 0 : index
    %1 = vector.load %arg2[%c0_1, %c0_2] : memref<32x128xf32, #tpu.memory_space<vmem>>, vector<32x128xf32>
    %cst = arith.constant dense<0.000000e+00> : vector<16x128xf32>
    %2 = tpu.matmul %0, %1, %cst {dimension_numbers = #tpu.dot_dimension_numbers<[1], [0], [0], [1], [0, 0, 1, 1], [], []>} : vector<16x32xf32>, vector<32x128xf32>, vector<16x128xf32> -> vector<16x128xf32>
    %c0_3 = arith.constant 0 : index
    %c0_4 = arith.constant 0 : index
    %3 = vector.load %arg3[%c0_3, %c0_4] : memref<1x128xf32, #tpu.memory_space<vmem>>, vector<1x128xf32>
    %4 = vector.broadcast %3 : vector<1x128xf32> to vector<16x128xf32>
    %5 = arith.addf %2, %4 : vector<16x128xf32>
    %cst_5 = arith.constant 0.000000e+00 : f32
    %6 = vector.broadcast %cst_5 : f32 to vector<16x128xf32>
    %7 = arith.cmpf oge, %5, %6 : vector<16x128xf32>
    %cst_6 = arith.constant 0.00999999977 : f32
    %8 = vector.broadcast %cst_6 : f32 to vector<16x128xf32>
    %9 = arith.mulf %8, %5 : vector<16x128xf32>
    %10 = arith.select %7, %5, %9 : vector<16x128xi1>, vector<16x128xf32>
    %c0_7 = arith.constant 0 : index
    %c0_8 = arith.constant 0 : index
    %c0_9 = arith.constant 0 : index
    %c0_10 = arith.constant 0 : index
    %11 = vector.load %arg4[%c0_7, %c0_8, %c0_9, %c0_10] : memref<5x2x128x128xf32, #tpu.memory_space<vmem>>, vector<1x1x128x128xf32>
    %12 = vector.shape_cast %11 : vector<1x1x128x128xf32> to vector<128x128xf32>
    %cst_11 = arith.constant dense<0.000000e+00> : vector<16x128xf32>
    %13 = tpu.matmul %10, %12, %cst_11 {dimension_numbers = #tpu.dot_dimension_numbers<[1], [0], [0], [1], [0, 0, 1, 1], [], []>} : vector<16x128xf32>, vector<128x128xf32>, vector<16x128xf32> -> vector<16x128xf32>
    %c0_12 = arith.constant 0 : index
    %c0_13 = arith.constant 0 : index
    %c0_14 = arith.constant 0 : index
    %c0_15 = arith.constant 0 : index
    %14 = vector.load %arg5[%c0_12, %c0_13, %c0_14, %c0_15] : memref<5x2x1x128xf32, #tpu.memory_space<vmem>>, vector<1x1x1x128xf32>
    %15 = vector.shape_cast %14 : vector<1x1x1x128xf32> to vector<1x128xf32>
    %16 = vector.broadcast %15 : vector<1x128xf32> to vector<16x128xf32>
    %17 = arith.addf %13, %16 : vector<16x128xf32>
    %cst_16 = arith.constant 0.000000e+00 : f32
    %18 = vector.broadcast %cst_16 : f32 to vector<16x128xf32>
    %19 = arith.cmpf oge, %17, %18 : vector<16x128xf32>
    %cst_17 = arith.constant 0.00999999977 : f32
    %20 = vector.broadcast %cst_17 : f32 to vector<16x128xf32>
    %21 = arith.mulf %20, %17 : vector<16x128xf32>
    %22 = arith.select %19, %17, %21 : vector<16x128xi1>, vector<16x128xf32>
    %c0_18 = arith.constant 0 : index
    %c1 = arith.constant 1 : index
    %c0_19 = arith.constant 0 : index
    %c0_20 = arith.constant 0 : index
    %23 = vector.load %arg4[%c0_18, %c1, %c0_19, %c0_20] : memref<5x2x128x128xf32, #tpu.memory_space<vmem>>, vector<1x1x128x128xf32>
    %24 = vector.shape_cast %23 : vector<1x1x128x128xf32> to vector<128x128xf32>
    %cst_21 = arith.constant dense<0.000000e+00> : vector<16x128xf32>
    %25 = tpu.matmul %22, %24, %cst_21 {dimension_numbers = #tpu.dot_dimension_numbers<[1], [0], [0], [1], [0, 0, 1, 1], [], []>} : vector<16x128xf32>, vector<128x128xf32>, vector<16x128xf32> -> vector<16x128xf32>
    %26 = arith.addf %10, %25 : vector<16x128xf32>
    %c0_22 = arith.constant 0 : index
    %c1_23 = arith.constant 1 : index
    %c0_24 = arith.constant 0 : index
    %c0_25 = arith.constant 0 : index
    %27 = vector.load %arg5[%c0_22, %c1_23, %c0_24, %c0_25] : memref<5x2x1x128xf32, #tpu.memory_space<vmem>>, vector<1x1x1x128xf32>
    %28 = vector.shape_cast %27 : vector<1x1x1x128xf32> to vector<1x128xf32>
    %29 = vector.broadcast %28 : vector<1x128xf32> to vector<16x128xf32>
    %30 = arith.addf %26, %29 : vector<16x128xf32>
    %cst_26 = arith.constant 0.000000e+00 : f32
    %31 = vector.broadcast %cst_26 : f32 to vector<16x128xf32>
    %32 = arith.cmpf oge, %30, %31 : vector<16x128xf32>
    %cst_27 = arith.constant 0.00999999977 : f32
    %33 = vector.broadcast %cst_27 : f32 to vector<16x128xf32>
    %34 = arith.mulf %33, %30 : vector<16x128xf32>
    %35 = arith.select %32, %30, %34 : vector<16x128xi1>, vector<16x128xf32>
    %c1_28 = arith.constant 1 : index
    %c0_29 = arith.constant 0 : index
    %c0_30 = arith.constant 0 : index
    %c0_31 = arith.constant 0 : index
    %36 = vector.load %arg4[%c1_28, %c0_29, %c0_30, %c0_31] : memref<5x2x128x128xf32, #tpu.memory_space<vmem>>, vector<1x1x128x128xf32>
    %37 = vector.shape_cast %36 : vector<1x1x128x128xf32> to vector<128x128xf32>
    %cst_32 = arith.constant dense<0.000000e+00> : vector<16x128xf32>
    %38 = tpu.matmul %35, %37, %cst_32 {dimension_numbers = #tpu.dot_dimension_numbers<[1], [0], [0], [1], [0, 0, 1, 1], [], []>} : vector<16x128xf32>, vector<128x128xf32>, vector<16x128xf32> -> vector<16x128xf32>
    %c1_33 = arith.constant 1 : index
    %c0_34 = arith.constant 0 : index
    %c0_35 = arith.constant 0 : index
    %c0_36 = arith.constant 0 : index
    %39 = vector.load %arg5[%c1_33, %c0_34, %c0_35, %c0_36] : memref<5x2x1x128xf32, #tpu.memory_space<vmem>>, vector<1x1x1x128xf32>
    %40 = vector.shape_cast %39 : vector<1x1x1x128xf32> to vector<1x128xf32>
    %41 = vector.broadcast %40 : vector<1x128xf32> to vector<16x128xf32>
    %42 = arith.addf %38, %41 : vector<16x128xf32>
    %cst_37 = arith.constant 0.000000e+00 : f32
    %43 = vector.broadcast %cst_37 : f32 to vector<16x128xf32>
    %44 = arith.cmpf oge, %42, %43 : vector<16x128xf32>
    %cst_38 = arith.constant 0.00999999977 : f32
    %45 = vector.broadcast %cst_38 : f32 to vector<16x128xf32>
    %46 = arith.mulf %45, %42 : vector<16x128xf32>
    %47 = arith.select %44, %42, %46 : vector<16x128xi1>, vector<16x128xf32>
    %c1_39 = arith.constant 1 : index
    %c1_40 = arith.constant 1 : index
    %c0_41 = arith.constant 0 : index
    %c0_42 = arith.constant 0 : index
    %48 = vector.load %arg4[%c1_39, %c1_40, %c0_41, %c0_42] : memref<5x2x128x128xf32, #tpu.memory_space<vmem>>, vector<1x1x128x128xf32>
    %49 = vector.shape_cast %48 : vector<1x1x128x128xf32> to vector<128x128xf32>
    %cst_43 = arith.constant dense<0.000000e+00> : vector<16x128xf32>
    %50 = tpu.matmul %47, %49, %cst_43 {dimension_numbers = #tpu.dot_dimension_numbers<[1], [0], [0], [1], [0, 0, 1, 1], [], []>} : vector<16x128xf32>, vector<128x128xf32>, vector<16x128xf32> -> vector<16x128xf32>
    %51 = arith.addf %35, %50 : vector<16x128xf32>
    %c1_44 = arith.constant 1 : index
    %c1_45 = arith.constant 1 : index
    %c0_46 = arith.constant 0 : index
    %c0_47 = arith.constant 0 : index
    %52 = vector.load %arg5[%c1_44, %c1_45, %c0_46, %c0_47] : memref<5x2x1x128xf32, #tpu.memory_space<vmem>>, vector<1x1x1x128xf32>
    %53 = vector.shape_cast %52 : vector<1x1x1x128xf32> to vector<1x128xf32>
    %54 = vector.broadcast %53 : vector<1x128xf32> to vector<16x128xf32>
    %55 = arith.addf %51, %54 : vector<16x128xf32>
    %cst_48 = arith.constant 0.000000e+00 : f32
    %56 = vector.broadcast %cst_48 : f32 to vector<16x128xf32>
    %57 = arith.cmpf oge, %55, %56 : vector<16x128xf32>
    %cst_49 = arith.constant 0.00999999977 : f32
    %58 = vector.broadcast %cst_49 : f32 to vector<16x128xf32>
    %59 = arith.mulf %58, %55 : vector<16x128xf32>
    %60 = arith.select %57, %55, %59 : vector<16x128xi1>, vector<16x128xf32>
    %c2 = arith.constant 2 : index
    %c0_50 = arith.constant 0 : index
    %c0_51 = arith.constant 0 : index
    %c0_52 = arith.constant 0 : index
    %61 = vector.load %arg4[%c2, %c0_50, %c0_51, %c0_52] : memref<5x2x128x128xf32, #tpu.memory_space<vmem>>, vector<1x1x128x128xf32>
    %62 = vector.shape_cast %61 : vector<1x1x128x128xf32> to vector<128x128xf32>
    %cst_53 = arith.constant dense<0.000000e+00> : vector<16x128xf32>
    %63 = tpu.matmul %60, %62, %cst_53 {dimension_numbers = #tpu.dot_dimension_numbers<[1], [0], [0], [1], [0, 0, 1, 1], [], []>} : vector<16x128xf32>, vector<128x128xf32>, vector<16x128xf32> -> vector<16x128xf32>
    %c2_54 = arith.constant 2 : index
    %c0_55 = arith.constant 0 : index
    %c0_56 = arith.constant 0 : index
    %c0_57 = arith.constant 0 : index
    %64 = vector.load %arg5[%c2_54, %c0_55, %c0_56, %c0_57] : memref<5x2x1x128xf32, #tpu.memory_space<vmem>>, vector<1x1x1x128xf32>
    %65 = vector.shape_cast %64 : vector<1x1x1x128xf32> to vector<1x128xf32>
    %66 = vector.broadcast %65 : vector<1x128xf32> to vector<16x128xf32>
    %67 = arith.addf %63, %66 : vector<16x128xf32>
    %cst_58 = arith.constant 0.000000e+00 : f32
    %68 = vector.broadcast %cst_58 : f32 to vector<16x128xf32>
    %69 = arith.cmpf oge, %67, %68 : vector<16x128xf32>
    %cst_59 = arith.constant 0.00999999977 : f32
    %70 = vector.broadcast %cst_59 : f32 to vector<16x128xf32>
    %71 = arith.mulf %70, %67 : vector<16x128xf32>
    %72 = arith.select %69, %67, %71 : vector<16x128xi1>, vector<16x128xf32>
    %c2_60 = arith.constant 2 : index
    %c1_61 = arith.constant 1 : index
    %c0_62 = arith.constant 0 : index
    %c0_63 = arith.constant 0 : index
    %73 = vector.load %arg4[%c2_60, %c1_61, %c0_62, %c0_63] : memref<5x2x128x128xf32, #tpu.memory_space<vmem>>, vector<1x1x128x128xf32>
    %74 = vector.shape_cast %73 : vector<1x1x128x128xf32> to vector<128x128xf32>
    %cst_64 = arith.constant dense<0.000000e+00> : vector<16x128xf32>
    %75 = tpu.matmul %72, %74, %cst_64 {dimension_numbers = #tpu.dot_dimension_numbers<[1], [0], [0], [1], [0, 0, 1, 1], [], []>} : vector<16x128xf32>, vector<128x128xf32>, vector<16x128xf32> -> vector<16x128xf32>
    %76 = arith.addf %60, %75 : vector<16x128xf32>
    %c2_65 = arith.constant 2 : index
    %c1_66 = arith.constant 1 : index
    %c0_67 = arith.constant 0 : index
    %c0_68 = arith.constant 0 : index
    %77 = vector.load %arg5[%c2_65, %c1_66, %c0_67, %c0_68] : memref<5x2x1x128xf32, #tpu.memory_space<vmem>>, vector<1x1x1x128xf32>
    %78 = vector.shape_cast %77 : vector<1x1x1x128xf32> to vector<1x128xf32>
    %79 = vector.broadcast %78 : vector<1x128xf32> to vector<16x128xf32>
    %80 = arith.addf %76, %79 : vector<16x128xf32>
    %cst_69 = arith.constant 0.000000e+00 : f32
    %81 = vector.broadcast %cst_69 : f32 to vector<16x128xf32>
    %82 = arith.cmpf oge, %80, %81 : vector<16x128xf32>
    %cst_70 = arith.constant 0.00999999977 : f32
    %83 = vector.broadcast %cst_70 : f32 to vector<16x128xf32>
    %84 = arith.mulf %83, %80 : vector<16x128xf32>
    %85 = arith.select %82, %80, %84 : vector<16x128xi1>, vector<16x128xf32>
    %c0_71 = arith.constant 0 : index
    %c0_72 = arith.constant 0 : index
    %86 = vector.load %arg6[%c0_71, %c0_72] : memref<128x128xf32, #tpu.memory_space<vmem>>, vector<128x128xf32>
    %cst_73 = arith.constant dense<0.000000e+00> : vector<16x128xf32>
    %87 = tpu.matmul %85, %86, %cst_73 {dimension_numbers = #tpu.dot_dimension_numbers<[1], [0], [0], [1], [0, 0, 1, 1], [], []>} : vector<16x128xf32>, vector<128x128xf32>, vector<16x128xf32> -> vector<16x128xf32>
    %c0_74 = arith.constant 0 : index
    %c0_75 = arith.constant 0 : index
    %88 = vector.load %arg7[%c0_74, %c0_75] : memref<1x128xf32, #tpu.memory_space<vmem>>, vector<1x128xf32>
    %89 = vector.broadcast %88 : vector<1x128xf32> to vector<16x128xf32>
    %90 = arith.addf %87, %89 : vector<16x128xf32>
    %cst_76 = arith.constant 0.000000e+00 : f32
    %91 = vector.broadcast %cst_76 : f32 to vector<16x128xf32>
    %92 = arith.cmpf oge, %90, %91 : vector<16x128xf32>
    %cst_77 = arith.constant 0.00999999977 : f32
    %93 = vector.broadcast %cst_77 : f32 to vector<16x128xf32>
    %94 = arith.mulf %93, %90 : vector<16x128xf32>
    %95 = arith.select %92, %90, %94 : vector<16x128xi1>, vector<16x128xf32>
    %c0_78 = arith.constant 0 : index
    %c0_79 = arith.constant 0 : index
    %c0_80 = arith.constant 0 : index
    %96 = vector.load %arg8[%c0_78, %c0_79, %c0_80] : memref<2x128x128xf32, #tpu.memory_space<vmem>>, vector<1x128x128xf32>
    %97 = vector.shape_cast %96 : vector<1x128x128xf32> to vector<128x128xf32>
    %cst_81 = arith.constant dense<0.000000e+00> : vector<16x128xf32>
    %98 = tpu.matmul %95, %97, %cst_81 {dimension_numbers = #tpu.dot_dimension_numbers<[1], [0], [0], [1], [0, 0, 1, 1], [], []>} : vector<16x128xf32>, vector<128x128xf32>, vector<16x128xf32> -> vector<16x128xf32>
    %c3 = arith.constant 3 : index
    %c0_82 = arith.constant 0 : index
    %c0_83 = arith.constant 0 : index
    %c0_84 = arith.constant 0 : index
    %99 = vector.load %arg4[%c3, %c0_82, %c0_83, %c0_84] : memref<5x2x128x128xf32, #tpu.memory_space<vmem>>, vector<1x1x128x128xf32>
    %100 = vector.shape_cast %99 : vector<1x1x128x128xf32> to vector<128x128xf32>
    %cst_85 = arith.constant dense<0.000000e+00> : vector<16x128xf32>
    %101 = tpu.matmul %35, %100, %cst_85 {dimension_numbers = #tpu.dot_dimension_numbers<[1], [0], [0], [1], [0, 0, 1, 1], [], []>} : vector<16x128xf32>, vector<128x128xf32>, vector<16x128xf32> -> vector<16x128xf32>
    %c3_86 = arith.constant 3 : index
    %c0_87 = arith.constant 0 : index
    %c0_88 = arith.constant 0 : index
    %c0_89 = arith.constant 0 : index
    %102 = vector.load %arg5[%c3_86, %c0_87, %c0_88, %c0_89] : memref<5x2x1x128xf32, #tpu.memory_space<vmem>>, vector<1x1x1x128xf32>
    %103 = vector.shape_cast %102 : vector<1x1x1x128xf32> to vector<1x128xf32>
    %104 = vector.broadcast %103 : vector<1x128xf32> to vector<16x128xf32>
    %105 = arith.addf %101, %104 : vector<16x128xf32>
    %cst_90 = arith.constant 0.000000e+00 : f32
    %106 = vector.broadcast %cst_90 : f32 to vector<16x128xf32>
    %107 = arith.cmpf oge, %105, %106 : vector<16x128xf32>
    %cst_91 = arith.constant 0.00999999977 : f32
    %108 = vector.broadcast %cst_91 : f32 to vector<16x128xf32>
    %109 = arith.mulf %108, %105 : vector<16x128xf32>
    %110 = arith.select %107, %105, %109 : vector<16x128xi1>, vector<16x128xf32>
    %c3_92 = arith.constant 3 : index
    %c1_93 = arith.constant 1 : index
    %c0_94 = arith.constant 0 : index
    %c0_95 = arith.constant 0 : index
    %111 = vector.load %arg4[%c3_92, %c1_93, %c0_94, %c0_95] : memref<5x2x128x128xf32, #tpu.memory_space<vmem>>, vector<1x1x128x128xf32>
    %112 = vector.shape_cast %111 : vector<1x1x128x128xf32> to vector<128x128xf32>
    %cst_96 = arith.constant dense<0.000000e+00> : vector<16x128xf32>
    %113 = tpu.matmul %110, %112, %cst_96 {dimension_numbers = #tpu.dot_dimension_numbers<[1], [0], [0], [1], [0, 0, 1, 1], [], []>} : vector<16x128xf32>, vector<128x128xf32>, vector<16x128xf32> -> vector<16x128xf32>
    %114 = arith.addf %35, %113 : vector<16x128xf32>
    %c3_97 = arith.constant 3 : index
    %c1_98 = arith.constant 1 : index
    %c0_99 = arith.constant 0 : index
    %c0_100 = arith.constant 0 : index
    %115 = vector.load %arg5[%c3_97, %c1_98, %c0_99, %c0_100] : memref<5x2x1x128xf32, #tpu.memory_space<vmem>>, vector<1x1x1x128xf32>
    %116 = vector.shape_cast %115 : vector<1x1x1x128xf32> to vector<1x128xf32>
    %117 = vector.broadcast %116 : vector<1x128xf32> to vector<16x128xf32>
    %118 = arith.addf %114, %117 : vector<16x128xf32>
    %cst_101 = arith.constant 0.000000e+00 : f32
    %119 = vector.broadcast %cst_101 : f32 to vector<16x128xf32>
    %120 = arith.cmpf oge, %118, %119 : vector<16x128xf32>
    %cst_102 = arith.constant 0.00999999977 : f32
    %121 = vector.broadcast %cst_102 : f32 to vector<16x128xf32>
    %122 = arith.mulf %121, %118 : vector<16x128xf32>
    %123 = arith.select %120, %118, %122 : vector<16x128xi1>, vector<16x128xf32>
    %c4 = arith.constant 4 : index
    %c0_103 = arith.constant 0 : index
    %c0_104 = arith.constant 0 : index
    %c0_105 = arith.constant 0 : index
    %124 = vector.load %arg4[%c4, %c0_103, %c0_104, %c0_105] : memref<5x2x128x128xf32, #tpu.memory_space<vmem>>, vector<1x1x128x128xf32>
    %125 = vector.shape_cast %124 : vector<1x1x128x128xf32> to vector<128x128xf32>
    %cst_106 = arith.constant dense<0.000000e+00> : vector<16x128xf32>
    %126 = tpu.matmul %123, %125, %cst_106 {dimension_numbers = #tpu.dot_dimension_numbers<[1], [0], [0], [1], [0, 0, 1, 1], [], []>} : vector<16x128xf32>, vector<128x128xf32>, vector<16x128xf32> -> vector<16x128xf32>
    %c4_107 = arith.constant 4 : index
    %c0_108 = arith.constant 0 : index
    %c0_109 = arith.constant 0 : index
    %c0_110 = arith.constant 0 : index
    %127 = vector.load %arg5[%c4_107, %c0_108, %c0_109, %c0_110] : memref<5x2x1x128xf32, #tpu.memory_space<vmem>>, vector<1x1x1x128xf32>
    %128 = vector.shape_cast %127 : vector<1x1x1x128xf32> to vector<1x128xf32>
    %129 = vector.broadcast %128 : vector<1x128xf32> to vector<16x128xf32>
    %130 = arith.addf %126, %129 : vector<16x128xf32>
    %cst_111 = arith.constant 0.000000e+00 : f32
    %131 = vector.broadcast %cst_111 : f32 to vector<16x128xf32>
    %132 = arith.cmpf oge, %130, %131 : vector<16x128xf32>
    %cst_112 = arith.constant 0.00999999977 : f32
    %133 = vector.broadcast %cst_112 : f32 to vector<16x128xf32>
    %134 = arith.mulf %133, %130 : vector<16x128xf32>
    %135 = arith.select %132, %130, %134 : vector<16x128xi1>, vector<16x128xf32>
    %c4_113 = arith.constant 4 : index
    %c1_114 = arith.constant 1 : index
    %c0_115 = arith.constant 0 : index
    %c0_116 = arith.constant 0 : index
    %136 = vector.load %arg4[%c4_113, %c1_114, %c0_115, %c0_116] : memref<5x2x128x128xf32, #tpu.memory_space<vmem>>, vector<1x1x128x128xf32>
    %137 = vector.shape_cast %136 : vector<1x1x128x128xf32> to vector<128x128xf32>
    %cst_117 = arith.constant dense<0.000000e+00> : vector<16x128xf32>
    %138 = tpu.matmul %135, %137, %cst_117 {dimension_numbers = #tpu.dot_dimension_numbers<[1], [0], [0], [1], [0, 0, 1, 1], [], []>} : vector<16x128xf32>, vector<128x128xf32>, vector<16x128xf32> -> vector<16x128xf32>
    %139 = arith.addf %123, %138 : vector<16x128xf32>
    %c4_118 = arith.constant 4 : index
    %c1_119 = arith.constant 1 : index
    %c0_120 = arith.constant 0 : index
    %c0_121 = arith.constant 0 : index
    %140 = vector.load %arg5[%c4_118, %c1_119, %c0_120, %c0_121] : memref<5x2x1x128xf32, #tpu.memory_space<vmem>>, vector<1x1x1x128xf32>
    %141 = vector.shape_cast %140 : vector<1x1x1x128xf32> to vector<1x128xf32>
    %142 = vector.broadcast %141 : vector<1x128xf32> to vector<16x128xf32>
    %143 = arith.addf %139, %142 : vector<16x128xf32>
    %cst_122 = arith.constant 0.000000e+00 : f32
    %144 = vector.broadcast %cst_122 : f32 to vector<16x128xf32>
    %145 = arith.cmpf oge, %143, %144 : vector<16x128xf32>
    %cst_123 = arith.constant 0.00999999977 : f32
    %146 = vector.broadcast %cst_123 : f32 to vector<16x128xf32>
    %147 = arith.mulf %146, %143 : vector<16x128xf32>
    %148 = arith.select %145, %143, %147 : vector<16x128xi1>, vector<16x128xf32>
    %c1_124 = arith.constant 1 : index
    %c0_125 = arith.constant 0 : index
    %c0_126 = arith.constant 0 : index
    %149 = vector.load %arg8[%c1_124, %c0_125, %c0_126] : memref<2x128x128xf32, #tpu.memory_space<vmem>>, vector<1x128x128xf32>
    %150 = vector.shape_cast %149 : vector<1x128x128xf32> to vector<128x128xf32>
    %cst_127 = arith.constant dense<0.000000e+00> : vector<16x128xf32>
    %151 = tpu.matmul %148, %150, %cst_127 {dimension_numbers = #tpu.dot_dimension_numbers<[1], [0], [0], [1], [0, 0, 1, 1], [], []>} : vector<16x128xf32>, vector<128x128xf32>, vector<16x128xf32> -> vector<16x128xf32>
    %152 = arith.addf %98, %151 : vector<16x128xf32>
    %c0_128 = arith.constant 0 : index
    %c0_129 = arith.constant 0 : index
    %153 = vector.load %arg9[%c0_128, %c0_129] : memref<1x128xf32, #tpu.memory_space<vmem>>, vector<1x128xf32>
    %154 = vector.broadcast %153 : vector<1x128xf32> to vector<16x128xf32>
    %155 = arith.addf %152, %154 : vector<16x128xf32>
    %c0_130 = arith.constant 0 : index
    %c0_131 = arith.constant 0 : index
    %156 = vector.load %arg10[%c0_130, %c0_131] : memref<16x128xf32, #tpu.memory_space<vmem>>, vector<16x128xf32>
    tpu.vector_store %arg10[%c0_130, %c0_131], %155 {strides = array<i32>} : memref<16x128xf32, #tpu.memory_space<vmem>>, vector<16x128xf32>,
    return
  }
  func.func @transform_0(%arg0: i32) -> (i32, i32) {
    %c0_i32 = arith.constant 0 : i32
    %c0_i32_0 = arith.constant 0 : i32
    return %arg0, %c0_i32 : i32, i32
  }
  func.func @transform_1(%arg0: i32) -> (i32, i32) {
    %c0_i32 = arith.constant 0 : i32
    %c0_i32_0 = arith.constant 0 : i32
    %c0_i32_1 = arith.constant 0 : i32
    return %c0_i32, %c0_i32_0 : i32, i32
  }
  func.func @transform_2(%arg0: i32) -> (i32, i32) {
    %c0_i32 = arith.constant 0 : i32
    %c0_i32_0 = arith.constant 0 : i32
    %c0_i32_1 = arith.constant 0 : i32
    return %c0_i32, %c0_i32_0 : i32, i32
  }
  func.func @transform_3(%arg0: i32) -> (i32, i32, i32, i32) {
    %c0_i32 = arith.constant 0 : i32
    %c0_i32_0 = arith.constant 0 : i32
    %c0_i32_1 = arith.constant 0 : i32
    %c0_i32_2 = arith.constant 0 : i32
    %c0_i32_3 = arith.constant 0 : i32
    return %c0_i32, %c0_i32_0, %c0_i32_1, %c0_i32_2 : i32, i32, i32, i32
  }
  func.func @transform_4(%arg0: i32) -> (i32, i32, i32, i32) {
    %c0_i32 = arith.constant 0 : i32
    %c0_i32_0 = arith.constant 0 : i32
    %c0_i32_1 = arith.constant 0 : i32
    %c0_i32_2 = arith.constant 0 : i32
    %c0_i32_3 = arith.constant 0 : i32
    return %c0_i32, %c0_i32_0, %c0_i32_1, %c0_i32_2 : i32, i32, i32, i32
  }
  func.func @transform_5(%arg0: i32) -> (i32, i32) {
    %c0_i32 = arith.constant 0 : i32
    %c0_i32_0 = arith.constant 0 : i32
    %c0_i32_1 = arith.constant 0 : i32
    return %c0_i32, %c0_i32_0 : i32, i32
  }
  func.func @transform_6(%arg0: i32) -> (i32, i32) {
    %c0_i32 = arith.constant 0 : i32
    %c0_i32_0 = arith.constant 0 : i32
    %c0_i32_1 = arith.constant 0 : i32
    return %c0_i32, %c0_i32_0 : i32, i32
  }
  func.func @transform_7(%arg0: i32) -> (i32, i32, i32) {
    %c0_i32 = arith.constant 0 : i32
    %c0_i32_0 = arith.constant 0 : i32
    %c0_i32_1 = arith.constant 0 : i32
    %c0_i32_2 = arith.constant 0 : i32
    return %c0_i32, %c0_i32_0, %c0_i32_1 : i32, i32, i32
  }
  func.func @transform_8(%arg0: i32) -> (i32, i32) {
    %c0_i32 = arith.constant 0 : i32
    %c0_i32_0 = arith.constant 0 : i32
    %c0_i32_1 = arith.constant 0 : i32
    return %c0_i32, %c0_i32_0 : i32, i32
  }
  func.func @transform_9(%arg0: i32) -> (i32, i32) {
    %c0_i32 = arith.constant 0 : i32
    %c0_i32_0 = arith.constant 0 : i32
    return %arg0, %c0_i32 : i32, i32
  }
}

</mosaic_0001>

<llo_original>
// kernel: regression_forward.1
$region0: #{regression_forward.1}
  #allocation0 [shape = 'u32[]', space=smem, size = 0x4, offset = 0x4, fixed_abs, tag = 'smem constant byte address 0x4 - core index']
  #allocation1 [shape = 'u32[144,128]{1,0:T(1,128)}', space=vmem, size = 0x12000, scoped, tag = 'internal scratch']
  %s0 = inlined_call_operand.hbm [shape: f32[16,32], index: 0, kind: input, shape index: {}]
  %s1 = inlined_call_operand.hbm [shape: f32[32,128], index: 1, kind: input, shape index: {}]
  %s2 = inlined_call_operand.vmem [shape: f32[1,128], index: 2, kind: input, shape index: {}]
  %s3 = inlined_call_operand.hbm [shape: f32[5,2,128,128], index: 3, kind: input, shape index: {}]
  %s4 = inlined_call_operand.hbm [shape: f32[5,2,1,128], index: 4, kind: input, shape index: {}]
  %s5 = inlined_call_operand.hbm [shape: f32[128,128], index: 5, kind: input, shape index: {}]
  %s6 = inlined_call_operand.vmem [shape: f32[1,128], index: 6, kind: input, shape index: {}]
  %s7 = inlined_call_operand.hbm [shape: f32[2,128,128], index: 7, kind: input, shape index: {}]
  %s8 = inlined_call_operand.vmem [shape: f32[1,128], index: 8, kind: input, shape index: {}]
  %s9 = inlined_call_operand.hbm [shape: f32[16,128], index: 9, kind: output, shape index: {}]
  %s10 = sld [smem:[#allocation0]]
  $region70: #{regression_forward.1} parent=0
    _
  %s12 = ssub.s32 1, %s10
  %s13 = scalar_select 0, %s12, %s10
  $region1: #{regression_forward.1} parent=0
    #allocation2 [shape = 'u8[8192]{0}', space=vmem, size = 0x2000, scoped, tag = 'input window, operand 0, single buffered']
    #allocation3 [shape = 's32[1]{0}', space=sflag, size = 0x4, scoped, tag = 'scoped memory for regression_forward.1']
    #allocation4 [shape = 's32[1]{0}', space=sflag, size = 0x4, scoped, tag = 'scoped memory for regression_forward.1']
    #allocation5 [shape = 'u8[16384]{0}', space=vmem, size = 0x4000, scoped, tag = 'input window, operand 1, single buffered']
    #allocation6 [shape = 's32[1]{0}', space=sflag, size = 0x4, scoped, tag = 'scoped memory for regression_forward.1']
    #allocation7 [shape = 'u8[655360]{0}', space=vmem, size = 0xa0000, scoped, tag = 'input window, operand 3, single buffered']
    #allocation8 [shape = 'u8[5120]{0}', space=vmem, size = 0x1400, scoped, tag = 'input window, operand 4, single buffered']
    #allocation9 [shape = 's32[1]{0}', space=sflag, size = 0x4, scoped, tag = 'scoped memory for regression_forward.1']
    #allocation10 [shape = 'u8[65536]{0}', space=vmem, size = 0x10000, scoped, tag = 'input window, operand 5, single buffered']
    #allocation11 [shape = 'u8[131072]{0}', space=vmem, size = 0x20000, scoped, tag = 'input window, operand 7, single buffered']
    #allocation12 [shape = 's32[1]{0}', space=sflag, size = 0x4, scoped, tag = 'scoped memory for regression_forward.1']
    #allocation13 [shape = 'u8[8192]{0}', space=vmem, size = 0x2000, scoped, tag = 'output window, operand 0, single buffered']
    %14 = vsyncpa [#allocation3], 0
    %15 = vsyncpa [#allocation6], 0
    %16 = vsyncpa [#allocation9], 0
    %17 = vsyncpa [#allocation12], 0
    %18 = vsyncpa [#allocation4], 0
    // Predicated region
    $region2: #{regression_forward.1} parent=1 // pred_check
      _
    $region3: #{regression_forward.1} parent=1 // pred_check_branch
      %20 = sbr.rel (0) target = $region5
    $region4: #{regression_forward.1} parent=1 // pred_region
      %s22 = ssub.s32 256, 256
      %23 = vsyncadd [#allocation3], %s22
      %s24 = sshll.u32 [#allocation2], 4
      %s25 = int_to_ptr.vmem [resolvable:$true] %s24
      %30 = dma.hbm_to_vmem [thread:$0]  %s0, 256, %s25, [#allocation3], 128, 128, 8
    $region5: #{regression_forward.1} parent=1 // pred_fallthru
      _
    // Predicated region
    $region6: #{regression_forward.1} parent=1 // pred_check
      _
    $region7: #{regression_forward.1} parent=1 // pred_check_branch
      %32 = sbr.rel (0) target = $region9
    $region8: #{regression_forward.1} parent=1 // pred_region
      %s34 = ssub.s32 512, 512
      %35 = vsyncadd [#allocation6], %s34
      %s36 = sshll.u32 [#allocation5], 4
      %s37 = int_to_ptr.vmem [resolvable:$true] %s36
      %42 = dma.hbm_to_vmem [thread:$0]  %s1, 512, %s37, [#allocation6], 128, 128, 8
    $region9: #{regression_forward.1} parent=1 // pred_fallthru
      _
    // Predicated region
    $region10: #{regression_forward.1} parent=1 // pred_check
      _
    $region11: #{regression_forward.1} parent=1 // pred_check_branch
      %44 = sbr.rel (0) target = $region13
    $region12: #{regression_forward.1} parent=1 // pred_region
      _
    $region13: #{regression_forward.1} parent=1 // pred_fallthru
      _
    // Predicated region
    $region14: #{regression_forward.1} parent=1 // pred_check
      _
    $region15: #{regression_forward.1} parent=1 // pred_check_branch
      %46 = sbr.rel (0) target = $region17
    $region16: #{regression_forward.1} parent=1 // pred_region
      %s48 = ssub.s32 20480, 20480
      %49 = vsyncadd [#allocation6], %s48
      %s50 = sshll.u32 [#allocation7], 4
      %s51 = int_to_ptr.vmem [resolvable:$true] %s50
      %56 = dma.hbm_to_vmem [thread:$0]  %s3, 20480, %s51, [#allocation6], 128, 128, 8
    $region17: #{regression_forward.1} parent=1 // pred_fallthru
      _
    // Predicated region
    $region18: #{regression_forward.1} parent=1 // pred_check
      _
    $region19: #{regression_forward.1} parent=1 // pred_check_branch
      %58 = sbr.rel (0) target = $region21
    $region20: #{regression_forward.1} parent=1 // pred_region
      %s60 = ssub.s32 160, 160
      %61 = vsyncadd [#allocation9], %s60
      %s62 = sshll.u32 [#allocation8], 4
      %s63 = int_to_ptr.vmem [resolvable:$true] %s62
      %68 = dma.hbm_to_vmem [thread:$0]  %s4, 160, %s63, [#allocation9], 16, 16, 1
    $region21: #{regression_forward.1} parent=1 // pred_fallthru
      _
    // Predicated region
    $region22: #{regression_forward.1} parent=1 // pred_check
      _
    $region23: #{regression_forward.1} parent=1 // pred_check_branch
      %70 = sbr.rel (0) target = $region25
    $region24: #{regression_forward.1} parent=1 // pred_region
      %s72 = ssub.s32 2048, 2048
      %73 = vsyncadd [#allocation9], %s72
      %s74 = sshll.u32 [#allocation10], 4
      %s75 = int_to_ptr.vmem [resolvable:$true] %s74
      %80 = dma.hbm_to_vmem [thread:$0]  %s5, 2048, %s75, [#allocation9], 128, 128, 8
    $region25: #{regression_forward.1} parent=1 // pred_fallthru
      _
    // Predicated region
    $region26: #{regression_forward.1} parent=1 // pred_check
      _
    $region27: #{regression_forward.1} parent=1 // pred_check_branch
      %82 = sbr.rel (0) target = $region29
    $region28: #{regression_forward.1} parent=1 // pred_region
      _
    $region29: #{regression_forward.1} parent=1 // pred_fallthru
      _
    // Predicated region
    $region30: #{regression_forward.1} parent=1 // pred_check
      _
    $region31: #{regression_forward.1} parent=1 // pred_check_branch
      %84 = sbr.rel (0) target = $region33
    $region32: #{regression_forward.1} parent=1 // pred_region
      %s86 = ssub.s32 4096, 4096
      %87 = vsyncadd [#allocation12], %s86
      %s88 = sshll.u32 [#allocation11], 4
      %s89 = int_to_ptr.vmem [resolvable:$true] %s88
      %94 = dma.hbm_to_vmem [thread:$0]  %s7, 4096, %s89, [#allocation12], 128, 128, 8
    $region33: #{regression_forward.1} parent=1 // pred_fallthru
      _
    // Predicated region
    $region34: #{regression_forward.1} parent=1 // pred_check
      _
    $region35: #{regression_forward.1} parent=1 // pred_check_branch
      %96 = sbr.rel (0) target = $region37
    $region36: #{regression_forward.1} parent=1 // pred_region
      _
    $region37: #{regression_forward.1} parent=1 // pred_fallthru
      _
    // Predicated region
    $region38: #{regression_forward.1} parent=1 // pred_check
      _
    $region39: #{regression_forward.1} parent=1 // pred_check_branch
      %98 = sbr.rel (0) target = $region41
    $region40: #{regression_forward.1} parent=1 // pred_region
      %99 = dma.done [#allocation3], 256
    $region41: #{regression_forward.1} parent=1 // pred_fallthru
      _
    // Predicated region
    $region42: #{regression_forward.1} parent=1 // pred_check
      _
    $region43: #{regression_forward.1} parent=1 // pred_check_branch
      %101 = sbr.rel (0) target = $region45
    $region44: #{regression_forward.1} parent=1 // pred_region
      %102 = dma.done [#allocation6], 512
    $region45: #{regression_forward.1} parent=1 // pred_fallthru
      _
    // Predicated region
    $region46: #{regression_forward.1} parent=1 // pred_check
      _
    $region47: #{regression_forward.1} parent=1 // pred_check_branch
      %104 = sbr.rel (0) target = $region49
    $region48: #{regression_forward.1} parent=1 // pred_region
      %105 = dma.done [#allocation6], 20480
    $region49: #{regression_forward.1} parent=1 // pred_fallthru
      _
    // Predicated region
    $region50: #{regression_forward.1} parent=1 // pred_check
      _
    $region51: #{regression_forward.1} parent=1 // pred_check_branch
      %107 = sbr.rel (0) target = $region53
    $region52: #{regression_forward.1} parent=1 // pred_region
      %108 = dma.done [#allocation9], 160
    $region53: #{regression_forward.1} parent=1 // pred_fallthru
      _
    // Predicated region
    $region54: #{regression_forward.1} parent=1 // pred_check
      _
    $region55: #{regression_forward.1} parent=1 // pred_check_branch
      %110 = sbr.rel (0) target = $region57
    $region56: #{regression_forward.1} parent=1 // pred_region
      %111 = dma.done [#allocation9], 2048
    $region57: #{regression_forward.1} parent=1 // pred_fallthru
      _
    // Predicated region
    $region58: #{regression_forward.1} parent=1 // pred_check
      _
    $region59: #{regression_forward.1} parent=1 // pred_check_branch
      %113 = sbr.rel (0) target = $region61
    $region60: #{regression_forward.1} parent=1 // pred_region
      %114 = dma.done [#allocation12], 4096
    $region61: #{regression_forward.1} parent=1 // pred_fallthru
      _
    %v115 = vld [vmem:[#allocation2] sm:$0xff]
    %v116 = vld [vmem:[#allocation2 + $0x8] sm:$0xff]
    %v117 = vld [vmem:[#allocation5] sm:$0xff]
    %v118 = vld [vmem:[#allocation5 + $0x8] sm:$0xff]
    %v119 = vld [vmem:[#allocation5 + $0x10] sm:$0xff]
    %v120 = vld [vmem:[#allocation5 + $0x18] sm:$0xff]
    %v121 = vld [vmem:[%s2] sm:$0x1]
    %v123 = vlaneseq
    %v124 = vshrl.u32 %v123, 7
    %v125 = vsub.s32 0, %v124
    %v126 = vrot.slane %v121, %v125
    %vm128 = vcmask 261120
    %v130 = vsel %vm128, %v115, 0
    %v133 = vsel %vm128, %v116, 0
    %135 = vmatprep.subr.mxu0 0.0
    %136 = vmatpush1.msra.mxu0 %v117
    %137 = vmatprep.subr.mxu0 0.0
    %138 = vmatpush1.msra.mxu0 %v118
    %139 = vmatprep.subr.mxu0 0.0
    %140 = vmatpush1.msra.mxu0 %v119
    %141 = vmatprep.subr.mxu0 0.0
    %142 = vmatpush1.msra.mxu0 %v120
    %143 = vmatprep.subr.mxu0 0.0
    %144 = vmatpush1.msra.mxu0 0.0
    %145 = vmatprep.subr.mxu0 0.0
    %146 = vmatpush1.msra.mxu0 0.0
    %147 = vmatprep.subr.mxu0 0.0
    %148 = vmatpush1.msra.mxu0 0.0
    %149 = vmatprep.subr.mxu0 0.0
    %150 = vmatpush1.msra.mxu0 0.0
    %151 = vmatprep.subr.mxu0 0.0
    %152 = vmatpush1.msra.mxu0 0.0
    %153 = vmatprep.subr.mxu0 0.0
    %154 = vmatpush1.msra.mxu0 0.0
    %155 = vmatprep.subr.mxu0 0.0
    %156 = vmatpush1.msra.mxu0 0.0
    %157 = vmatprep.subr.mxu0 0.0
    %158 = vmatpush1.msra.mxu0 0.0
    %159 = vmatprep.subr.mxu0 0.0
    %160 = vmatpush1.msra.mxu0 0.0
    %161 = vmatprep.subr.mxu0 0.0
    %162 = vmatpush1.msra.mxu0 0.0
    %163 = vmatprep.subr.mxu0 0.0
    %164 = vmatpush1.msra.mxu0 0.0
    %165 = vmatprep.subr.mxu0 0.0
    %166 = vmatpush1.msra.mxu0 0.0
    %167 = vmatprep.subr.mxu0 0.0
    %168 = vmatpush1.msra.mxu0 0.0
    %169 = vmatprep.subr.mxu0 0.0
    %170 = vmatpush1.msra.mxu0 0.0
    %171 = vmatprep.subr.mxu0 0.0
    %172 = vmatpush1.msra.mxu0 0.0
    %173 = vmatprep.subr.mxu0 0.0
    %174 = vmatpush1.msra.mxu0 0.0
    %175 = vmatprep.subr.mxu0 0.0
    %176 = vmatpush1.msra.mxu0 0.0
    %177 = vmatprep.subr.mxu0 0.0
    %178 = vmatpush1.msra.mxu0 0.0
    %179 = vmatprep.subr.mxu0 0.0
    %180 = vmatpush1.msra.mxu0 0.0
    %181 = vmatprep.subr.mxu0 0.0
    %182 = vmatpush1.msra.mxu0 0.0
    %183 = vmatprep.subr.mxu0 0.0
    %184 = vmatpush1.msra.mxu0 0.0
    %185 = vmatprep.subr.mxu0 0.0
    %186 = vmatpush1.msra.mxu0 0.0
    %187 = vmatprep.subr.mxu0 0.0
    %188 = vmatpush1.msra.mxu0 0.0
    %189 = vmatprep.subr.mxu0 0.0
    %190 = vmatpush1.msra.mxu0 0.0
    %191 = vmatprep.subr.mxu0 0.0
    %192 = vmatpush1.msra.mxu0 0.0
    %193 = vmatprep.subr.mxu0 0.0
    %194 = vmatpush1.msra.mxu0 0.0
    %195 = vmatprep.subr.mxu0 0.0
    %196 = vmatpush1.msra.mxu0 0.0
    %197 = vmatprep.subr.mxu0 0.0
    %198 = vmatpush1.msra.mxu0 0.0
    %199 = vmatprep.mubr.f32.mxu0 0.0
    %200 = vmatmul.mubr.f32.gmra.mrb[0].mxu0 %v130
    %v201 = vpop.f32.mrb[0].mxu0
    %v202 = vadd.f32 %v126, %v201
    %v203 = vpop.f32.mrb[0].mxu0
    %204 = vmatprep.mubr.f32.mxu0 0.0
    %205 = vmatmul.mubr.f32.gmra.mrb[0].mxu0 %v133
    %v206 = vpop.f32.mrb[0].mxu0
    %v207 = vadd.f32 %v126, %v206
    %v208 = vpop.f32.mrb[0].mxu0
    %209 = vdwg.mxu0
    %vm210 = vcmp.ge.f32.partialorder %v202, 0.0
    %vm211 = vcmp.ge.f32.partialorder %v207, 0.0
    %v212 = vmul.f32 %v202, 0.01
    %v213 = vmul.f32 %v207, 0.01
    %v214 = vsel %vm210, %v202, %v212
    %v215 = vsel %vm211, %v207, %v213
    %v216 = vld [vmem:[#allocation7] sm:$0xff]
    %v217 = vld [vmem:[#allocation7 + $0x8] sm:$0xff]
    %v218 = vld [vmem:[#allocation7 + $0x10] sm:$0xff]
    %v219 = vld [vmem:[#allocation7 + $0x18] sm:$0xff]
    %v220 = vld [vmem:[#allocation7 + $0x20] sm:$0xff]
    %v221 = vld [vmem:[#allocation7 + $0x28] sm:$0xff]
    %v222 = vld [vmem:[#allocation7 + $0x30] sm:$0xff]
    %v223 = vld [vmem:[#allocation7 + $0x38] sm:$0xff]
    %v224 = vld [vmem:[#allocation7 + $0x40] sm:$0xff]
    %v225 = vld [vmem:[#allocation7 + $0x48] sm:$0xff]
    %v226 = vld [vmem:[#allocation7 + $0x50] sm:$0xff]
    %v227 = vld [vmem:[#allocation7 + $0x58] sm:$0xff]
    %v228 = vld [vmem:[#allocation7 + $0x60] sm:$0xff]
    %v229 = vld [vmem:[#allocation7 + $0x68] sm:$0xff]
    %v230 = vld [vmem:[#allocation7 + $0x70] sm:$0xff]
    %v231 = vld [vmem:[#allocation7 + $0x78] sm:$0xff]
    %v232 = vld [vmem:[#allocation8] sm:$0x1]
    %v234 = vlaneseq
    %v235 = vshrl.u32 %v234, 7
    %v236 = vsub.s32 0, %v235
    %v237 = vrot.slane %v232, %v236
    %239 = vmatprep.subr.mxu0 0.0
    %240 = vmatpush1.msra.mxu0 %v216
    %241 = vmatprep.subr.mxu0 0.0
    %242 = vmatpush1.msra.mxu0 %v217
    %243 = vmatprep.subr.mxu0 0.0
    %244 = vmatpush1.msra.mxu0 %v218
    %245 = vmatprep.subr.mxu0 0.0
    %246 = vmatpush1.msra.mxu0 %v219
    %247 = vmatprep.subr.mxu0 0.0
    %248 = vmatpush1.msra.mxu0 %v220
    %249 = vmatprep.subr.mxu0 0.0
    %250 = vmatpush1.msra.mxu0 %v221
    %251 = vmatprep.subr.mxu0 0.0
    %252 = vmatpush1.msra.mxu0 %v222
    %253 = vmatprep.subr.mxu0 0.0
    %254 = vmatpush1.msra.mxu0 %v223
    %255 = vmatprep.subr.mxu0 0.0
    %256 = vmatpush1.msra.mxu0 %v224
    %257 = vmatprep.subr.mxu0 0.0
    %258 = vmatpush1.msra.mxu0 %v225
    %259 = vmatprep.subr.mxu0 0.0
    %260 = vmatpush1.msra.mxu0 %v226
    %261 = vmatprep.subr.mxu0 0.0
    %262 = vmatpush1.msra.mxu0 %v227
    %263 = vmatprep.subr.mxu0 0.0
    %264 = vmatpush1.msra.mxu0 %v228
    %265 = vmatprep.subr.mxu0 0.0
    %266 = vmatpush1.msra.mxu0 %v229
    %267 = vmatprep.subr.mxu0 0.0
    %268 = vmatpush1.msra.mxu0 %v230
    %269 = vmatprep.subr.mxu0 0.0
    %270 = vmatpush1.msra.mxu0 %v231
    %271 = vmatprep.subr.mxu0 0.0
    %272 = vmatpush1.msra.mxu0 0.0
    %273 = vmatprep.subr.mxu0 0.0
    %274 = vmatpush1.msra.mxu0 0.0
    %275 = vmatprep.subr.mxu0 0.0
    %276 = vmatpush1.msra.mxu0 0.0
    %277 = vmatprep.subr.mxu0 0.0
    %278 = vmatpush1.msra.mxu0 0.0
    %279 = vmatprep.subr.mxu0 0.0
    %280 = vmatpush1.msra.mxu0 0.0
    %281 = vmatprep.subr.mxu0 0.0
    %282 = vmatpush1.msra.mxu0 0.0
    %283 = vmatprep.subr.mxu0 0.0
    %284 = vmatpush1.msra.mxu0 0.0
    %285 = vmatprep.subr.mxu0 0.0
    %286 = vmatpush1.msra.mxu0 0.0
    %287 = vmatprep.subr.mxu0 0.0
    %288 = vmatpush1.msra.mxu0 0.0
    %289 = vmatprep.subr.mxu0 0.0
    %290 = vmatpush1.msra.mxu0 0.0
    %291 = vmatprep.subr.mxu0 0.0
    %292 = vmatpush1.msra.mxu0 0.0
    %293 = vmatprep.subr.mxu0 0.0
    %294 = vmatpush1.msra.mxu0 0.0
    %295 = vmatprep.subr.mxu0 0.0
    %296 = vmatpush1.msra.mxu0 0.0
    %297 = vmatprep.subr.mxu0 0.0
    %298 = vmatpush1.msra.mxu0 0.0
    %299 = vmatprep.subr.mxu0 0.0
    %300 = vmatpush1.msra.mxu0 0.0
    %301 = vmatprep.subr.mxu0 0.0
    %302 = vmatpush1.msra.mxu0 0.0
    %303 = vmatprep.mubr.f32.mxu0 0.0
    %304 = vmatmul.mubr.f32.gmra.mrb[0].mxu0 %v214
    %v305 = vpop.f32.mrb[0].mxu0
    %v306 = vadd.f32 %v237, %v305
    %v307 = vpop.f32.mrb[0].mxu0
    %308 = vmatprep.mubr.f32.mxu0 0.0
    %309 = vmatmul.mubr.f32.gmra.mrb[0].mxu0 %v215
    %v310 = vpop.f32.mrb[0].mxu0
    %v311 = vadd.f32 %v237, %v310
    %v312 = vpop.f32.mrb[0].mxu0
    %313 = vdwg.mxu0
    %vm314 = vcmp.ge.f32.partialorder %v306, 0.0
    %vm315 = vcmp.ge.f32.partialorder %v311, 0.0
    %v316 = vmul.f32 %v306, 0.01
    %v317 = vmul.f32 %v311, 0.01
    %v318 = vsel %vm314, %v306, %v316
    %v319 = vsel %vm315, %v311, %v317
    %s320 = scalar_lea.vmem [#allocation7], 128
    %v321 = vld [vmem:[%s320] sm:$0xff]
    %v322 = vld [vmem:[%s320 + $0x8] sm:$0xff]
    %v323 = vld [vmem:[%s320 + $0x10] sm:$0xff]
    %v324 = vld [vmem:[%s320 + $0x18] sm:$0xff]
    %v325 = vld [vmem:[%s320 + $0x20] sm:$0xff]
    %v326 = vld [vmem:[%s320 + $0x28] sm:$0xff]
    %v327 = vld [vmem:[%s320 + $0x30] sm:$0xff]
    %v328 = vld [vmem:[%s320 + $0x38] sm:$0xff]
    %v329 = vld [vmem:[%s320 + $0x40] sm:$0xff]
    %v330 = vld [vmem:[%s320 + $0x48] sm:$0xff]
    %v331 = vld [vmem:[%s320 + $0x50] sm:$0xff]
    %v332 = vld [vmem:[%s320 + $0x58] sm:$0xff]
    %v333 = vld [vmem:[%s320 + $0x60] sm:$0xff]
    %v334 = vld [vmem:[%s320 + $0x68] sm:$0xff]
    %v335 = vld [vmem:[%s320 + $0x70] sm:$0xff]
    %v336 = vld [vmem:[%s320 + $0x78] sm:$0xff]
    %337 = vmatprep.subr.mxu0 0.0
    %338 = vmatpush1.msra.mxu0 %v321
    %339 = vmatprep.subr.mxu0 0.0
    %340 = vmatpush1.msra.mxu0 %v322
    %341 = vmatprep.subr.mxu0 0.0
    %342 = vmatpush1.msra.mxu0 %v323
    %343 = vmatprep.subr.mxu0 0.0
    %344 = vmatpush1.msra.mxu0 %v324
    %345 = vmatprep.subr.mxu0 0.0
    %346 = vmatpush1.msra.mxu0 %v325
    %347 = vmatprep.subr.mxu0 0.0
    %348 = vmatpush1.msra.mxu0 %v326
    %349 = vmatprep.subr.mxu0 0.0
    %350 = vmatpush1.msra.mxu0 %v327
    %351 = vmatprep.subr.mxu0 0.0
    %352 = vmatpush1.msra.mxu0 %v328
    %353 = vmatprep.subr.mxu0 0.0
    %354 = vmatpush1.msra.mxu0 %v329
    %355 = vmatprep.subr.mxu0 0.0
    %356 = vmatpush1.msra.mxu0 %v330
    %357 = vmatprep.subr.mxu0 0.0
    %358 = vmatpush1.msra.mxu0 %v331
    %359 = vmatprep.subr.mxu0 0.0
    %360 = vmatpush1.msra.mxu0 %v332
    %361 = vmatprep.subr.mxu0 0.0
    %362 = vmatpush1.msra.mxu0 %v333
    %363 = vmatprep.subr.mxu0 0.0
    %364 = vmatpush1.msra.mxu0 %v334
    %365 = vmatprep.subr.mxu0 0.0
    %366 = vmatpush1.msra.mxu0 %v335
    %367 = vmatprep.subr.mxu0 0.0
    %368 = vmatpush1.msra.mxu0 %v336
    %369 = vmatprep.subr.mxu0 0.0
    %370 = vmatpush1.msra.mxu0 0.0
    %371 = vmatprep.subr.mxu0 0.0
    %372 = vmatpush1.msra.mxu0 0.0
    %373 = vmatprep.subr.mxu0 0.0
    %374 = vmatpush1.msra.mxu0 0.0
    %375 = vmatprep.subr.mxu0 0.0
    %376 = vmatpush1.msra.mxu0 0.0
    %377 = vmatprep.subr.mxu0 0.0
    %378 = vmatpush1.msra.mxu0 0.0
    %379 = vmatprep.subr.mxu0 0.0
    %380 = vmatpush1.msra.mxu0 0.0
    %381 = vmatprep.subr.mxu0 0.0
    %382 = vmatpush1.msra.mxu0 0.0
    %383 = vmatprep.subr.mxu0 0.0
    %384 = vmatpush1.msra.mxu0 0.0
    %385 = vmatprep.subr.mxu0 0.0
    %386 = vmatpush1.msra.mxu0 0.0
    %387 = vmatprep.subr.mxu0 0.0
    %388 = vmatpush1.msra.mxu0 0.0
    %389 = vmatprep.subr.mxu0 0.0
    %390 = vmatpush1.msra.mxu0 0.0
    %391 = vmatprep.subr.mxu0 0.0
    %392 = vmatpush1.msra.mxu0 0.0
    %393 = vmatprep.subr.mxu0 0.0
    %394 = vmatpush1.msra.mxu0 0.0
    %395 = vmatprep.subr.mxu0 0.0
    %396 = vmatpush1.msra.mxu0 0.0
    %397 = vmatprep.subr.mxu0 0.0
    %398 = vmatpush1.msra.mxu0 0.0
    %399 = vmatprep.subr.mxu0 0.0
    %400 = vmatpush1.msra.mxu0 0.0
    %401 = vmatprep.mubr.f32.mxu0 0.0
    %402 = vmatmul.mubr.f32.gmra.mrb[0].mxu0 %v318
    %v403 = vpop.f32.mrb[0].mxu0
    %v404 = vadd.f32 0.0, %v403
    %v405 = vpop.f32.mrb[0].mxu0
    %406 = vmatprep.mubr.f32.mxu0 0.0
    %407 = vmatmul.mubr.f32.gmra.mrb[0].mxu0 %v319
    %v408 = vpop.f32.mrb[0].mxu0
    %v409 = vadd.f32 0.0, %v408
    %v410 = vpop.f32.mrb[0].mxu0
    %411 = vdwg.mxu0
    %v412 = vadd.f32 %v214, %v404
    %v413 = vadd.f32 %v215, %v409
    %s414 = scalar_lea.vmem [#allocation8], 1
    %v415 = vld [vmem:[%s414] sm:$0x1]
    %v417 = vlaneseq
    %v418 = vshrl.u32 %v417, 7
    %v419 = vsub.s32 0, %v418
    %v420 = vrot.slane %v415, %v419
    %v422 = vadd.f32 %v412, %v420
    %v423 = vadd.f32 %v413, %v420
    %vm424 = vcmp.ge.f32.partialorder %v422, 0.0
    %vm425 = vcmp.ge.f32.partialorder %v423, 0.0
    %v426 = vmul.f32 %v422, 0.01
    %v427 = vmul.f32 %v423, 0.01
    %v428 = vsel %vm424, %v422, %v426
    %v429 = vsel %vm425, %v423, %v427
    %s430 = scalar_lea.vmem [#allocation7], 256
    %v431 = vld [vmem:[%s430] sm:$0xff]
    %v432 = vld [vmem:[%s430 + $0x8] sm:$0xff]
    %v433 = vld [vmem:[%s430 + $0x10] sm:$0xff]
    %v434 = vld [vmem:[%s430 + $0x18] sm:$0xff]
    %v435 = vld [vmem:[%s430 + $0x20] sm:$0xff]
    %v436 = vld [vmem:[%s430 + $0x28] sm:$0xff]
    %v437 = vld [vmem:[%s430 + $0x30] sm:$0xff]
    %v438 = vld [vmem:[%s430 + $0x38] sm:$0xff]
    %v439 = vld [vmem:[%s430 + $0x40] sm:$0xff]
    %v440 = vld [vmem:[%s430 + $0x48] sm:$0xff]
    %v441 = vld [vmem:[%s430 + $0x50] sm:$0xff]
    %v442 = vld [vmem:[%s430 + $0x58] sm:$0xff]
    %v443 = vld [vmem:[%s430 + $0x60] sm:$0xff]
    %v444 = vld [vmem:[%s430 + $0x68] sm:$0xff]
    %v445 = vld [vmem:[%s430 + $0x70] sm:$0xff]
    %v446 = vld [vmem:[%s430 + $0x78] sm:$0xff]
    %s447 = scalar_lea.vmem [#allocation8], 2
    %v448 = vld [vmem:[%s447] sm:$0x1]
    %v450 = vlaneseq
    %v451 = vshrl.u32 %v450, 7
    %v452 = vsub.s32 0, %v451
    %v453 = vrot.slane %v448, %v452
    %455 = vmatprep.subr.mxu0 0.0
    %456 = vmatpush1.msra.mxu0 %v431
    %457 = vmatprep.subr.mxu0 0.0
    %458 = vmatpush1.msra.mxu0 %v432
    %459 = vmatprep.subr.mxu0 0.0
    %460 = vmatpush1.msra.mxu0 %v433
    %461 = vmatprep.subr.mxu0 0.0
    %462 = vmatpush1.msra.mxu0 %v434
    %463 = vmatprep.subr.mxu0 0.0
    %464 = vmatpush1.msra.mxu0 %v435
    %465 = vmatprep.subr.mxu0 0.0
    %466 = vmatpush1.msra.mxu0 %v436
    %467 = vmatprep.subr.mxu0 0.0
    %468 = vmatpush1.msra.mxu0 %v437
    %469 = vmatprep.subr.mxu0 0.0
    %470 = vmatpush1.msra.mxu0 %v438
    %471 = vmatprep.subr.mxu0 0.0
    %472 = vmatpush1.msra.mxu0 %v439
    %473 = vmatprep.subr.mxu0 0.0
    %474 = vmatpush1.msra.mxu0 %v440
    %475 = vmatprep.subr.mxu0 0.0
    %476 = vmatpush1.msra.mxu0 %v441
    %477 = vmatprep.subr.mxu0 0.0
    %478 = vmatpush1.msra.mxu0 %v442
    %479 = vmatprep.subr.mxu0 0.0
    %480 = vmatpush1.msra.mxu0 %v443
    %481 = vmatprep.subr.mxu0 0.0
    %482 = vmatpush1.msra.mxu0 %v444
    %483 = vmatprep.subr.mxu0 0.0
    %484 = vmatpush1.msra.mxu0 %v445
    %485 = vmatprep.subr.mxu0 0.0
    %486 = vmatpush1.msra.mxu0 %v446
    %487 = vmatprep.subr.mxu0 0.0
    %488 = vmatpush1.msra.mxu0 0.0
    %489 = vmatprep.subr.mxu0 0.0
    %490 = vmatpush1.msra.mxu0 0.0
    %491 = vmatprep.subr.mxu0 0.0
    %492 = vmatpush1.msra.mxu0 0.0
    %493 = vmatprep.subr.mxu0 0.0
    %494 = vmatpush1.msra.mxu0 0.0
    %495 = vmatprep.subr.mxu0 0.0
    %496 = vmatpush1.msra.mxu0 0.0
    %497 = vmatprep.subr.mxu0 0.0
    %498 = vmatpush1.msra.mxu0 0.0
    %499 = vmatprep.subr.mxu0 0.0
    %500 = vmatpush1.msra.mxu0 0.0
    %501 = vmatprep.subr.mxu0 0.0
    %502 = vmatpush1.msra.mxu0 0.0
    %503 = vmatprep.subr.mxu0 0.0
    %504 = vmatpush1.msra.mxu0 0.0
    %505 = vmatprep.subr.mxu0 0.0
    %506 = vmatpush1.msra.mxu0 0.0
    %507 = vmatprep.subr.mxu0 0.0
    %508 = vmatpush1.msra.mxu0 0.0
    %509 = vmatprep.subr.mxu0 0.0
    %510 = vmatpush1.msra.mxu0 0.0
    %511 = vmatprep.subr.mxu0 0.0
    %512 = vmatpush1.msra.mxu0 0.0
    %513 = vmatprep.subr.mxu0 0.0
    %514 = vmatpush1.msra.mxu0 0.0
    %515 = vmatprep.subr.mxu0 0.0
    %516 = vmatpush1.msra.mxu0 0.0
    %517 = vmatprep.subr.mxu0 0.0
    %518 = vmatpush1.msra.mxu0 0.0
    %519 = vmatprep.mubr.f32.mxu0 0.0
    %520 = vmatmul.mubr.f32.gmra.mrb[0].mxu0 %v428
    %v521 = vpop.f32.mrb[0].mxu0
    %v522 = vadd.f32 %v453, %v521
    %v523 = vpop.f32.mrb[0].mxu0
    %524 = vmatprep.mubr.f32.mxu0 0.0
    %525 = vmatmul.mubr.f32.gmra.mrb[0].mxu0 %v429
    %v526 = vpop.f32.mrb[0].mxu0
    %v527 = vadd.f32 %v453, %v526
    %v528 = vpop.f32.mrb[0].mxu0
    %529 = vdwg.mxu0
    %vm530 = vcmp.ge.f32.partialorder %v522, 0.0
    %vm531 = vcmp.ge.f32.partialorder %v527, 0.0
    %v532 = vmul.f32 %v522, 0.01
    %v533 = vmul.f32 %v527, 0.01
    %v534 = vsel %vm530, %v522, %v532
    %v535 = vsel %vm531, %v527, %v533
    %s536 = scalar_lea.vmem [#allocation7], 384
    %v537 = vld [vmem:[%s536] sm:$0xff]
    %v538 = vld [vmem:[%s536 + $0x8] sm:$0xff]
    %v539 = vld [vmem:[%s536 + $0x10] sm:$0xff]
    %v540 = vld [vmem:[%s536 + $0x18] sm:$0xff]
    %v541 = vld [vmem:[%s536 + $0x20] sm:$0xff]
    %v542 = vld [vmem:[%s536 + $0x28] sm:$0xff]
    %v543 = vld [vmem:[%s536 + $0x30] sm:$0xff]
    %v544 = vld [vmem:[%s536 + $0x38] sm:$0xff]
    %v545 = vld [vmem:[%s536 + $0x40] sm:$0xff]
    %v546 = vld [vmem:[%s536 + $0x48] sm:$0xff]
    %v547 = vld [vmem:[%s536 + $0x50] sm:$0xff]
    %v548 = vld [vmem:[%s536 + $0x58] sm:$0xff]
    %v549 = vld [vmem:[%s536 + $0x60] sm:$0xff]
    %v550 = vld [vmem:[%s536 + $0x68] sm:$0xff]
    %v551 = vld [vmem:[%s536 + $0x70] sm:$0xff]
    %v552 = vld [vmem:[%s536 + $0x78] sm:$0xff]
    %553 = vmatprep.subr.mxu0 0.0
    %554 = vmatpush1.msra.mxu0 %v537
    %555 = vmatprep.subr.mxu0 0.0
    %556 = vmatpush1.msra.mxu0 %v538
    %557 = vmatprep.subr.mxu0 0.0
    %558 = vmatpush1.msra.mxu0 %v539
    %559 = vmatprep.subr.mxu0 0.0
    %560 = vmatpush1.msra.mxu0 %v540
    %561 = vmatprep.subr.mxu0 0.0
    %562 = vmatpush1.msra.mxu0 %v541
    %563 = vmatprep.subr.mxu0 0.0
    %564 = vmatpush1.msra.mxu0 %v542
    %565 = vmatprep.subr.mxu0 0.0
    %566 = vmatpush1.msra.mxu0 %v543
    %567 = vmatprep.subr.mxu0 0.0
    %568 = vmatpush1.msra.mxu0 %v544
    %569 = vmatprep.subr.mxu0 0.0
    %570 = vmatpush1.msra.mxu0 %v545
    %571 = vmatprep.subr.mxu0 0.0
    %572 = vmatpush1.msra.mxu0 %v546
    %573 = vmatprep.subr.mxu0 0.0
    %574 = vmatpush1.msra.mxu0 %v547
    %575 = vmatprep.subr.mxu0 0.0
    %576 = vmatpush1.msra.mxu0 %v548
    %577 = vmatprep.subr.mxu0 0.0
    %578 = vmatpush1.msra.mxu0 %v549
    %579 = vmatprep.subr.mxu0 0.0
    %580 = vmatpush1.msra.mxu0 %v550
    %581 = vmatprep.subr.mxu0 0.0
    %582 = vmatpush1.msra.mxu0 %v551
    %583 = vmatprep.subr.mxu0 0.0
    %584 = vmatpush1.msra.mxu0 %v552
    %585 = vmatprep.subr.mxu0 0.0
    %586 = vmatpush1.msra.mxu0 0.0
    %587 = vmatprep.subr.mxu0 0.0
    %588 = vmatpush1.msra.mxu0 0.0
    %589 = vmatprep.subr.mxu0 0.0
    %590 = vmatpush1.msra.mxu0 0.0
    %591 = vmatprep.subr.mxu0 0.0
    %592 = vmatpush1.msra.mxu0 0.0
    %593 = vmatprep.subr.mxu0 0.0
    %594 = vmatpush1.msra.mxu0 0.0
    %595 = vmatprep.subr.mxu0 0.0
    %596 = vmatpush1.msra.mxu0 0.0
    %597 = vmatprep.subr.mxu0 0.0
    %598 = vmatpush1.msra.mxu0 0.0
    %599 = vmatprep.subr.mxu0 0.0
    %600 = vmatpush1.msra.mxu0 0.0
    %601 = vmatprep.subr.mxu0 0.0
    %602 = vmatpush1.msra.mxu0 0.0
    %603 = vmatprep.subr.mxu0 0.0
    %604 = vmatpush1.msra.mxu0 0.0
    %605 = vmatprep.subr.mxu0 0.0
    %606 = vmatpush1.msra.mxu0 0.0
    %607 = vmatprep.subr.mxu0 0.0
    %608 = vmatpush1.msra.mxu0 0.0
    %609 = vmatprep.subr.mxu0 0.0
    %610 = vmatpush1.msra.mxu0 0.0
    %611 = vmatprep.subr.mxu0 0.0
    %612 = vmatpush1.msra.mxu0 0.0
    %613 = vmatprep.subr.mxu0 0.0
    %614 = vmatpush1.msra.mxu0 0.0
    %615 = vmatprep.subr.mxu0 0.0
    %616 = vmatpush1.msra.mxu0 0.0
    %617 = vmatprep.mubr.f32.mxu0 0.0
    %618 = vmatmul.mubr.f32.gmra.mrb[0].mxu0 %v534
    %v619 = vpop.f32.mrb[0].mxu0
    %v620 = vadd.f32 0.0, %v619
    %v621 = vpop.f32.mrb[0].mxu0
    %622 = vmatprep.mubr.f32.mxu0 0.0
    %623 = vmatmul.mubr.f32.gmra.mrb[0].mxu0 %v535
    %v624 = vpop.f32.mrb[0].mxu0
    %v625 = vadd.f32 0.0, %v624
    %v626 = vpop.f32.mrb[0].mxu0
    %627 = vdwg.mxu0
    %v628 = vadd.f32 %v428, %v620
    %v629 = vadd.f32 %v429, %v625
    %s630 = scalar_lea.vmem [#allocation8], 3
    %v631 = vld [vmem:[%s630] sm:$0x1]
    %v633 = vlaneseq
    %v634 = vshrl.u32 %v633, 7
    %v635 = vsub.s32 0, %v634
    %v636 = vrot.slane %v631, %v635
    %v638 = vadd.f32 %v628, %v636
    %v639 = vadd.f32 %v629, %v636
    %vm640 = vcmp.ge.f32.partialorder %v638, 0.0
    %vm641 = vcmp.ge.f32.partialorder %v639, 0.0
    %v642 = vmul.f32 %v638, 0.01
    %v643 = vmul.f32 %v639, 0.01
    %v644 = vsel %vm640, %v638, %v642
    %v645 = vsel %vm641, %v639, %v643
    %s646 = scalar_lea.vmem [#allocation7], 512
    %v647 = vld [vmem:[%s646] sm:$0xff]
    %v648 = vld [vmem:[%s646 + $0x8] sm:$0xff]
    %v649 = vld [vmem:[%s646 + $0x10] sm:$0xff]
    %v650 = vld [vmem:[%s646 + $0x18] sm:$0xff]
    %v651 = vld [vmem:[%s646 + $0x20] sm:$0xff]
    %v652 = vld [vmem:[%s646 + $0x28] sm:$0xff]
    %v653 = vld [vmem:[%s646 + $0x30] sm:$0xff]
    %v654 = vld [vmem:[%s646 + $0x38] sm:$0xff]
    %v655 = vld [vmem:[%s646 + $0x40] sm:$0xff]
    %v656 = vld [vmem:[%s646 + $0x48] sm:$0xff]
    %v657 = vld [vmem:[%s646 + $0x50] sm:$0xff]
    %v658 = vld [vmem:[%s646 + $0x58] sm:$0xff]
    %v659 = vld [vmem:[%s646 + $0x60] sm:$0xff]
    %v660 = vld [vmem:[%s646 + $0x68] sm:$0xff]
    %v661 = vld [vmem:[%s646 + $0x70] sm:$0xff]
    %v662 = vld [vmem:[%s646 + $0x78] sm:$0xff]
    %s663 = scalar_lea.vmem [#allocation8], 4
    %v664 = vld [vmem:[%s663] sm:$0x1]
    %v666 = vlaneseq
    %v667 = vshrl.u32 %v666, 7
    %v668 = vsub.s32 0, %v667
    %v669 = vrot.slane %v664, %v668
    %671 = vmatprep.subr.mxu0 0.0
    %672 = vmatpush1.msra.mxu0 %v647
    %673 = vmatprep.subr.mxu0 0.0
    %674 = vmatpush1.msra.mxu0 %v648
    %675 = vmatprep.subr.mxu0 0.0
    %676 = vmatpush1.msra.mxu0 %v649
    %677 = vmatprep.subr.mxu0 0.0
    %678 = vmatpush1.msra.mxu0 %v650
    %679 = vmatprep.subr.mxu0 0.0
    %680 = vmatpush1.msra.mxu0 %v651
    %681 = vmatprep.subr.mxu0 0.0
    %682 = vmatpush1.msra.mxu0 %v652
    %683 = vmatprep.subr.mxu0 0.0
    %684 = vmatpush1.msra.mxu0 %v653
    %685 = vmatprep.subr.mxu0 0.0
    %686 = vmatpush1.msra.mxu0 %v654
    %687 = vmatprep.subr.mxu0 0.0
    %688 = vmatpush1.msra.mxu0 %v655
    %689 = vmatprep.subr.mxu0 0.0
    %690 = vmatpush1.msra.mxu0 %v656
    %691 = vmatprep.subr.mxu0 0.0
    %692 = vmatpush1.msra.mxu0 %v657
    %693 = vmatprep.subr.mxu0 0.0
    %694 = vmatpush1.msra.mxu0 %v658
    %695 = vmatprep.subr.mxu0 0.0
    %696 = vmatpush1.msra.mxu0 %v659
    %697 = vmatprep.subr.mxu0 0.0
    %698 = vmatpush1.msra.mxu0 %v660
    %699 = vmatprep.subr.mxu0 0.0
    %700 = vmatpush1.msra.mxu0 %v661
    %701 = vmatprep.subr.mxu0 0.0
    %702 = vmatpush1.msra.mxu0 %v662
    %703 = vmatprep.subr.mxu0 0.0
    %704 = vmatpush1.msra.mxu0 0.0
    %705 = vmatprep.subr.mxu0 0.0
    %706 = vmatpush1.msra.mxu0 0.0
    %707 = vmatprep.subr.mxu0 0.0
    %708 = vmatpush1.msra.mxu0 0.0
    %709 = vmatprep.subr.mxu0 0.0
    %710 = vmatpush1.msra.mxu0 0.0
    %711 = vmatprep.subr.mxu0 0.0
    %712 = vmatpush1.msra.mxu0 0.0
    %713 = vmatprep.subr.mxu0 0.0
    %714 = vmatpush1.msra.mxu0 0.0
    %715 = vmatprep.subr.mxu0 0.0
    %716 = vmatpush1.msra.mxu0 0.0
    %717 = vmatprep.subr.mxu0 0.0
    %718 = vmatpush1.msra.mxu0 0.0
    %719 = vmatprep.subr.mxu0 0.0
    %720 = vmatpush1.msra.mxu0 0.0
    %721 = vmatprep.subr.mxu0 0.0
    %722 = vmatpush1.msra.mxu0 0.0
    %723 = vmatprep.subr.mxu0 0.0
    %724 = vmatpush1.msra.mxu0 0.0
    %725 = vmatprep.subr.mxu0 0.0
    %726 = vmatpush1.msra.mxu0 0.0
    %727 = vmatprep.subr.mxu0 0.0
    %728 = vmatpush1.msra.mxu0 0.0
    %729 = vmatprep.subr.mxu0 0.0
    %730 = vmatpush1.msra.mxu0 0.0
    %731 = vmatprep.subr.mxu0 0.0
    %732 = vmatpush1.msra.mxu0 0.0
    %733 = vmatprep.subr.mxu0 0.0
    %734 = vmatpush1.msra.mxu0 0.0
    %735 = vmatprep.mubr.f32.mxu0 0.0
    %736 = vmatmul.mubr.f32.gmra.mrb[0].mxu0 %v644
    %v737 = vpop.f32.mrb[0].mxu0
    %v738 = vadd.f32 %v669, %v737
    %v739 = vpop.f32.mrb[0].mxu0
    %740 = vmatprep.mubr.f32.mxu0 0.0
    %741 = vmatmul.mubr.f32.gmra.mrb[0].mxu0 %v645
    %v742 = vpop.f32.mrb[0].mxu0
    %v743 = vadd.f32 %v669, %v742
    %v744 = vpop.f32.mrb[0].mxu0
    %745 = vdwg.mxu0
    %vm746 = vcmp.ge.f32.partialorder %v738, 0.0
    %vm747 = vcmp.ge.f32.partialorder %v743, 0.0
    %v748 = vmul.f32 %v738, 0.01
    %v749 = vmul.f32 %v743, 0.01
    %v750 = vsel %vm746, %v738, %v748
    %v751 = vsel %vm747, %v743, %v749
    %s752 = scalar_lea.vmem [#allocation7], 640
    %v753 = vld [vmem:[%s752] sm:$0xff]
    %v754 = vld [vmem:[%s752 + $0x8] sm:$0xff]
    %v755 = vld [vmem:[%s752 + $0x10] sm:$0xff]
    %v756 = vld [vmem:[%s752 + $0x18] sm:$0xff]
    %v757 = vld [vmem:[%s752 + $0x20] sm:$0xff]
    %v758 = vld [vmem:[%s752 + $0x28] sm:$0xff]
    %v759 = vld [vmem:[%s752 + $0x30] sm:$0xff]
    %v760 = vld [vmem:[%s752 + $0x38] sm:$0xff]
    %v761 = vld [vmem:[%s752 + $0x40] sm:$0xff]
    %v762 = vld [vmem:[%s752 + $0x48] sm:$0xff]
    %v763 = vld [vmem:[%s752 + $0x50] sm:$0xff]
    %v764 = vld [vmem:[%s752 + $0x58] sm:$0xff]
    %v765 = vld [vmem:[%s752 + $0x60] sm:$0xff]
    %v766 = vld [vmem:[%s752 + $0x68] sm:$0xff]
    %v767 = vld [vmem:[%s752 + $0x70] sm:$0xff]
    %v768 = vld [vmem:[%s752 + $0x78] sm:$0xff]
    %769 = vmatprep.subr.mxu0 0.0
    %770 = vmatpush1.msra.mxu0 %v753
    %771 = vmatprep.subr.mxu0 0.0
    %772 = vmatpush1.msra.mxu0 %v754
    %773 = vmatprep.subr.mxu0 0.0
    %774 = vmatpush1.msra.mxu0 %v755
    %775 = vmatprep.subr.mxu0 0.0
    %776 = vmatpush1.msra.mxu0 %v756
    %777 = vmatprep.subr.mxu0 0.0
    %778 = vmatpush1.msra.mxu0 %v757
    %779 = vmatprep.subr.mxu0 0.0
    %780 = vmatpush1.msra.mxu0 %v758
    %781 = vmatprep.subr.mxu0 0.0
    %782 = vmatpush1.msra.mxu0 %v759
    %783 = vmatprep.subr.mxu0 0.0
    %784 = vmatpush1.msra.mxu0 %v760
    %785 = vmatprep.subr.mxu0 0.0
    %786 = vmatpush1.msra.mxu0 %v761
    %787 = vmatprep.subr.mxu0 0.0
    %788 = vmatpush1.msra.mxu0 %v762
    %789 = vmatprep.subr.mxu0 0.0
    %790 = vmatpush1.msra.mxu0 %v763
    %791 = vmatprep.subr.mxu0 0.0
    %792 = vmatpush1.msra.mxu0 %v764
    %793 = vmatprep.subr.mxu0 0.0
    %794 = vmatpush1.msra.mxu0 %v765
    %795 = vmatprep.subr.mxu0 0.0
    %796 = vmatpush1.msra.mxu0 %v766
    %797 = vmatprep.subr.mxu0 0.0
    %798 = vmatpush1.msra.mxu0 %v767
    %799 = vmatprep.subr.mxu0 0.0
    %800 = vmatpush1.msra.mxu0 %v768
    %801 = vmatprep.subr.mxu0 0.0
    %802 = vmatpush1.msra.mxu0 0.0
    %803 = vmatprep.subr.mxu0 0.0
    %804 = vmatpush1.msra.mxu0 0.0
    %805 = vmatprep.subr.mxu0 0.0
    %806 = vmatpush1.msra.mxu0 0.0
    %807 = vmatprep.subr.mxu0 0.0
    %808 = vmatpush1.msra.mxu0 0.0
    %809 = vmatprep.subr.mxu0 0.0
    %810 = vmatpush1.msra.mxu0 0.0
    %811 = vmatprep.subr.mxu0 0.0
    %812 = vmatpush1.msra.mxu0 0.0
    %813 = vmatprep.subr.mxu0 0.0
    %814 = vmatpush1.msra.mxu0 0.0
    %815 = vmatprep.subr.mxu0 0.0
    %816 = vmatpush1.msra.mxu0 0.0
    %817 = vmatprep.subr.mxu0 0.0
    %818 = vmatpush1.msra.mxu0 0.0
    %819 = vmatprep.subr.mxu0 0.0
    %820 = vmatpush1.msra.mxu0 0.0
    %821 = vmatprep.subr.mxu0 0.0
    %822 = vmatpush1.msra.mxu0 0.0
    %823 = vmatprep.subr.mxu0 0.0
    %824 = vmatpush1.msra.mxu0 0.0
    %825 = vmatprep.subr.mxu0 0.0
    %826 = vmatpush1.msra.mxu0 0.0
    %827 = vmatprep.subr.mxu0 0.0
    %828 = vmatpush1.msra.mxu0 0.0
    %829 = vmatprep.subr.mxu0 0.0
    %830 = vmatpush1.msra.mxu0 0.0
    %831 = vmatprep.subr.mxu0 0.0
    %832 = vmatpush1.msra.mxu0 0.0
    %833 = vmatprep.mubr.f32.mxu0 0.0
    %834 = vmatmul.mubr.f32.gmra.mrb[0].mxu0 %v750
    %v835 = vpop.f32.mrb[0].mxu0
    %v836 = vadd.f32 0.0, %v835
    %v837 = vpop.f32.mrb[0].mxu0
    %838 = vmatprep.mubr.f32.mxu0 0.0
    %839 = vmatmul.mubr.f32.gmra.mrb[0].mxu0 %v751
    %v840 = vpop.f32.mrb[0].mxu0
    %v841 = vadd.f32 0.0, %v840
    %v842 = vpop.f32.mrb[0].mxu0
    %843 = vdwg.mxu0
    %v844 = vadd.f32 %v644, %v836
    %v845 = vadd.f32 %v645, %v841
    %s846 = scalar_lea.vmem [#allocation8], 5
    %v847 = vld [vmem:[%s846] sm:$0x1]
    %v849 = vlaneseq
    %v850 = vshrl.u32 %v849, 7
    %v851 = vsub.s32 0, %v850
    %v852 = vrot.slane %v847, %v851
    %v854 = vadd.f32 %v844, %v852
    %v855 = vadd.f32 %v845, %v852
    %vm856 = vcmp.ge.f32.partialorder %v854, 0.0
    %vm857 = vcmp.ge.f32.partialorder %v855, 0.0
    %v858 = vmul.f32 %v854, 0.01
    %v859 = vmul.f32 %v855, 0.01
    %v860 = vsel %vm856, %v854, %v858
    %v861 = vsel %vm857, %v855, %v859
    %v862 = vld [vmem:[#allocation10] sm:$0xff]
    %v863 = vld [vmem:[#allocation10 + $0x8] sm:$0xff]
    %v864 = vld [vmem:[#allocation10 + $0x10] sm:$0xff]
    %v865 = vld [vmem:[#allocation10 + $0x18] sm:$0xff]
    %v866 = vld [vmem:[#allocation10 + $0x20] sm:$0xff]
    %v867 = vld [vmem:[#allocation10 + $0x28] sm:$0xff]
    %v868 = vld [vmem:[#allocation10 + $0x30] sm:$0xff]
    %v869 = vld [vmem:[#allocation10 + $0x38] sm:$0xff]
    %v870 = vld [vmem:[#allocation10 + $0x40] sm:$0xff]
    %v871 = vld [vmem:[#allocation10 + $0x48] sm:$0xff]
    %v872 = vld [vmem:[#allocation10 + $0x50] sm:$0xff]
    %v873 = vld [vmem:[#allocation10 + $0x58] sm:$0xff]
    %v874 = vld [vmem:[#allocation10 + $0x60] sm:$0xff]
    %v875 = vld [vmem:[#allocation10 + $0x68] sm:$0xff]
    %v876 = vld [vmem:[#allocation10 + $0x70] sm:$0xff]
    %v877 = vld [vmem:[#allocation10 + $0x78] sm:$0xff]
    %v878 = vld [vmem:[%s6] sm:$0x1]
    %v880 = vlaneseq
    %v881 = vshrl.u32 %v880, 7
    %v882 = vsub.s32 0, %v881
    %v883 = vrot.slane %v878, %v882
    %885 = vmatprep.subr.mxu0 0.0
    %886 = vmatpush1.msra.mxu0 %v862
    %887 = vmatprep.subr.mxu0 0.0
    %888 = vmatpush1.msra.mxu0 %v863
    %889 = vmatprep.subr.mxu0 0.0
    %890 = vmatpush1.msra.mxu0 %v864
    %891 = vmatprep.subr.mxu0 0.0
    %892 = vmatpush1.msra.mxu0 %v865
    %893 = vmatprep.subr.mxu0 0.0
    %894 = vmatpush1.msra.mxu0 %v866
    %895 = vmatprep.subr.mxu0 0.0
    %896 = vmatpush1.msra.mxu0 %v867
    %897 = vmatprep.subr.mxu0 0.0
    %898 = vmatpush1.msra.mxu0 %v868
    %899 = vmatprep.subr.mxu0 0.0
    %900 = vmatpush1.msra.mxu0 %v869
    %901 = vmatprep.subr.mxu0 0.0
    %902 = vmatpush1.msra.mxu0 %v870
    %903 = vmatprep.subr.mxu0 0.0
    %904 = vmatpush1.msra.mxu0 %v871
    %905 = vmatprep.subr.mxu0 0.0
    %906 = vmatpush1.msra.mxu0 %v872
    %907 = vmatprep.subr.mxu0 0.0
    %908 = vmatpush1.msra.mxu0 %v873
    %909 = vmatprep.subr.mxu0 0.0
    %910 = vmatpush1.msra.mxu0 %v874
    %911 = vmatprep.subr.mxu0 0.0
    %912 = vmatpush1.msra.mxu0 %v875
    %913 = vmatprep.subr.mxu0 0.0
    %914 = vmatpush1.msra.mxu0 %v876
    %915 = vmatprep.subr.mxu0 0.0
    %916 = vmatpush1.msra.mxu0 %v877
    %917 = vmatprep.subr.mxu0 0.0
    %918 = vmatpush1.msra.mxu0 0.0
    %919 = vmatprep.subr.mxu0 0.0
    %920 = vmatpush1.msra.mxu0 0.0
    %921 = vmatprep.subr.mxu0 0.0
    %922 = vmatpush1.msra.mxu0 0.0
    %923 = vmatprep.subr.mxu0 0.0
    %924 = vmatpush1.msra.mxu0 0.0
    %925 = vmatprep.subr.mxu0 0.0
    %926 = vmatpush1.msra.mxu0 0.0
    %927 = vmatprep.subr.mxu0 0.0
    %928 = vmatpush1.msra.mxu0 0.0
    %929 = vmatprep.subr.mxu0 0.0
    %930 = vmatpush1.msra.mxu0 0.0
    %931 = vmatprep.subr.mxu0 0.0
    %932 = vmatpush1.msra.mxu0 0.0
    %933 = vmatprep.subr.mxu0 0.0
    %934 = vmatpush1.msra.mxu0 0.0
    %935 = vmatprep.subr.mxu0 0.0
    %936 = vmatpush1.msra.mxu0 0.0
    %937 = vmatprep.subr.mxu0 0.0
    %938 = vmatpush1.msra.mxu0 0.0
    %939 = vmatprep.subr.mxu0 0.0
    %940 = vmatpush1.msra.mxu0 0.0
    %941 = vmatprep.subr.mxu0 0.0
    %942 = vmatpush1.msra.mxu0 0.0
    %943 = vmatprep.subr.mxu0 0.0
    %944 = vmatpush1.msra.mxu0 0.0
    %945 = vmatprep.subr.mxu0 0.0
    %946 = vmatpush1.msra.mxu0 0.0
    %947 = vmatprep.subr.mxu0 0.0
    %948 = vmatpush1.msra.mxu0 0.0
    %949 = vmatprep.mubr.f32.mxu0 0.0
    %950 = vmatmul.mubr.f32.gmra.mrb[0].mxu0 %v860
    %v951 = vpop.f32.mrb[0].mxu0
    %v952 = vadd.f32 %v883, %v951
    %v953 = vpop.f32.mrb[0].mxu0
    %954 = vmatprep.mubr.f32.mxu0 0.0
    %955 = vmatmul.mubr.f32.gmra.mrb[0].mxu0 %v861
    %v956 = vpop.f32.mrb[0].mxu0
    %v957 = vadd.f32 %v883, %v956
    %v958 = vpop.f32.mrb[0].mxu0
    %959 = vdwg.mxu0
    %vm960 = vcmp.ge.f32.partialorder %v952, 0.0
    %vm961 = vcmp.ge.f32.partialorder %v957, 0.0
    %v962 = vmul.f32 %v952, 0.01
    %v963 = vmul.f32 %v957, 0.01
    %v964 = vsel %vm960, %v952, %v962
    %v965 = vsel %vm961, %v957, %v963
    %v966 = vld [vmem:[#allocation11] sm:$0xff]
    %v967 = vld [vmem:[#allocation11 + $0x8] sm:$0xff]
    %v968 = vld [vmem:[#allocation11 + $0x10] sm:$0xff]
    %v969 = vld [vmem:[#allocation11 + $0x18] sm:$0xff]
    %v970 = vld [vmem:[#allocation11 + $0x20] sm:$0xff]
    %v971 = vld [vmem:[#allocation11 + $0x28] sm:$0xff]
    %v972 = vld [vmem:[#allocation11 + $0x30] sm:$0xff]
    %v973 = vld [vmem:[#allocation11 + $0x38] sm:$0xff]
    %v974 = vld [vmem:[#allocation11 + $0x40] sm:$0xff]
    %v975 = vld [vmem:[#allocation11 + $0x48] sm:$0xff]
    %v976 = vld [vmem:[#allocation11 + $0x50] sm:$0xff]
    %v977 = vld [vmem:[#allocation11 + $0x58] sm:$0xff]
    %v978 = vld [vmem:[#allocation11 + $0x60] sm:$0xff]
    %v979 = vld [vmem:[#allocation11 + $0x68] sm:$0xff]
    %v980 = vld [vmem:[#allocation11 + $0x70] sm:$0xff]
    %v981 = vld [vmem:[#allocation11 + $0x78] sm:$0xff]
    %s982 = scalar_lea.vmem [#allocation7], 768
    %v983 = vld [vmem:[%s982] sm:$0xff]
    %v984 = vld [vmem:[%s982 + $0x8] sm:$0xff]
    %v985 = vld [vmem:[%s982 + $0x10] sm:$0xff]
    %v986 = vld [vmem:[%s982 + $0x18] sm:$0xff]
    %v987 = vld [vmem:[%s982 + $0x20] sm:$0xff]
    %v988 = vld [vmem:[%s982 + $0x28] sm:$0xff]
    %v989 = vld [vmem:[%s982 + $0x30] sm:$0xff]
    %v990 = vld [vmem:[%s982 + $0x38] sm:$0xff]
    %v991 = vld [vmem:[%s982 + $0x40] sm:$0xff]
    %v992 = vld [vmem:[%s982 + $0x48] sm:$0xff]
    %v993 = vld [vmem:[%s982 + $0x50] sm:$0xff]
    %v994 = vld [vmem:[%s982 + $0x58] sm:$0xff]
    %v995 = vld [vmem:[%s982 + $0x60] sm:$0xff]
    %v996 = vld [vmem:[%s982 + $0x68] sm:$0xff]
    %v997 = vld [vmem:[%s982 + $0x70] sm:$0xff]
    %v998 = vld [vmem:[%s982 + $0x78] sm:$0xff]
    %s999 = scalar_lea.vmem [#allocation8], 6
    %v1000 = vld [vmem:[%s999] sm:$0x1]
    %v1002 = vlaneseq
    %v1003 = vshrl.u32 %v1002, 7
    %v1004 = vsub.s32 0, %v1003
    %v1005 = vrot.slane %v1000, %v1004
    %1007 = vmatprep.subr.mxu0 0.0
    %1008 = vmatpush1.msra.mxu0 %v983
    %1009 = vmatprep.subr.mxu0 0.0
    %1010 = vmatpush1.msra.mxu0 %v984
    %1011 = vmatprep.subr.mxu0 0.0
    %1012 = vmatpush1.msra.mxu0 %v985
    %1013 = vmatprep.subr.mxu0 0.0
    %1014 = vmatpush1.msra.mxu0 %v986
    %1015 = vmatprep.subr.mxu0 0.0
    %1016 = vmatpush1.msra.mxu0 %v987
    %1017 = vmatprep.subr.mxu0 0.0
    %1018 = vmatpush1.msra.mxu0 %v988
    %1019 = vmatprep.subr.mxu0 0.0
    %1020 = vmatpush1.msra.mxu0 %v989
    %1021 = vmatprep.subr.mxu0 0.0
    %1022 = vmatpush1.msra.mxu0 %v990
    %1023 = vmatprep.subr.mxu0 0.0
    %1024 = vmatpush1.msra.mxu0 %v991
    %1025 = vmatprep.subr.mxu0 0.0
    %1026 = vmatpush1.msra.mxu0 %v992
    %1027 = vmatprep.subr.mxu0 0.0
    %1028 = vmatpush1.msra.mxu0 %v993
    %1029 = vmatprep.subr.mxu0 0.0
    %1030 = vmatpush1.msra.mxu0 %v994
    %1031 = vmatprep.subr.mxu0 0.0
    %1032 = vmatpush1.msra.mxu0 %v995
    %1033 = vmatprep.subr.mxu0 0.0
    %1034 = vmatpush1.msra.mxu0 %v996
    %1035 = vmatprep.subr.mxu0 0.0
    %1036 = vmatpush1.msra.mxu0 %v997
    %1037 = vmatprep.subr.mxu0 0.0
    %1038 = vmatpush1.msra.mxu0 %v998
    %1039 = vmatprep.subr.mxu0 0.0
    %1040 = vmatpush1.msra.mxu0 0.0
    %1041 = vmatprep.subr.mxu0 0.0
    %1042 = vmatpush1.msra.mxu0 0.0
    %1043 = vmatprep.subr.mxu0 0.0
    %1044 = vmatpush1.msra.mxu0 0.0
    %1045 = vmatprep.subr.mxu0 0.0
    %1046 = vmatpush1.msra.mxu0 0.0
    %1047 = vmatprep.subr.mxu0 0.0
    %1048 = vmatpush1.msra.mxu0 0.0
    %1049 = vmatprep.subr.mxu0 0.0
    %1050 = vmatpush1.msra.mxu0 0.0
    %1051 = vmatprep.subr.mxu0 0.0
    %1052 = vmatpush1.msra.mxu0 0.0
    %1053 = vmatprep.subr.mxu0 0.0
    %1054 = vmatpush1.msra.mxu0 0.0
    %1055 = vmatprep.subr.mxu0 0.0
    %1056 = vmatpush1.msra.mxu0 0.0
    %1057 = vmatprep.subr.mxu0 0.0
    %1058 = vmatpush1.msra.mxu0 0.0
    %1059 = vmatprep.subr.mxu0 0.0
    %1060 = vmatpush1.msra.mxu0 0.0
    %1061 = vmatprep.subr.mxu0 0.0
    %1062 = vmatpush1.msra.mxu0 0.0
    %1063 = vmatprep.subr.mxu0 0.0
    %1064 = vmatpush1.msra.mxu0 0.0
    %1065 = vmatprep.subr.mxu0 0.0
    %1066 = vmatpush1.msra.mxu0 0.0
    %1067 = vmatprep.subr.mxu0 0.0
    %1068 = vmatpush1.msra.mxu0 0.0
    %1069 = vmatprep.subr.mxu0 0.0
    %1070 = vmatpush1.msra.mxu0 0.0
    %1071 = vmatprep.mubr.f32.mxu0 0.0
    %1072 = vmatmul.mubr.f32.gmra.mrb[0].mxu0 %v428
    %v1073 = vpop.f32.mrb[0].mxu0
    %v1074 = vadd.f32 %v1005, %v1073
    %v1075 = vpop.f32.mrb[0].mxu0
    %1076 = vmatprep.mubr.f32.mxu0 0.0
    %1077 = vmatmul.mubr.f32.gmra.mrb[0].mxu0 %v429
    %v1078 = vpop.f32.mrb[0].mxu0
    %v1079 = vadd.f32 %v1005, %v1078
    %v1080 = vpop.f32.mrb[0].mxu0
    %1081 = vdwg.mxu0
    %vm1082 = vcmp.ge.f32.partialorder %v1074, 0.0
    %vm1083 = vcmp.ge.f32.partialorder %v1079, 0.0
    %v1084 = vmul.f32 %v1074, 0.01
    %v1085 = vmul.f32 %v1079, 0.01
    %v1086 = vsel %vm1082, %v1074, %v1084
    %v1087 = vsel %vm1083, %v1079, %v1085
    %s1088 = scalar_lea.vmem [#allocation7], 896
    %v1089 = vld [vmem:[%s1088] sm:$0xff]
    %v1090 = vld [vmem:[%s1088 + $0x8] sm:$0xff]
    %v1091 = vld [vmem:[%s1088 + $0x10] sm:$0xff]
    %v1092 = vld [vmem:[%s1088 + $0x18] sm:$0xff]
    %v1093 = vld [vmem:[%s1088 + $0x20] sm:$0xff]
    %v1094 = vld [vmem:[%s1088 + $0x28] sm:$0xff]
    %v1095 = vld [vmem:[%s1088 + $0x30] sm:$0xff]
    %v1096 = vld [vmem:[%s1088 + $0x38] sm:$0xff]
    %v1097 = vld [vmem:[%s1088 + $0x40] sm:$0xff]
    %v1098 = vld [vmem:[%s1088 + $0x48] sm:$0xff]
    %v1099 = vld [vmem:[%s1088 + $0x50] sm:$0xff]
    %v1100 = vld [vmem:[%s1088 + $0x58] sm:$0xff]
    %v1101 = vld [vmem:[%s1088 + $0x60] sm:$0xff]
    %v1102 = vld [vmem:[%s1088 + $0x68] sm:$0xff]
    %v1103 = vld [vmem:[%s1088 + $0x70] sm:$0xff]
    %v1104 = vld [vmem:[%s1088 + $0x78] sm:$0xff]
    %1105 = vmatprep.subr.mxu0 0.0
    %1106 = vmatpush1.msra.mxu0 %v1089
    %1107 = vmatprep.subr.mxu0 0.0
    %1108 = vmatpush1.msra.mxu0 %v1090
    %1109 = vmatprep.subr.mxu0 0.0
    %1110 = vmatpush1.msra.mxu0 %v1091
    %1111 = vmatprep.subr.mxu0 0.0
    %1112 = vmatpush1.msra.mxu0 %v1092
    %1113 = vmatprep.subr.mxu0 0.0
    %1114 = vmatpush1.msra.mxu0 %v1093
    %1115 = vmatprep.subr.mxu0 0.0
    %1116 = vmatpush1.msra.mxu0 %v1094
    %1117 = vmatprep.subr.mxu0 0.0
    %1118 = vmatpush1.msra.mxu0 %v1095
    %1119 = vmatprep.subr.mxu0 0.0
    %1120 = vmatpush1.msra.mxu0 %v1096
    %1121 = vmatprep.subr.mxu0 0.0
    %1122 = vmatpush1.msra.mxu0 %v1097
    %1123 = vmatprep.subr.mxu0 0.0
    %1124 = vmatpush1.msra.mxu0 %v1098
    %1125 = vmatprep.subr.mxu0 0.0
    %1126 = vmatpush1.msra.mxu0 %v1099
    %1127 = vmatprep.subr.mxu0 0.0
    %1128 = vmatpush1.msra.mxu0 %v1100
    %1129 = vmatprep.subr.mxu0 0.0
    %1130 = vmatpush1.msra.mxu0 %v1101
    %1131 = vmatprep.subr.mxu0 0.0
    %1132 = vmatpush1.msra.mxu0 %v1102
    %1133 = vmatprep.subr.mxu0 0.0
    %1134 = vmatpush1.msra.mxu0 %v1103
    %1135 = vmatprep.subr.mxu0 0.0
    %1136 = vmatpush1.msra.mxu0 %v1104
    %1137 = vmatprep.subr.mxu0 0.0
    %1138 = vmatpush1.msra.mxu0 0.0
    %1139 = vmatprep.subr.mxu0 0.0
    %1140 = vmatpush1.msra.mxu0 0.0
    %1141 = vmatprep.subr.mxu0 0.0
    %1142 = vmatpush1.msra.mxu0 0.0
    %1143 = vmatprep.subr.mxu0 0.0
    %1144 = vmatpush1.msra.mxu0 0.0
    %1145 = vmatprep.subr.mxu0 0.0
    %1146 = vmatpush1.msra.mxu0 0.0
    %1147 = vmatprep.subr.mxu0 0.0
    %1148 = vmatpush1.msra.mxu0 0.0
    %1149 = vmatprep.subr.mxu0 0.0
    %1150 = vmatpush1.msra.mxu0 0.0
    %1151 = vmatprep.subr.mxu0 0.0
    %1152 = vmatpush1.msra.mxu0 0.0
    %1153 = vmatprep.subr.mxu0 0.0
    %1154 = vmatpush1.msra.mxu0 0.0
    %1155 = vmatprep.subr.mxu0 0.0
    %1156 = vmatpush1.msra.mxu0 0.0
    %1157 = vmatprep.subr.mxu0 0.0
    %1158 = vmatpush1.msra.mxu0 0.0
    %1159 = vmatprep.subr.mxu0 0.0
    %1160 = vmatpush1.msra.mxu0 0.0
    %1161 = vmatprep.subr.mxu0 0.0
    %1162 = vmatpush1.msra.mxu0 0.0
    %1163 = vmatprep.subr.mxu0 0.0
    %1164 = vmatpush1.msra.mxu0 0.0
    %1165 = vmatprep.subr.mxu0 0.0
    %1166 = vmatpush1.msra.mxu0 0.0
    %1167 = vmatprep.subr.mxu0 0.0
    %1168 = vmatpush1.msra.mxu0 0.0
    %1169 = vmatprep.mubr.f32.mxu0 0.0
    %1170 = vmatmul.mubr.f32.gmra.mrb[0].mxu0 %v1086
    %v1171 = vpop.f32.mrb[0].mxu0
    %v1172 = vadd.f32 0.0, %v1171
    %v1173 = vpop.f32.mrb[0].mxu0
    %1174 = vmatprep.mubr.f32.mxu0 0.0
    %1175 = vmatmul.mubr.f32.gmra.mrb[0].mxu0 %v1087
    %v1176 = vpop.f32.mrb[0].mxu0
    %v1177 = vadd.f32 0.0, %v1176
    %v1178 = vpop.f32.mrb[0].mxu0
    %1179 = vdwg.mxu0
    %v1180 = vadd.f32 %v428, %v1172
    %v1181 = vadd.f32 %v429, %v1177
    %s1182 = scalar_lea.vmem [#allocation8], 7
    %v1183 = vld [vmem:[%s1182] sm:$0x1]
    %v1185 = vlaneseq
    %v1186 = vshrl.u32 %v1185, 7
    %v1187 = vsub.s32 0, %v1186
    %v1188 = vrot.slane %v1183, %v1187
    %v1190 = vadd.f32 %v1180, %v1188
    %v1191 = vadd.f32 %v1181, %v1188
    %vm1192 = vcmp.ge.f32.partialorder %v1190, 0.0
    %vm1193 = vcmp.ge.f32.partialorder %v1191, 0.0
    %v1194 = vmul.f32 %v1190, 0.01
    %v1195 = vmul.f32 %v1191, 0.01
    %v1196 = vsel %vm1192, %v1190, %v1194
    %v1197 = vsel %vm1193, %v1191, %v1195
    %s1198 = scalar_lea.vmem [#allocation7], 1024
    %v1199 = vld [vmem:[%s1198] sm:$0xff]
    %v1200 = vld [vmem:[%s1198 + $0x8] sm:$0xff]
    %v1201 = vld [vmem:[%s1198 + $0x10] sm:$0xff]
    %v1202 = vld [vmem:[%s1198 + $0x18] sm:$0xff]
    %v1203 = vld [vmem:[%s1198 + $0x20] sm:$0xff]
    %v1204 = vld [vmem:[%s1198 + $0x28] sm:$0xff]
    %v1205 = vld [vmem:[%s1198 + $0x30] sm:$0xff]
    %v1206 = vld [vmem:[%s1198 + $0x38] sm:$0xff]
    %v1207 = vld [vmem:[%s1198 + $0x40] sm:$0xff]
    %v1208 = vld [vmem:[%s1198 + $0x48] sm:$0xff]
    %v1209 = vld [vmem:[%s1198 + $0x50] sm:$0xff]
    %v1210 = vld [vmem:[%s1198 + $0x58] sm:$0xff]
    %v1211 = vld [vmem:[%s1198 + $0x60] sm:$0xff]
    %v1212 = vld [vmem:[%s1198 + $0x68] sm:$0xff]
    %v1213 = vld [vmem:[%s1198 + $0x70] sm:$0xff]
    %v1214 = vld [vmem:[%s1198 + $0x78] sm:$0xff]
    %s1215 = scalar_lea.vmem [#allocation8], 8
    %v1216 = vld [vmem:[%s1215] sm:$0x1]
    %v1218 = vlaneseq
    %v1219 = vshrl.u32 %v1218, 7
    %v1220 = vsub.s32 0, %v1219
    %v1221 = vrot.slane %v1216, %v1220
    %1223 = vmatprep.subr.mxu0 0.0
    %1224 = vmatpush1.msra.mxu0 %v1199
    %1225 = vmatprep.subr.mxu0 0.0
    %1226 = vmatpush1.msra.mxu0 %v1200
    %1227 = vmatprep.subr.mxu0 0.0
    %1228 = vmatpush1.msra.mxu0 %v1201
    %1229 = vmatprep.subr.mxu0 0.0
    %1230 = vmatpush1.msra.mxu0 %v1202
    %1231 = vmatprep.subr.mxu0 0.0
    %1232 = vmatpush1.msra.mxu0 %v1203
    %1233 = vmatprep.subr.mxu0 0.0
    %1234 = vmatpush1.msra.mxu0 %v1204
    %1235 = vmatprep.subr.mxu0 0.0
    %1236 = vmatpush1.msra.mxu0 %v1205
    %1237 = vmatprep.subr.mxu0 0.0
    %1238 = vmatpush1.msra.mxu0 %v1206
    %1239 = vmatprep.subr.mxu0 0.0
    %1240 = vmatpush1.msra.mxu0 %v1207
    %1241 = vmatprep.subr.mxu0 0.0
    %1242 = vmatpush1.msra.mxu0 %v1208
    %1243 = vmatprep.subr.mxu0 0.0
    %1244 = vmatpush1.msra.mxu0 %v1209
    %1245 = vmatprep.subr.mxu0 0.0
    %1246 = vmatpush1.msra.mxu0 %v1210
    %1247 = vmatprep.subr.mxu0 0.0
    %1248 = vmatpush1.msra.mxu0 %v1211
    %1249 = vmatprep.subr.mxu0 0.0
    %1250 = vmatpush1.msra.mxu0 %v1212
    %1251 = vmatprep.subr.mxu0 0.0
    %1252 = vmatpush1.msra.mxu0 %v1213
    %1253 = vmatprep.subr.mxu0 0.0
    %1254 = vmatpush1.msra.mxu0 %v1214
    %1255 = vmatprep.subr.mxu0 0.0
    %1256 = vmatpush1.msra.mxu0 0.0
    %1257 = vmatprep.subr.mxu0 0.0
    %1258 = vmatpush1.msra.mxu0 0.0
    %1259 = vmatprep.subr.mxu0 0.0
    %1260 = vmatpush1.msra.mxu0 0.0
    %1261 = vmatprep.subr.mxu0 0.0
    %1262 = vmatpush1.msra.mxu0 0.0
    %1263 = vmatprep.subr.mxu0 0.0
    %1264 = vmatpush1.msra.mxu0 0.0
    %1265 = vmatprep.subr.mxu0 0.0
    %1266 = vmatpush1.msra.mxu0 0.0
    %1267 = vmatprep.subr.mxu0 0.0
    %1268 = vmatpush1.msra.mxu0 0.0
    %1269 = vmatprep.subr.mxu0 0.0
    %1270 = vmatpush1.msra.mxu0 0.0
    %1271 = vmatprep.subr.mxu0 0.0
    %1272 = vmatpush1.msra.mxu0 0.0
    %1273 = vmatprep.subr.mxu0 0.0
    %1274 = vmatpush1.msra.mxu0 0.0
    %1275 = vmatprep.subr.mxu0 0.0
    %1276 = vmatpush1.msra.mxu0 0.0
    %1277 = vmatprep.subr.mxu0 0.0
    %1278 = vmatpush1.msra.mxu0 0.0
    %1279 = vmatprep.subr.mxu0 0.0
    %1280 = vmatpush1.msra.mxu0 0.0
    %1281 = vmatprep.subr.mxu0 0.0
    %1282 = vmatpush1.msra.mxu0 0.0
    %1283 = vmatprep.subr.mxu0 0.0
    %1284 = vmatpush1.msra.mxu0 0.0
    %1285 = vmatprep.subr.mxu0 0.0
    %1286 = vmatpush1.msra.mxu0 0.0
    %1287 = vmatprep.mubr.f32.mxu0 0.0
    %1288 = vmatmul.mubr.f32.gmra.mrb[0].mxu0 %v1196
    %v1289 = vpop.f32.mrb[0].mxu0
    %v1290 = vadd.f32 %v1221, %v1289
    %v1291 = vpop.f32.mrb[0].mxu0
    %1292 = vmatprep.mubr.f32.mxu0 0.0
    %1293 = vmatmul.mubr.f32.gmra.mrb[0].mxu0 %v1197
    %v1294 = vpop.f32.mrb[0].mxu0
    %v1295 = vadd.f32 %v1221, %v1294
    %v1296 = vpop.f32.mrb[0].mxu0
    %1297 = vdwg.mxu0
    %vm1298 = vcmp.ge.f32.partialorder %v1290, 0.0
    %vm1299 = vcmp.ge.f32.partialorder %v1295, 0.0
    %v1300 = vmul.f32 %v1290, 0.01
    %v1301 = vmul.f32 %v1295, 0.01
    %v1302 = vsel %vm1298, %v1290, %v1300
    %v1303 = vsel %vm1299, %v1295, %v1301
    %s1304 = scalar_lea.vmem [#allocation7], 1152
    %v1305 = vld [vmem:[%s1304] sm:$0xff]
    %v1306 = vld [vmem:[%s1304 + $0x8] sm:$0xff]
    %v1307 = vld [vmem:[%s1304 + $0x10] sm:$0xff]
    %v1308 = vld [vmem:[%s1304 + $0x18] sm:$0xff]
    %v1309 = vld [vmem:[%s1304 + $0x20] sm:$0xff]
    %v1310 = vld [vmem:[%s1304 + $0x28] sm:$0xff]
    %v1311 = vld [vmem:[%s1304 + $0x30] sm:$0xff]
    %v1312 = vld [vmem:[%s1304 + $0x38] sm:$0xff]
    %v1313 = vld [vmem:[%s1304 + $0x40] sm:$0xff]
    %v1314 = vld [vmem:[%s1304 + $0x48] sm:$0xff]
    %v1315 = vld [vmem:[%s1304 + $0x50] sm:$0xff]
    %v1316 = vld [vmem:[%s1304 + $0x58] sm:$0xff]
    %v1317 = vld [vmem:[%s1304 + $0x60] sm:$0xff]
    %v1318 = vld [vmem:[%s1304 + $0x68] sm:$0xff]
    %v1319 = vld [vmem:[%s1304 + $0x70] sm:$0xff]
    %v1320 = vld [vmem:[%s1304 + $0x78] sm:$0xff]
    %1321 = vmatprep.subr.mxu0 0.0
    %1322 = vmatpush1.msra.mxu0 %v1305
    %1323 = vmatprep.subr.mxu0 0.0
    %1324 = vmatpush1.msra.mxu0 %v1306
    %1325 = vmatprep.subr.mxu0 0.0
    %1326 = vmatpush1.msra.mxu0 %v1307
    %1327 = vmatprep.subr.mxu0 0.0
    %1328 = vmatpush1.msra.mxu0 %v1308
    %1329 = vmatprep.subr.mxu0 0.0
    %1330 = vmatpush1.msra.mxu0 %v1309
    %1331 = vmatprep.subr.mxu0 0.0
    %1332 = vmatpush1.msra.mxu0 %v1310
    %1333 = vmatprep.subr.mxu0 0.0
    %1334 = vmatpush1.msra.mxu0 %v1311
    %1335 = vmatprep.subr.mxu0 0.0
    %1336 = vmatpush1.msra.mxu0 %v1312
    %1337 = vmatprep.subr.mxu0 0.0
    %1338 = vmatpush1.msra.mxu0 %v1313
    %1339 = vmatprep.subr.mxu0 0.0
    %1340 = vmatpush1.msra.mxu0 %v1314
    %1341 = vmatprep.subr.mxu0 0.0
    %1342 = vmatpush1.msra.mxu0 %v1315
    %1343 = vmatprep.subr.mxu0 0.0
    %1344 = vmatpush1.msra.mxu0 %v1316
    %1345 = vmatprep.subr.mxu0 0.0
    %1346 = vmatpush1.msra.mxu0 %v1317
    %1347 = vmatprep.subr.mxu0 0.0
    %1348 = vmatpush1.msra.mxu0 %v1318
    %1349 = vmatprep.subr.mxu0 0.0
    %1350 = vmatpush1.msra.mxu0 %v1319
    %1351 = vmatprep.subr.mxu0 0.0
    %1352 = vmatpush1.msra.mxu0 %v1320
    %1353 = vmatprep.subr.mxu0 0.0
    %1354 = vmatpush1.msra.mxu0 0.0
    %1355 = vmatprep.subr.mxu0 0.0
    %1356 = vmatpush1.msra.mxu0 0.0
    %1357 = vmatprep.subr.mxu0 0.0
    %1358 = vmatpush1.msra.mxu0 0.0
    %1359 = vmatprep.subr.mxu0 0.0
    %1360 = vmatpush1.msra.mxu0 0.0
    %1361 = vmatprep.subr.mxu0 0.0
    %1362 = vmatpush1.msra.mxu0 0.0
    %1363 = vmatprep.subr.mxu0 0.0
    %1364 = vmatpush1.msra.mxu0 0.0
    %1365 = vmatprep.subr.mxu0 0.0
    %1366 = vmatpush1.msra.mxu0 0.0
    %1367 = vmatprep.subr.mxu0 0.0
    %1368 = vmatpush1.msra.mxu0 0.0
    %1369 = vmatprep.subr.mxu0 0.0
    %1370 = vmatpush1.msra.mxu0 0.0
    %1371 = vmatprep.subr.mxu0 0.0
    %1372 = vmatpush1.msra.mxu0 0.0
    %1373 = vmatprep.subr.mxu0 0.0
    %1374 = vmatpush1.msra.mxu0 0.0
    %1375 = vmatprep.subr.mxu0 0.0
    %1376 = vmatpush1.msra.mxu0 0.0
    %1377 = vmatprep.subr.mxu0 0.0
    %1378 = vmatpush1.msra.mxu0 0.0
    %1379 = vmatprep.subr.mxu0 0.0
    %1380 = vmatpush1.msra.mxu0 0.0
    %1381 = vmatprep.subr.mxu0 0.0
    %1382 = vmatpush1.msra.mxu0 0.0
    %1383 = vmatprep.subr.mxu0 0.0
    %1384 = vmatpush1.msra.mxu0 0.0
    %1385 = vmatprep.mubr.f32.mxu0 0.0
    %1386 = vmatmul.mubr.f32.gmra.mrb[0].mxu0 %v1302
    %v1387 = vpop.f32.mrb[0].mxu0
    %v1388 = vadd.f32 0.0, %v1387
    %v1389 = vpop.f32.mrb[0].mxu0
    %1390 = vmatprep.mubr.f32.mxu0 0.0
    %1391 = vmatmul.mubr.f32.gmra.mrb[0].mxu0 %v1303
    %v1392 = vpop.f32.mrb[0].mxu0
    %v1393 = vadd.f32 0.0, %v1392
    %v1394 = vpop.f32.mrb[0].mxu0
    %1395 = vdwg.mxu0
    %v1396 = vadd.f32 %v1196, %v1388
    %v1397 = vadd.f32 %v1197, %v1393
    %s1398 = scalar_lea.vmem [#allocation8], 9
    %v1399 = vld [vmem:[%s1398] sm:$0x1]
    %v1401 = vlaneseq
    %v1402 = vshrl.u32 %v1401, 7
    %v1403 = vsub.s32 0, %v1402
    %v1404 = vrot.slane %v1399, %v1403
    %v1406 = vadd.f32 %v1396, %v1404
    %v1407 = vadd.f32 %v1397, %v1404
    %vm1408 = vcmp.ge.f32.partialorder %v1406, 0.0
    %vm1409 = vcmp.ge.f32.partialorder %v1407, 0.0
    %v1410 = vmul.f32 %v1406, 0.01
    %v1411 = vmul.f32 %v1407, 0.01
    %v1412 = vsel %vm1408, %v1406, %v1410
    %v1413 = vsel %vm1409, %v1407, %v1411
    %s1414 = scalar_lea.vmem [#allocation11], 128
    %v1415 = vld [vmem:[%s1414] sm:$0xff]
    %v1416 = vld [vmem:[%s1414 + $0x8] sm:$0xff]
    %v1417 = vld [vmem:[%s1414 + $0x10] sm:$0xff]
    %v1418 = vld [vmem:[%s1414 + $0x18] sm:$0xff]
    %v1419 = vld [vmem:[%s1414 + $0x20] sm:$0xff]
    %v1420 = vld [vmem:[%s1414 + $0x28] sm:$0xff]
    %v1421 = vld [vmem:[%s1414 + $0x30] sm:$0xff]
    %v1422 = vld [vmem:[%s1414 + $0x38] sm:$0xff]
    %v1423 = vld [vmem:[%s1414 + $0x40] sm:$0xff]
    %v1424 = vld [vmem:[%s1414 + $0x48] sm:$0xff]
    %v1425 = vld [vmem:[%s1414 + $0x50] sm:$0xff]
    %v1426 = vld [vmem:[%s1414 + $0x58] sm:$0xff]
    %v1427 = vld [vmem:[%s1414 + $0x60] sm:$0xff]
    %v1428 = vld [vmem:[%s1414 + $0x68] sm:$0xff]
    %v1429 = vld [vmem:[%s1414 + $0x70] sm:$0xff]
    %v1430 = vld [vmem:[%s1414 + $0x78] sm:$0xff]
    %1431 = vmatprep.subr.mxu0 0.0
    %1432 = vmatpush1.msra.mxu0 %v1415
    %1433 = vmatprep.subr.mxu0 0.0
    %1434 = vmatpush1.msra.mxu0 %v1416
    %1435 = vmatprep.subr.mxu0 0.0
    %1436 = vmatpush1.msra.mxu0 %v1417
    %1437 = vmatprep.subr.mxu0 0.0
    %1438 = vmatpush1.msra.mxu0 %v1418
    %1439 = vmatprep.subr.mxu0 0.0
    %1440 = vmatpush1.msra.mxu0 %v1419
    %1441 = vmatprep.subr.mxu0 0.0
    %1442 = vmatpush1.msra.mxu0 %v1420
    %1443 = vmatprep.subr.mxu0 0.0
    %1444 = vmatpush1.msra.mxu0 %v1421
    %1445 = vmatprep.subr.mxu0 0.0
    %1446 = vmatpush1.msra.mxu0 %v1422
    %1447 = vmatprep.subr.mxu0 0.0
    %1448 = vmatpush1.msra.mxu0 %v1423
    %1449 = vmatprep.subr.mxu0 0.0
    %1450 = vmatpush1.msra.mxu0 %v1424
    %1451 = vmatprep.subr.mxu0 0.0
    %1452 = vmatpush1.msra.mxu0 %v1425
    %1453 = vmatprep.subr.mxu0 0.0
    %1454 = vmatpush1.msra.mxu0 %v1426
    %1455 = vmatprep.subr.mxu0 0.0
    %1456 = vmatpush1.msra.mxu0 %v1427
    %1457 = vmatprep.subr.mxu0 0.0
    %1458 = vmatpush1.msra.mxu0 %v1428
    %1459 = vmatprep.subr.mxu0 0.0
    %1460 = vmatpush1.msra.mxu0 %v1429
    %1461 = vmatprep.subr.mxu0 0.0
    %1462 = vmatpush1.msra.mxu0 %v1430
    %1463 = vmatprep.subr.mxu0 0.0
    %1464 = vmatpush1.msra.mxu0 0.0
    %1465 = vmatprep.subr.mxu0 0.0
    %1466 = vmatpush1.msra.mxu0 0.0
    %1467 = vmatprep.subr.mxu0 0.0
    %1468 = vmatpush1.msra.mxu0 0.0
    %1469 = vmatprep.subr.mxu0 0.0
    %1470 = vmatpush1.msra.mxu0 0.0
    %1471 = vmatprep.subr.mxu0 0.0
    %1472 = vmatpush1.msra.mxu0 0.0
    %1473 = vmatprep.subr.mxu0 0.0
    %1474 = vmatpush1.msra.mxu0 0.0
    %1475 = vmatprep.subr.mxu0 0.0
    %1476 = vmatpush1.msra.mxu0 0.0
    %1477 = vmatprep.subr.mxu0 0.0
    %1478 = vmatpush1.msra.mxu0 0.0
    %1479 = vmatprep.subr.mxu0 0.0
    %1480 = vmatpush1.msra.mxu0 0.0
    %1481 = vmatprep.subr.mxu0 0.0
    %1482 = vmatpush1.msra.mxu0 0.0
    %1483 = vmatprep.subr.mxu0 0.0
    %1484 = vmatpush1.msra.mxu0 0.0
    %1485 = vmatprep.subr.mxu0 0.0
    %1486 = vmatpush1.msra.mxu0 0.0
    %1487 = vmatprep.subr.mxu0 0.0
    %1488 = vmatpush1.msra.mxu0 0.0
    %1489 = vmatprep.subr.mxu0 0.0
    %1490 = vmatpush1.msra.mxu0 0.0
    %1491 = vmatprep.subr.mxu0 0.0
    %1492 = vmatpush1.msra.mxu0 0.0
    %1493 = vmatprep.subr.mxu0 0.0
    %1494 = vmatpush1.msra.mxu0 0.0
    %1495 = vmatprep.mubr.f32.mxu0 0.0
    %1496 = vmatmul.mubr.f32.gmra.mrb[0].mxu0 %v1412
    %v1497 = vpop.f32.mrb[0].mxu0
    %v1498 = vadd.f32 0.0, %v1497
    %v1499 = vpop.f32.mrb[0].mxu0
    %1500 = vmatprep.mubr.f32.mxu0 0.0
    %1501 = vmatmul.mubr.f32.gmra.mrb[0].mxu0 %v1413
    %v1502 = vpop.f32.mrb[0].mxu0
    %v1503 = vadd.f32 0.0, %v1502
    %v1504 = vpop.f32.mrb[0].mxu0
    %1505 = vdwg.mxu0
    %1506 = vmatprep.subr.mxu0 0.0
    %1507 = vmatpush1.msra.mxu0 %v966
    %1508 = vmatprep.subr.mxu0 0.0
    %1509 = vmatpush1.msra.mxu0 %v967
    %1510 = vmatprep.subr.mxu0 0.0
    %1511 = vmatpush1.msra.mxu0 %v968
    %1512 = vmatprep.subr.mxu0 0.0
    %1513 = vmatpush1.msra.mxu0 %v969
    %1514 = vmatprep.subr.mxu0 0.0
    %1515 = vmatpush1.msra.mxu0 %v970
    %1516 = vmatprep.subr.mxu0 0.0
    %1517 = vmatpush1.msra.mxu0 %v971
    %1518 = vmatprep.subr.mxu0 0.0
    %1519 = vmatpush1.msra.mxu0 %v972
    %1520 = vmatprep.subr.mxu0 0.0
    %1521 = vmatpush1.msra.mxu0 %v973
    %1522 = vmatprep.subr.mxu0 0.0
    %1523 = vmatpush1.msra.mxu0 %v974
    %1524 = vmatprep.subr.mxu0 0.0
    %1525 = vmatpush1.msra.mxu0 %v975
    %1526 = vmatprep.subr.mxu0 0.0
    %1527 = vmatpush1.msra.mxu0 %v976
    %1528 = vmatprep.subr.mxu0 0.0
    %1529 = vmatpush1.msra.mxu0 %v977
    %1530 = vmatprep.subr.mxu0 0.0
    %1531 = vmatpush1.msra.mxu0 %v978
    %1532 = vmatprep.subr.mxu0 0.0
    %1533 = vmatpush1.msra.mxu0 %v979
    %1534 = vmatprep.subr.mxu0 0.0
    %1535 = vmatpush1.msra.mxu0 %v980
    %1536 = vmatprep.subr.mxu0 0.0
    %1537 = vmatpush1.msra.mxu0 %v981
    %1538 = vmatprep.subr.mxu0 0.0
    %1539 = vmatpush1.msra.mxu0 0.0
    %1540 = vmatprep.subr.mxu0 0.0
    %1541 = vmatpush1.msra.mxu0 0.0
    %1542 = vmatprep.subr.mxu0 0.0
    %1543 = vmatpush1.msra.mxu0 0.0
    %1544 = vmatprep.subr.mxu0 0.0
    %1545 = vmatpush1.msra.mxu0 0.0
    %1546 = vmatprep.subr.mxu0 0.0
    %1547 = vmatpush1.msra.mxu0 0.0
    %1548 = vmatprep.subr.mxu0 0.0
    %1549 = vmatpush1.msra.mxu0 0.0
    %1550 = vmatprep.subr.mxu0 0.0
    %1551 = vmatpush1.msra.mxu0 0.0
    %1552 = vmatprep.subr.mxu0 0.0
    %1553 = vmatpush1.msra.mxu0 0.0
    %1554 = vmatprep.subr.mxu0 0.0
    %1555 = vmatpush1.msra.mxu0 0.0
    %1556 = vmatprep.subr.mxu0 0.0
    %1557 = vmatpush1.msra.mxu0 0.0
    %1558 = vmatprep.subr.mxu0 0.0
    %1559 = vmatpush1.msra.mxu0 0.0
    %1560 = vmatprep.subr.mxu0 0.0
    %1561 = vmatpush1.msra.mxu0 0.0
    %1562 = vmatprep.subr.mxu0 0.0
    %1563 = vmatpush1.msra.mxu0 0.0
    %1564 = vmatprep.subr.mxu0 0.0
    %1565 = vmatpush1.msra.mxu0 0.0
    %1566 = vmatprep.subr.mxu0 0.0
    %1567 = vmatpush1.msra.mxu0 0.0
    %1568 = vmatprep.subr.mxu0 0.0
    %1569 = vmatpush1.msra.mxu0 0.0
    %1570 = vmatprep.mubr.f32.mxu0 0.0
    %1571 = vmatmul.mubr.f32.gmra.mrb[0].mxu0 %v964
    %v1572 = vpop.f32.mrb[0].mxu0
    %v1573 = vadd.f32 %v1498, %v1572
    %v1574 = vpop.f32.mrb[0].mxu0
    %1575 = vmatprep.mubr.f32.mxu0 0.0
    %1576 = vmatmul.mubr.f32.gmra.mrb[0].mxu0 %v965
    %v1577 = vpop.f32.mrb[0].mxu0
    %v1578 = vadd.f32 %v1503, %v1577
    %v1579 = vpop.f32.mrb[0].mxu0
    %1580 = vdwg.mxu0
    %v1581 = vld [vmem:[%s8] sm:$0x1]
    %v1583 = vlaneseq
    %v1584 = vshrl.u32 %v1583, 7
    %v1585 = vsub.s32 0, %v1584
    %v1586 = vrot.slane %v1581, %v1585
    %v1588 = vadd.f32 %v1573, %v1586
    %v1589 = vadd.f32 %v1578, %v1586
    %1590 = vst [vmem:[#allocation13] sm:$0xff] %v1588
    %1591 = vst [vmem:[#allocation13 + $0x8] sm:$0xff] %v1589
    // Predicated region
    $region62: #{regression_forward.1} parent=1 // pred_check
      _
    $region63: #{regression_forward.1} parent=1 // pred_check_branch
      %1593 = sbr.rel (0) target = $region65
    $region64: #{regression_forward.1} parent=1 // pred_region
      %s1595 = ssub.s32 256, 256
      %1596 = vsyncadd [#allocation4], %s1595
      %s1597 = sshll.u32 [#allocation13], 4
      %s1598 = int_to_ptr.vmem [resolvable:$true] %s1597
      %1603 = dma.vmem_to_hbm [thread:$0]  %s1598, 256, %s9, [#allocation4], 128, 128, 8
    $region65: #{regression_forward.1} parent=1 // pred_fallthru
      _
    // Predicated region
    $region66: #{regression_forward.1} parent=1 // pred_check
      _
    $region67: #{regression_forward.1} parent=1 // pred_check_branch
      %1605 = sbr.rel (0) target = $region69
    $region68: #{regression_forward.1} parent=1 // pred_region
      %1606 = dma.done [#allocation4], 256
    $region69: #{regression_forward.1} parent=1 // pred_fallthru
      _
    %1607 = vsyncpa [#allocation3], 1
    %1608 = vsyncpa [#allocation6], 1
    %1609 = vsyncpa [#allocation9], 1
    %1610 = vsyncpa [#allocation12], 1
    %1611 = vsyncpa [#allocation4], 1

// kernel: regression_forward.1
$region0: #{regression_forward.1}
  #allocation0 [shape = 'u32[]', space=smem, size = 0x4, offset = 0x4, fixed_abs, tag = 'smem constant byte address 0x4 - core index']
  #allocation1 [shape = 'u32[144,128]{1,0:T(1,128)}', space=vmem, size = 0x12000, scoped, tag = 'internal scratch']
  %s0 = inlined_call_operand.hbm [shape: f32[16,32], index: 0, kind: input, shape index: {}]
  %s1 = inlined_call_operand.hbm [shape: f32[32,128], index: 1, kind: input, shape index: {}]
  %s2 = inlined_call_operand.vmem [shape: f32[1,128], index: 2, kind: input, shape index: {}]
  %s3 = inlined_call_operand.hbm [shape: f32[5,2,128,128], index: 3, kind: input, shape index: {}]
  %s4 = inlined_call_operand.hbm [shape: f32[5,2,1,128], index: 4, kind: input, shape index: {}]
  %s5 = inlined_call_operand.hbm [shape: f32[128,128], index: 5, kind: input, shape index: {}]
  %s6 = inlined_call_operand.vmem [shape: f32[1,128], index: 6, kind: input, shape index: {}]
  %s7 = inlined_call_operand.hbm [shape: f32[2,128,128], index: 7, kind: input, shape index: {}]
  %s8 = inlined_call_operand.vmem [shape: f32[1,128], index: 8, kind: input, shape index: {}]
  %s9 = inlined_call_operand.hbm [shape: f32[16,128], index: 9, kind: output, shape index: {}]
  %s10 = sld [smem:[#allocation0]]
  $region70: #{regression_forward.1} parent=0
    _
  %s12 = ssub.s32 1, %s10
  %s13 = scalar_select 0, %s12, %s10
  $region1: #{regression_forward.1} parent=0
    #allocation2 [shape = 'u8[8192]{0}', space=vmem, size = 0x2000, scoped, tag = 'input window, operand 0, single buffered']
    #allocation3 [shape = 's32[1]{0}', space=sflag, size = 0x4, scoped, tag = 'scoped memory for regression_forward.1']
    #allocation4 [shape = 's32[1]{0}', space=sflag, size = 0x4, scoped, tag = 'scoped memory for regression_forward.1']
    #allocation5 [shape = 'u8[16384]{0}', space=vmem, size = 0x4000, scoped, tag = 'input window, operand 1, single buffered']
    #allocation6 [shape = 's32[1]{0}', space=sflag, size = 0x4, scoped, tag = 'scoped memory for regression_forward.1']
    #allocation7 [shape = 'u8[655360]{0}', space=vmem, size = 0xa0000, scoped, tag = 'input window, operand 3, single buffered']
    #allocation8 [shape = 'u8[5120]{0}', space=vmem, size = 0x1400, scoped, tag = 'input window, operand 4, single buffered']
    #allocation9 [shape = 's32[1]{0}', space=sflag, size = 0x4, scoped, tag = 'scoped memory for regression_forward.1']
    #allocation10 [shape = 'u8[65536]{0}', space=vmem, size = 0x10000, scoped, tag = 'input window, operand 5, single buffered']
    #allocation11 [shape = 'u8[131072]{0}', space=vmem, size = 0x20000, scoped, tag = 'input window, operand 7, single buffered']
    #allocation12 [shape = 's32[1]{0}', space=sflag, size = 0x4, scoped, tag = 'scoped memory for regression_forward.1']
    #allocation13 [shape = 'u8[8192]{0}', space=vmem, size = 0x2000, scoped, tag = 'output window, operand 0, single buffered']
    %14 = vsyncpa [#allocation3], 0
    %15 = vsyncpa [#allocation6], 0
    %16 = vsyncpa [#allocation9], 0
    %17 = vsyncpa [#allocation12], 0
    %18 = vsyncpa [#allocation4], 0
    // Predicated region
    $region2: #{regression_forward.1} parent=1 // pred_check
      _
    $region3: #{regression_forward.1} parent=1 // pred_check_branch
      %20 = sbr.rel (0) target = $region5
    $region4: #{regression_forward.1} parent=1 // pred_region
      %s22 = ssub.s32 256, 256
      %23 = vsyncadd [#allocation3], %s22
      %s24 = sshll.u32 [#allocation2], 4
      %s25 = int_to_ptr.vmem [resolvable:$true] %s24
      %30 = dma.hbm_to_vmem [thread:$0]  %s0, 256, %s25, [#allocation3], 128, 128, 8
    $region5: #{regression_forward.1} parent=1 // pred_fallthru
      _
    // Predicated region
    $region6: #{regression_forward.1} parent=1 // pred_check
      _
    $region7: #{regression_forward.1} parent=1 // pred_check_branch
      %32 = sbr.rel (0) target = $region9
    $region8: #{regression_forward.1} parent=1 // pred_region
      %s34 = ssub.s32 512, 512
      %35 = vsyncadd [#allocation6], %s34
      %s36 = sshll.u32 [#allocation5], 4
      %s37 = int_to_ptr.vmem [resolvable:$true] %s36
      %42 = dma.hbm_to_vmem [thread:$0]  %s1, 512, %s37, [#allocation6], 128, 128, 8
    $region9: #{regression_forward.1} parent=1 // pred_fallthru
      _
    // Predicated region
    $region10: #{regression_forward.1} parent=1 // pred_check
      _
    $region11: #{regression_forward.1} parent=1 // pred_check_branch
      %44 = sbr.rel (0) target = $region13
    $region12: #{regression_forward.1} parent=1 // pred_region
      _
    $region13: #{regression_forward.1} parent=1 // pred_fallthru
      _
    // Predicated region
    $region14: #{regression_forward.1} parent=1 // pred_check
      _
    $region15: #{regression_forward.1} parent=1 // pred_check_branch
      %46 = sbr.rel (0) target = $region17
    $region16: #{regression_forward.1} parent=1 // pred_region
      %s48 = ssub.s32 20480, 20480
      %49 = vsyncadd [#allocation6], %s48
      %s50 = sshll.u32 [#allocation7], 4
      %s51 = int_to_ptr.vmem [resolvable:$true] %s50
      %56 = dma.hbm_to_vmem [thread:$0]  %s3, 20480, %s51, [#allocation6], 128, 128, 8
    $region17: #{regression_forward.1} parent=1 // pred_fallthru
      _
    // Predicated region
    $region18: #{regression_forward.1} parent=1 // pred_check
      _
    $region19: #{regression_forward.1} parent=1 // pred_check_branch
      %58 = sbr.rel (0) target = $region21
    $region20: #{regression_forward.1} parent=1 // pred_region
      %s60 = ssub.s32 160, 160
      %61 = vsyncadd [#allocation9], %s60
      %s62 = sshll.u32 [#allocation8], 4
      %s63 = int_to_ptr.vmem [resolvable:$true] %s62
      %68 = dma.hbm_to_vmem [thread:$0]  %s4, 160, %s63, [#allocation9], 16, 16, 1
    $region21: #{regression_forward.1} parent=1 // pred_fallthru
      _
    // Predicated region
    $region22: #{regression_forward.1} parent=1 // pred_check
      _
    $region23: #{regression_forward.1} parent=1 // pred_check_branch
      %70 = sbr.rel (0) target = $region25
    $region24: #{regression_forward.1} parent=1 // pred_region
      %s72 = ssub.s32 2048, 2048
      %73 = vsyncadd [#allocation9], %s72
      %s74 = sshll.u32 [#allocation10], 4
      %s75 = int_to_ptr.vmem [resolvable:$true] %s74
      %80 = dma.hbm_to_vmem [thread:$0]  %s5, 2048, %s75, [#allocation9], 128, 128, 8
    $region25: #{regression_forward.1} parent=1 // pred_fallthru
      _
    // Predicated region
    $region26: #{regression_forward.1} parent=1 // pred_check
      _
    $region27: #{regression_forward.1} parent=1 // pred_check_branch
      %82 = sbr.rel (0) target = $region29
    $region28: #{regression_forward.1} parent=1 // pred_region
      _
    $region29: #{regression_forward.1} parent=1 // pred_fallthru
      _
    // Predicated region
    $region30: #{regression_forward.1} parent=1 // pred_check
      _
    $region31: #{regression_forward.1} parent=1 // pred_check_branch
      %84 = sbr.rel (0) target = $region33
    $region32: #{regression_forward.1} parent=1 // pred_region
      %s86 = ssub.s32 4096, 4096
      %87 = vsyncadd [#allocation12], %s86
      %s88 = sshll.u32 [#allocation11], 4
      %s89 = int_to_ptr.vmem [resolvable:$true] %s88
      %94 = dma.hbm_to_vmem [thread:$0]  %s7, 4096, %s89, [#allocation12], 128, 128, 8
    $region33: #{regression_forward.1} parent=1 // pred_fallthru
      _
    // Predicated region
    $region34: #{regression_forward.1} parent=1 // pred_check
      _
    $region35: #{regression_forward.1} parent=1 // pred_check_branch
      %96 = sbr.rel (0) target = $region37
    $region36: #{regression_forward.1} parent=1 // pred_region
      _
    $region37: #{regression_forward.1} parent=1 // pred_fallthru
      _
    // Predicated region
    $region38: #{regression_forward.1} parent=1 // pred_check
      _
    $region39: #{regression_forward.1} parent=1 // pred_check_branch
      %98 = sbr.rel (0) target = $region41
    $region40: #{regression_forward.1} parent=1 // pred_region
      %99 = dma.done [#allocation3], 256
    $region41: #{regression_forward.1} parent=1 // pred_fallthru
      _
    // Predicated region
    $region42: #{regression_forward.1} parent=1 // pred_check
      _
    $region43: #{regression_forward.1} parent=1 // pred_check_branch
      %101 = sbr.rel (0) target = $region45
    $region44: #{regression_forward.1} parent=1 // pred_region
      %102 = dma.done [#allocation6], 512
    $region45: #{regression_forward.1} parent=1 // pred_fallthru
      _
    // Predicated region
    $region46: #{regression_forward.1} parent=1 // pred_check
      _
    $region47: #{regression_forward.1} parent=1 // pred_check_branch
      %104 = sbr.rel (0) target = $region49
    $region48: #{regression_forward.1} parent=1 // pred_region
      %105 = dma.done [#allocation6], 20480
    $region49: #{regression_forward.1} parent=1 // pred_fallthru
      _
    // Predicated region
    $region50: #{regression_forward.1} parent=1 // pred_check
      _
    $region51: #{regression_forward.1} parent=1 // pred_check_branch
      %107 = sbr.rel (0) target = $region53
    $region52: #{regression_forward.1} parent=1 // pred_region
      %108 = dma.done [#allocation9], 160
    $region53: #{regression_forward.1} parent=1 // pred_fallthru
      _
    // Predicated region
    $region54: #{regression_forward.1} parent=1 // pred_check
      _
    $region55: #{regression_forward.1} parent=1 // pred_check_branch
      %110 = sbr.rel (0) target = $region57
    $region56: #{regression_forward.1} parent=1 // pred_region
      %111 = dma.done [#allocation9], 2048
    $region57: #{regression_forward.1} parent=1 // pred_fallthru
      _
    // Predicated region
    $region58: #{regression_forward.1} parent=1 // pred_check
      _
    $region59: #{regression_forward.1} parent=1 // pred_check_branch
      %113 = sbr.rel (0) target = $region61
    $region60: #{regression_forward.1} parent=1 // pred_region
      %114 = dma.done [#allocation12], 4096
    $region61: #{regression_forward.1} parent=1 // pred_fallthru
      _
    %v115 = vld [vmem:[#allocation2] sm:$0xff]
    %v116 = vld [vmem:[#allocation2 + $0x8] sm:$0xff]
    %v117 = vld [vmem:[#allocation5] sm:$0xff]
    %v118 = vld [vmem:[#allocation5 + $0x8] sm:$0xff]
    %v119 = vld [vmem:[#allocation5 + $0x10] sm:$0xff]
    %v120 = vld [vmem:[#allocation5 + $0x18] sm:$0xff]
    %v121 = vld [vmem:[%s2] sm:$0x1]
    %v123 = vlaneseq
    %v124 = vshrl.u32 %v123, 7
    %v125 = vsub.s32 0, %v124
    %v126 = vrot.slane %v121, %v125
    %vm128 = vcmask 261120
    %v130 = vsel %vm128, %v115, 0
    %v133 = vsel %vm128, %v116, 0
    %135 = vmatprep.subr.mxu0 0.0
    %136 = vmatpush1.msra.mxu0 %v117
    %137 = vmatprep.subr.mxu0 0.0
    %138 = vmatpush1.msra.mxu0 %v118
    %139 = vmatprep.subr.mxu0 0.0
    %140 = vmatpush1.msra.mxu0 %v119
    %141 = vmatprep.subr.mxu0 0.0
    %142 = vmatpush1.msra.mxu0 %v120
    %143 = vmatprep.subr.mxu0 0.0
    %144 = vmatpush1.msra.mxu0 0.0
    %145 = vmatprep.subr.mxu0 0.0
    %146 = vmatpush1.msra.mxu0 0.0
    %147 = vmatprep.subr.mxu0 0.0
    %148 = vmatpush1.msra.mxu0 0.0
    %149 = vmatprep.subr.mxu0 0.0
    %150 = vmatpush1.msra.mxu0 0.0
    %151 = vmatprep.subr.mxu0 0.0
    %152 = vmatpush1.msra.mxu0 0.0
    %153 = vmatprep.subr.mxu0 0.0
    %154 = vmatpush1.msra.mxu0 0.0
    %155 = vmatprep.subr.mxu0 0.0
    %156 = vmatpush1.msra.mxu0 0.0
    %157 = vmatprep.subr.mxu0 0.0
    %158 = vmatpush1.msra.mxu0 0.0
    %159 = vmatprep.subr.mxu0 0.0
    %160 = vmatpush1.msra.mxu0 0.0
    %161 = vmatprep.subr.mxu0 0.0
    %162 = vmatpush1.msra.mxu0 0.0
    %163 = vmatprep.subr.mxu0 0.0
    %164 = vmatpush1.msra.mxu0 0.0
    %165 = vmatprep.subr.mxu0 0.0
    %166 = vmatpush1.msra.mxu0 0.0
    %167 = vmatprep.subr.mxu0 0.0
    %168 = vmatpush1.msra.mxu0 0.0
    %169 = vmatprep.subr.mxu0 0.0
    %170 = vmatpush1.msra.mxu0 0.0
    %171 = vmatprep.subr.mxu0 0.0
    %172 = vmatpush1.msra.mxu0 0.0
    %173 = vmatprep.subr.mxu0 0.0
    %174 = vmatpush1.msra.mxu0 0.0
    %175 = vmatprep.subr.mxu0 0.0
    %176 = vmatpush1.msra.mxu0 0.0
    %177 = vmatprep.subr.mxu0 0.0
    %178 = vmatpush1.msra.mxu0 0.0
    %179 = vmatprep.subr.mxu0 0.0
    %180 = vmatpush1.msra.mxu0 0.0
    %181 = vmatprep.subr.mxu0 0.0
    %182 = vmatpush1.msra.mxu0 0.0
    %183 = vmatprep.subr.mxu0 0.0
    %184 = vmatpush1.msra.mxu0 0.0
    %185 = vmatprep.subr.mxu0 0.0
    %186 = vmatpush1.msra.mxu0 0.0
    %187 = vmatprep.subr.mxu0 0.0
    %188 = vmatpush1.msra.mxu0 0.0
    %189 = vmatprep.subr.mxu0 0.0
    %190 = vmatpush1.msra.mxu0 0.0
    %191 = vmatprep.subr.mxu0 0.0
    %192 = vmatpush1.msra.mxu0 0.0
    %193 = vmatprep.subr.mxu0 0.0
    %194 = vmatpush1.msra.mxu0 0.0
    %195 = vmatprep.subr.mxu0 0.0
    %196 = vmatpush1.msra.mxu0 0.0
    %197 = vmatprep.subr.mxu0 0.0
    %198 = vmatpush1.msra.mxu0 0.0
    %199 = vmatprep.mubr.f32.mxu0 0.0
    %200 = vmatmul.mubr.f32.gmra.mrb[0].mxu0 %v130
    %v201 = vpop.f32.mrb[0].mxu0
    %v202 = vadd.f32 %v126, %v201
    %v203 = vpop.f32.mrb[0].mxu0
    %204 = vmatprep.mubr.f32.mxu0 0.0
    %205 = vmatmul.mubr.f32.gmra.mrb[0].mxu0 %v133
    %v206 = vpop.f32.mrb[0].mxu0
    %v207 = vadd.f32 %v126, %v206
    %v208 = vpop.f32.mrb[0].mxu0
    %209 = vdwg.mxu0
    %vm210 = vcmp.ge.f32.partialorder %v202, 0.0
    %vm211 = vcmp.ge.f32.partialorder %v207, 0.0
    %v212 = vmul.f32 %v202, 0.01
    %v213 = vmul.f32 %v207, 0.01
    %v214 = vsel %vm210, %v202, %v212
    %v215 = vsel %vm211, %v207, %v213
    %v216 = vld [vmem:[#allocation7] sm:$0xff]
    %v217 = vld [vmem:[#allocation7 + $0x8] sm:$0xff]
    %v218 = vld [vmem:[#allocation7 + $0x10] sm:$0xff]
    %v219 = vld [vmem:[#allocation7 + $0x18] sm:$0xff]
    %v220 = vld [vmem:[#allocation7 + $0x20] sm:$0xff]
    %v221 = vld [vmem:[#allocation7 + $0x28] sm:$0xff]
    %v222 = vld [vmem:[#allocation7 + $0x30] sm:$0xff]
    %v223 = vld [vmem:[#allocation7 + $0x38] sm:$0xff]
    %v224 = vld [vmem:[#allocation7 + $0x40] sm:$0xff]
    %v225 = vld [vmem:[#allocation7 + $0x48] sm:$0xff]
    %v226 = vld [vmem:[#allocation7 + $0x50] sm:$0xff]
    %v227 = vld [vmem:[#allocation7 + $0x58] sm:$0xff]
    %v228 = vld [vmem:[#allocation7 + $0x60] sm:$0xff]
    %v229 = vld [vmem:[#allocation7 + $0x68] sm:$0xff]
    %v230 = vld [vmem:[#allocation7 + $0x70] sm:$0xff]
    %v231 = vld [vmem:[#allocation7 + $0x78] sm:$0xff]
    %v232 = vld [vmem:[#allocation8] sm:$0x1]
    %v234 = vlaneseq
    %v235 = vshrl.u32 %v234, 7
    %v236 = vsub.s32 0, %v235
    %v237 = vrot.slane %v232, %v236
    %239 = vmatprep.subr.mxu0 0.0
    %240 = vmatpush1.msra.mxu0 %v216
    %241 = vmatprep.subr.mxu0 0.0
    %242 = vmatpush1.msra.mxu0 %v217
    %243 = vmatprep.subr.mxu0 0.0
    %244 = vmatpush1.msra.mxu0 %v218
    %245 = vmatprep.subr.mxu0 0.0
    %246 = vmatpush1.msra.mxu0 %v219
    %247 = vmatprep.subr.mxu0 0.0
    %248 = vmatpush1.msra.mxu0 %v220
    %249 = vmatprep.subr.mxu0 0.0
    %250 = vmatpush1.msra.mxu0 %v221
    %251 = vmatprep.subr.mxu0 0.0
    %252 = vmatpush1.msra.mxu0 %v222
    %253 = vmatprep.subr.mxu0 0.0
    %254 = vmatpush1.msra.mxu0 %v223
    %255 = vmatprep.subr.mxu0 0.0
    %256 = vmatpush1.msra.mxu0 %v224
    %257 = vmatprep.subr.mxu0 0.0
    %258 = vmatpush1.msra.mxu0 %v225
    %259 = vmatprep.subr.mxu0 0.0
    %260 = vmatpush1.msra.mxu0 %v226
    %261 = vmatprep.subr.mxu0 0.0
    %262 = vmatpush1.msra.mxu0 %v227
    %263 = vmatprep.subr.mxu0 0.0
    %264 = vmatpush1.msra.mxu0 %v228
    %265 = vmatprep.subr.mxu0 0.0
    %266 = vmatpush1.msra.mxu0 %v229
    %267 = vmatprep.subr.mxu0 0.0
    %268 = vmatpush1.msra.mxu0 %v230
    %269 = vmatprep.subr.mxu0 0.0
    %270 = vmatpush1.msra.mxu0 %v231
    %271 = vmatprep.subr.mxu0 0.0
    %272 = vmatpush1.msra.mxu0 0.0
    %273 = vmatprep.subr.mxu0 0.0
    %274 = vmatpush1.msra.mxu0 0.0
    %275 = vmatprep.subr.mxu0 0.0
    %276 = vmatpush1.msra.mxu0 0.0
    %277 = vmatprep.subr.mxu0 0.0
    %278 = vmatpush1.msra.mxu0 0.0
    %279 = vmatprep.subr.mxu0 0.0
    %280 = vmatpush1.msra.mxu0 0.0
    %281 = vmatprep.subr.mxu0 0.0
    %282 = vmatpush1.msra.mxu0 0.0
    %283 = vmatprep.subr.mxu0 0.0
    %284 = vmatpush1.msra.mxu0 0.0
    %285 = vmatprep.subr.mxu0 0.0
    %286 = vmatpush1.msra.mxu0 0.0
    %287 = vmatprep.subr.mxu0 0.0
    %288 = vmatpush1.msra.mxu0 0.0
    %289 = vmatprep.subr.mxu0 0.0
    %290 = vmatpush1.msra.mxu0 0.0
    %291 = vmatprep.subr.mxu0 0.0
    %292 = vmatpush1.msra.mxu0 0.0
    %293 = vmatprep.subr.mxu0 0.0
    %294 = vmatpush1.msra.mxu0 0.0
    %295 = vmatprep.subr.mxu0 0.0
    %296 = vmatpush1.msra.mxu0 0.0
    %297 = vmatprep.subr.mxu0 0.0
    %298 = vmatpush1.msra.mxu0 0.0
    %299 = vmatprep.subr.mxu0 0.0
    %300 = vmatpush1.msra.mxu0 0.0
    %301 = vmatprep.subr.mxu0 0.0
    %302 = vmatpush1.msra.mxu0 0.0
    %303 = vmatprep.mubr.f32.mxu0 0.0
    %304 = vmatmul.mubr.f32.gmra.mrb[0].mxu0 %v214
    %v305 = vpop.f32.mrb[0].mxu0
    %v306 = vadd.f32 %v237, %v305
    %v307 = vpop.f32.mrb[0].mxu0
    %308 = vmatprep.mubr.f32.mxu0 0.0
    %309 = vmatmul.mubr.f32.gmra.mrb[0].mxu0 %v215
    %v310 = vpop.f32.mrb[0].mxu0
    %v311 = vadd.f32 %v237, %v310
    %v312 = vpop.f32.mrb[0].mxu0
    %313 = vdwg.mxu0
    %vm314 = vcmp.ge.f32.partialorder %v306, 0.0
    %vm315 = vcmp.ge.f32.partialorder %v311, 0.0
    %v316 = vmul.f32 %v306, 0.01
    %v317 = vmul.f32 %v311, 0.01
    %v318 = vsel %vm314, %v306, %v316
    %v319 = vsel %vm315, %v311, %v317
    %s320 = scalar_lea.vmem [#allocation7], 128
    %v321 = vld [vmem:[%s320] sm:$0xff]
    %v322 = vld [vmem:[%s320 + $0x8] sm:$0xff]
    %v323 = vld [vmem:[%s320 + $0x10] sm:$0xff]
    %v324 = vld [vmem:[%s320 + $0x18] sm:$0xff]
    %v325 = vld [vmem:[%s320 + $0x20] sm:$0xff]
    %v326 = vld [vmem:[%s320 + $0x28] sm:$0xff]
    %v327 = vld [vmem:[%s320 + $0x30] sm:$0xff]
    %v328 = vld [vmem:[%s320 + $0x38] sm:$0xff]
    %v329 = vld [vmem:[%s320 + $0x40] sm:$0xff]
    %v330 = vld [vmem:[%s320 + $0x48] sm:$0xff]
    %v331 = vld [vmem:[%s320 + $0x50] sm:$0xff]
    %v332 = vld [vmem:[%s320 + $0x58] sm:$0xff]
    %v333 = vld [vmem:[%s320 + $0x60] sm:$0xff]
    %v334 = vld [vmem:[%s320 + $0x68] sm:$0xff]
    %v335 = vld [vmem:[%s320 + $0x70] sm:$0xff]
    %v336 = vld [vmem:[%s320 + $0x78] sm:$0xff]
    %337 = vmatprep.subr.mxu0 0.0
    %338 = vmatpush1.msra.mxu0 %v321
    %339 = vmatprep.subr.mxu0 0.0
    %340 = vmatpush1.msra.mxu0 %v322
    %341 = vmatprep.subr.mxu0 0.0
    %342 = vmatpush1.msra.mxu0 %v323
    %343 = vmatprep.subr.mxu0 0.0
    %344 = vmatpush1.msra.mxu0 %v324
    %345 = vmatprep.subr.mxu0 0.0
    %346 = vmatpush1.msra.mxu0 %v325
    %347 = vmatprep.subr.mxu0 0.0
    %348 = vmatpush1.msra.mxu0 %v326
    %349 = vmatprep.subr.mxu0 0.0
    %350 = vmatpush1.msra.mxu0 %v327
    %351 = vmatprep.subr.mxu0 0.0
    %352 = vmatpush1.msra.mxu0 %v328
    %353 = vmatprep.subr.mxu0 0.0
    %354 = vmatpush1.msra.mxu0 %v329
    %355 = vmatprep.subr.mxu0 0.0
    %356 = vmatpush1.msra.mxu0 %v330
    %357 = vmatprep.subr.mxu0 0.0
    %358 = vmatpush1.msra.mxu0 %v331
    %359 = vmatprep.subr.mxu0 0.0
    %360 = vmatpush1.msra.mxu0 %v332
    %361 = vmatprep.subr.mxu0 0.0
    %362 = vmatpush1.msra.mxu0 %v333
    %363 = vmatprep.subr.mxu0 0.0
    %364 = vmatpush1.msra.mxu0 %v334
    %365 = vmatprep.subr.mxu0 0.0
    %366 = vmatpush1.msra.mxu0 %v335
    %367 = vmatprep.subr.mxu0 0.0
    %368 = vmatpush1.msra.mxu0 %v336
    %369 = vmatprep.subr.mxu0 0.0
    %370 = vmatpush1.msra.mxu0 0.0
    %371 = vmatprep.subr.mxu0 0.0
    %372 = vmatpush1.msra.mxu0 0.0
    %373 = vmatprep.subr.mxu0 0.0
    %374 = vmatpush1.msra.mxu0 0.0
    %375 = vmatprep.subr.mxu0 0.0
    %376 = vmatpush1.msra.mxu0 0.0
    %377 = vmatprep.subr.mxu0 0.0
    %378 = vmatpush1.msra.mxu0 0.0
    %379 = vmatprep.subr.mxu0 0.0
    %380 = vmatpush1.msra.mxu0 0.0
    %381 = vmatprep.subr.mxu0 0.0
    %382 = vmatpush1.msra.mxu0 0.0
    %383 = vmatprep.subr.mxu0 0.0
    %384 = vmatpush1.msra.mxu0 0.0
    %385 = vmatprep.subr.mxu0 0.0
    %386 = vmatpush1.msra.mxu0 0.0
    %387 = vmatprep.subr.mxu0 0.0
    %388 = vmatpush1.msra.mxu0 0.0
    %389 = vmatprep.subr.mxu0 0.0
    %390 = vmatpush1.msra.mxu0 0.0
    %391 = vmatprep.subr.mxu0 0.0
    %392 = vmatpush1.msra.mxu0 0.0
    %393 = vmatprep.subr.mxu0 0.0
    %394 = vmatpush1.msra.mxu0 0.0
    %395 = vmatprep.subr.mxu0 0.0
    %396 = vmatpush1.msra.mxu0 0.0
    %397 = vmatprep.subr.mxu0 0.0
    %398 = vmatpush1.msra.mxu0 0.0
    %399 = vmatprep.subr.mxu0 0.0
    %400 = vmatpush1.msra.mxu0 0.0
    %401 = vmatprep.mubr.f32.mxu0 0.0
    %402 = vmatmul.mubr.f32.gmra.mrb[0].mxu0 %v318
    %v403 = vpop.f32.mrb[0].mxu0
    %v404 = vadd.f32 0.0, %v403
    %v405 = vpop.f32.mrb[0].mxu0
    %406 = vmatprep.mubr.f32.mxu0 0.0
    %407 = vmatmul.mubr.f32.gmra.mrb[0].mxu0 %v319
    %v408 = vpop.f32.mrb[0].mxu0
    %v409 = vadd.f32 0.0, %v408
    %v410 = vpop.f32.mrb[0].mxu0
    %411 = vdwg.mxu0
    %v412 = vadd.f32 %v214, %v404
    %v413 = vadd.f32 %v215, %v409
    %s414 = scalar_lea.vmem [#allocation8], 1
    %v415 = vld [vmem:[%s414] sm:$0x1]
    %v417 = vlaneseq
    %v418 = vshrl.u32 %v417, 7
    %v419 = vsub.s32 0, %v418
    %v420 = vrot.slane %v415, %v419
    %v422 = vadd.f32 %v412, %v420
    %v423 = vadd.f32 %v413, %v420
    %vm424 = vcmp.ge.f32.partialorder %v422, 0.0
    %vm425 = vcmp.ge.f32.partialorder %v423, 0.0
    %v426 = vmul.f32 %v422, 0.01
    %v427 = vmul.f32 %v423, 0.01
    %v428 = vsel %vm424, %v422, %v426
    %v429 = vsel %vm425, %v423, %v427
    %s430 = scalar_lea.vmem [#allocation7], 256
    %v431 = vld [vmem:[%s430] sm:$0xff]
    %v432 = vld [vmem:[%s430 + $0x8] sm:$0xff]
    %v433 = vld [vmem:[%s430 + $0x10] sm:$0xff]
    %v434 = vld [vmem:[%s430 + $0x18] sm:$0xff]
    %v435 = vld [vmem:[%s430 + $0x20] sm:$0xff]
    %v436 = vld [vmem:[%s430 + $0x28] sm:$0xff]
    %v437 = vld [vmem:[%s430 + $0x30] sm:$0xff]
    %v438 = vld [vmem:[%s430 + $0x38] sm:$0xff]
    %v439 = vld [vmem:[%s430 + $0x40] sm:$0xff]
    %v440 = vld [vmem:[%s430 + $0x48] sm:$0xff]
    %v441 = vld [vmem:[%s430 + $0x50] sm:$0xff]
    %v442 = vld [vmem:[%s430 + $0x58] sm:$0xff]
    %v443 = vld [vmem:[%s430 + $0x60] sm:$0xff]
    %v444 = vld [vmem:[%s430 + $0x68] sm:$0xff]
    %v445 = vld [vmem:[%s430 + $0x70] sm:$0xff]
    %v446 = vld [vmem:[%s430 + $0x78] sm:$0xff]
    %s447 = scalar_lea.vmem [#allocation8], 2
    %v448 = vld [vmem:[%s447] sm:$0x1]
    %v450 = vlaneseq
    %v451 = vshrl.u32 %v450, 7
    %v452 = vsub.s32 0, %v451
    %v453 = vrot.slane %v448, %v452
    %455 = vmatprep.subr.mxu0 0.0
    %456 = vmatpush1.msra.mxu0 %v431
    %457 = vmatprep.subr.mxu0 0.0
    %458 = vmatpush1.msra.mxu0 %v432
    %459 = vmatprep.subr.mxu0 0.0
    %460 = vmatpush1.msra.mxu0 %v433
    %461 = vmatprep.subr.mxu0 0.0
    %462 = vmatpush1.msra.mxu0 %v434
    %463 = vmatprep.subr.mxu0 0.0
    %464 = vmatpush1.msra.mxu0 %v435
    %465 = vmatprep.subr.mxu0 0.0
    %466 = vmatpush1.msra.mxu0 %v436
    %467 = vmatprep.subr.mxu0 0.0
    %468 = vmatpush1.msra.mxu0 %v437
    %469 = vmatprep.subr.mxu0 0.0
    %470 = vmatpush1.msra.mxu0 %v438
    %471 = vmatprep.subr.mxu0 0.0
    %472 = vmatpush1.msra.mxu0 %v439
    %473 = vmatprep.subr.mxu0 0.0
    %474 = vmatpush1.msra.mxu0 %v440
    %475 = vmatprep.subr.mxu0 0.0
    %476 = vmatpush1.msra.mxu0 %v441
    %477 = vmatprep.subr.mxu0 0.0
    %478 = vmatpush1.msra.mxu0 %v442
    %479 = vmatprep.subr.mxu0 0.0
    %480 = vmatpush1.msra.mxu0 %v443
    %481 = vmatprep.subr.mxu0 0.0
    %482 = vmatpush1.msra.mxu0 %v444
    %483 = vmatprep.subr.mxu0 0.0
    %484 = vmatpush1.msra.mxu0 %v445
    %485 = vmatprep.subr.mxu0 0.0
    %486 = vmatpush1.msra.mxu0 %v446
    %487 = vmatprep.subr.mxu0 0.0
    %488 = vmatpush1.msra.mxu0 0.0
    %489 = vmatprep.subr.mxu0 0.0
    %490 = vmatpush1.msra.mxu0 0.0
    %491 = vmatprep.subr.mxu0 0.0
    %492 = vmatpush1.msra.mxu0 0.0
    %493 = vmatprep.subr.mxu0 0.0
    %494 = vmatpush1.msra.mxu0 0.0
    %495 = vmatprep.subr.mxu0 0.0
    %496 = vmatpush1.msra.mxu0 0.0
    %497 = vmatprep.subr.mxu0 0.0
    %498 = vmatpush1.msra.mxu0 0.0
    %499 = vmatprep.subr.mxu0 0.0
    %500 = vmatpush1.msra.mxu0 0.0
    %501 = vmatprep.subr.mxu0 0.0
    %502 = vmatpush1.msra.mxu0 0.0
    %503 = vmatprep.subr.mxu0 0.0
    %504 = vmatpush1.msra.mxu0 0.0
    %505 = vmatprep.subr.mxu0 0.0
    %506 = vmatpush1.msra.mxu0 0.0
    %507 = vmatprep.subr.mxu0 0.0
    %508 = vmatpush1.msra.mxu0 0.0
    %509 = vmatprep.subr.mxu0 0.0
    %510 = vmatpush1.msra.mxu0 0.0
    %511 = vmatprep.subr.mxu0 0.0
    %512 = vmatpush1.msra.mxu0 0.0
    %513 = vmatprep.subr.mxu0 0.0
    %514 = vmatpush1.msra.mxu0 0.0
    %515 = vmatprep.subr.mxu0 0.0
    %516 = vmatpush1.msra.mxu0 0.0
    %517 = vmatprep.subr.mxu0 0.0
    %518 = vmatpush1.msra.mxu0 0.0
    %519 = vmatprep.mubr.f32.mxu0 0.0
    %520 = vmatmul.mubr.f32.gmra.mrb[0].mxu0 %v428
    %v521 = vpop.f32.mrb[0].mxu0
    %v522 = vadd.f32 %v453, %v521
    %v523 = vpop.f32.mrb[0].mxu0
    %524 = vmatprep.mubr.f32.mxu0 0.0
    %525 = vmatmul.mubr.f32.gmra.mrb[0].mxu0 %v429
    %v526 = vpop.f32.mrb[0].mxu0
    %v527 = vadd.f32 %v453, %v526
    %v528 = vpop.f32.mrb[0].mxu0
    %529 = vdwg.mxu0
    %vm530 = vcmp.ge.f32.partialorder %v522, 0.0
    %vm531 = vcmp.ge.f32.partialorder %v527, 0.0
    %v532 = vmul.f32 %v522, 0.01
    %v533 = vmul.f32 %v527, 0.01
    %v534 = vsel %vm530, %v522, %v532
    %v535 = vsel %vm531, %v527, %v533
    %s536 = scalar_lea.vmem [#allocation7], 384
    %v537 = vld [vmem:[%s536] sm:$0xff]
    %v538 = vld [vmem:[%s536 + $0x8] sm:$0xff]
    %v539 = vld [vmem:[%s536 + $0x10] sm:$0xff]
    %v540 = vld [vmem:[%s536 + $0x18] sm:$0xff]
    %v541 = vld [vmem:[%s536 + $0x20] sm:$0xff]
    %v542 = vld [vmem:[%s536 + $0x28] sm:$0xff]
    %v543 = vld [vmem:[%s536 + $0x30] sm:$0xff]
    %v544 = vld [vmem:[%s536 + $0x38] sm:$0xff]
    %v545 = vld [vmem:[%s536 + $0x40] sm:$0xff]
    %v546 = vld [vmem:[%s536 + $0x48] sm:$0xff]
    %v547 = vld [vmem:[%s536 + $0x50] sm:$0xff]
    %v548 = vld [vmem:[%s536 + $0x58] sm:$0xff]
    %v549 = vld [vmem:[%s536 + $0x60] sm:$0xff]
    %v550 = vld [vmem:[%s536 + $0x68] sm:$0xff]
    %v551 = vld [vmem:[%s536 + $0x70] sm:$0xff]
    %v552 = vld [vmem:[%s536 + $0x78] sm:$0xff]
    %553 = vmatprep.subr.mxu0 0.0
    %554 = vmatpush1.msra.mxu0 %v537
    %555 = vmatprep.subr.mxu0 0.0
    %556 = vmatpush1.msra.mxu0 %v538
    %557 = vmatprep.subr.mxu0 0.0
    %558 = vmatpush1.msra.mxu0 %v539
    %559 = vmatprep.subr.mxu0 0.0
    %560 = vmatpush1.msra.mxu0 %v540
    %561 = vmatprep.subr.mxu0 0.0
    %562 = vmatpush1.msra.mxu0 %v541
    %563 = vmatprep.subr.mxu0 0.0
    %564 = vmatpush1.msra.mxu0 %v542
    %565 = vmatprep.subr.mxu0 0.0
    %566 = vmatpush1.msra.mxu0 %v543
    %567 = vmatprep.subr.mxu0 0.0
    %568 = vmatpush1.msra.mxu0 %v544
    %569 = vmatprep.subr.mxu0 0.0
    %570 = vmatpush1.msra.mxu0 %v545
    %571 = vmatprep.subr.mxu0 0.0
    %572 = vmatpush1.msra.mxu0 %v546
    %573 = vmatprep.subr.mxu0 0.0
    %574 = vmatpush1.msra.mxu0 %v547
    %575 = vmatprep.subr.mxu0 0.0
    %576 = vmatpush1.msra.mxu0 %v548
    %577 = vmatprep.subr.mxu0 0.0
    %578 = vmatpush1.msra.mxu0 %v549
    %579 = vmatprep.subr.mxu0 0.0
    %580 = vmatpush1.msra.mxu0 %v550
    %581 = vmatprep.subr.mxu0 0.0
    %582 = vmatpush1.msra.mxu0 %v551
    %583 = vmatprep.subr.mxu0 0.0
    %584 = vmatpush1.msra.mxu0 %v552
    %585 = vmatprep.subr.mxu0 0.0
    %586 = vmatpush1.msra.mxu0 0.0
    %587 = vmatprep.subr.mxu0 0.0
    %588 = vmatpush1.msra.mxu0 0.0
    %589 = vmatprep.subr.mxu0 0.0
    %590 = vmatpush1.msra.mxu0 0.0
    %591 = vmatprep.subr.mxu0 0.0
    %592 = vmatpush1.msra.mxu0 0.0
    %593 = vmatprep.subr.mxu0 0.0
    %594 = vmatpush1.msra.mxu0 0.0
    %595 = vmatprep.subr.mxu0 0.0
    %596 = vmatpush1.msra.mxu0 0.0
    %597 = vmatprep.subr.mxu0 0.0
    %598 = vmatpush1.msra.mxu0 0.0
    %599 = vmatprep.subr.mxu0 0.0
    %600 = vmatpush1.msra.mxu0 0.0
    %601 = vmatprep.subr.mxu0 0.0
    %602 = vmatpush1.msra.mxu0 0.0
    %603 = vmatprep.subr.mxu0 0.0
    %604 = vmatpush1.msra.mxu0 0.0
    %605 = vmatprep.subr.mxu0 0.0
    %606 = vmatpush1.msra.mxu0 0.0
    %607 = vmatprep.subr.mxu0 0.0
    %608 = vmatpush1.msra.mxu0 0.0
    %609 = vmatprep.subr.mxu0 0.0
    %610 = vmatpush1.msra.mxu0 0.0
    %611 = vmatprep.subr.mxu0 0.0
    %612 = vmatpush1.msra.mxu0 0.0
    %613 = vmatprep.subr.mxu0 0.0
    %614 = vmatpush1.msra.mxu0 0.0
    %615 = vmatprep.subr.mxu0 0.0
    %616 = vmatpush1.msra.mxu0 0.0
    %617 = vmatprep.mubr.f32.mxu0 0.0
    %618 = vmatmul.mubr.f32.gmra.mrb[0].mxu0 %v534
    %v619 = vpop.f32.mrb[0].mxu0
    %v620 = vadd.f32 0.0, %v619
    %v621 = vpop.f32.mrb[0].mxu0
    %622 = vmatprep.mubr.f32.mxu0 0.0
    %623 = vmatmul.mubr.f32.gmra.mrb[0].mxu0 %v535
    %v624 = vpop.f32.mrb[0].mxu0
    %v625 = vadd.f32 0.0, %v624
    %v626 = vpop.f32.mrb[0].mxu0
    %627 = vdwg.mxu0
    %v628 = vadd.f32 %v428, %v620
    %v629 = vadd.f32 %v429, %v625
    %s630 = scalar_lea.vmem [#allocation8], 3
    %v631 = vld [vmem:[%s630] sm:$0x1]
    %v633 = vlaneseq
    %v634 = vshrl.u32 %v633, 7
    %v635 = vsub.s32 0, %v634
    %v636 = vrot.slane %v631, %v635
    %v638 = vadd.f32 %v628, %v636
    %v639 = vadd.f32 %v629, %v636
    %vm640 = vcmp.ge.f32.partialorder %v638, 0.0
    %vm641 = vcmp.ge.f32.partialorder %v639, 0.0
    %v642 = vmul.f32 %v638, 0.01
    %v643 = vmul.f32 %v639, 0.01
    %v644 = vsel %vm640, %v638, %v642
    %v645 = vsel %vm641, %v639, %v643
    %s646 = scalar_lea.vmem [#allocation7], 512
    %v647 = vld [vmem:[%s646] sm:$0xff]
    %v648 = vld [vmem:[%s646 + $0x8] sm:$0xff]
    %v649 = vld [vmem:[%s646 + $0x10] sm:$0xff]
    %v650 = vld [vmem:[%s646 + $0x18] sm:$0xff]
    %v651 = vld [vmem:[%s646 + $0x20] sm:$0xff]
    %v652 = vld [vmem:[%s646 + $0x28] sm:$0xff]
    %v653 = vld [vmem:[%s646 + $0x30] sm:$0xff]
    %v654 = vld [vmem:[%s646 + $0x38] sm:$0xff]
    %v655 = vld [vmem:[%s646 + $0x40] sm:$0xff]
    %v656 = vld [vmem:[%s646 + $0x48] sm:$0xff]
    %v657 = vld [vmem:[%s646 + $0x50] sm:$0xff]
    %v658 = vld [vmem:[%s646 + $0x58] sm:$0xff]
    %v659 = vld [vmem:[%s646 + $0x60] sm:$0xff]
    %v660 = vld [vmem:[%s646 + $0x68] sm:$0xff]
    %v661 = vld [vmem:[%s646 + $0x70] sm:$0xff]
    %v662 = vld [vmem:[%s646 + $0x78] sm:$0xff]
    %s663 = scalar_lea.vmem [#allocation8], 4
    %v664 = vld [vmem:[%s663] sm:$0x1]
    %v666 = vlaneseq
    %v667 = vshrl.u32 %v666, 7
    %v668 = vsub.s32 0, %v667
    %v669 = vrot.slane %v664, %v668
    %671 = vmatprep.subr.mxu0 0.0
    %672 = vmatpush1.msra.mxu0 %v647
    %673 = vmatprep.subr.mxu0 0.0
    %674 = vmatpush1.msra.mxu0 %v648
    %675 = vmatprep.subr.mxu0 0.0
    %676 = vmatpush1.msra.mxu0 %v649
    %677 = vmatprep.subr.mxu0 0.0
    %678 = vmatpush1.msra.mxu0 %v650
    %679 = vmatprep.subr.mxu0 0.0
    %680 = vmatpush1.msra.mxu0 %v651
    %681 = vmatprep.subr.mxu0 0.0
    %682 = vmatpush1.msra.mxu0 %v652
    %683 = vmatprep.subr.mxu0 0.0
    %684 = vmatpush1.msra.mxu0 %v653
    %685 = vmatprep.subr.mxu0 0.0
    %686 = vmatpush1.msra.mxu0 %v654
    %687 = vmatprep.subr.mxu0 0.0
    %688 = vmatpush1.msra.mxu0 %v655
    %689 = vmatprep.subr.mxu0 0.0
    %690 = vmatpush1.msra.mxu0 %v656
    %691 = vmatprep.subr.mxu0 0.0
    %692 = vmatpush1.msra.mxu0 %v657
    %693 = vmatprep.subr.mxu0 0.0
    %694 = vmatpush1.msra.mxu0 %v658
    %695 = vmatprep.subr.mxu0 0.0
    %696 = vmatpush1.msra.mxu0 %v659
    %697 = vmatprep.subr.mxu0 0.0
    %698 = vmatpush1.msra.mxu0 %v660
    %699 = vmatprep.subr.mxu0 0.0
    %700 = vmatpush1.msra.mxu0 %v661
    %701 = vmatprep.subr.mxu0 0.0
    %702 = vmatpush1.msra.mxu0 %v662
    %703 = vmatprep.subr.mxu0 0.0
    %704 = vmatpush1.msra.mxu0 0.0
    %705 = vmatprep.subr.mxu0 0.0
    %706 = vmatpush1.msra.mxu0 0.0
    %707 = vmatprep.subr.mxu0 0.0
    %708 = vmatpush1.msra.mxu0 0.0
    %709 = vmatprep.subr.mxu0 0.0
    %710 = vmatpush1.msra.mxu0 0.0
    %711 = vmatprep.subr.mxu0 0.0
    %712 = vmatpush1.msra.mxu0 0.0
    %713 = vmatprep.subr.mxu0 0.0
    %714 = vmatpush1.msra.mxu0 0.0
    %715 = vmatprep.subr.mxu0 0.0
    %716 = vmatpush1.msra.mxu0 0.0
    %717 = vmatprep.subr.mxu0 0.0
    %718 = vmatpush1.msra.mxu0 0.0
    %719 = vmatprep.subr.mxu0 0.0
    %720 = vmatpush1.msra.mxu0 0.0
    %721 = vmatprep.subr.mxu0 0.0
    %722 = vmatpush1.msra.mxu0 0.0
    %723 = vmatprep.subr.mxu0 0.0
    %724 = vmatpush1.msra.mxu0 0.0
    %725 = vmatprep.subr.mxu0 0.0
    %726 = vmatpush1.msra.mxu0 0.0
    %727 = vmatprep.subr.mxu0 0.0
    %728 = vmatpush1.msra.mxu0 0.0
    %729 = vmatprep.subr.mxu0 0.0
    %730 = vmatpush1.msra.mxu0 0.0
    %731 = vmatprep.subr.mxu0 0.0
    %732 = vmatpush1.msra.mxu0 0.0
    %733 = vmatprep.subr.mxu0 0.0
    %734 = vmatpush1.msra.mxu0 0.0
    %735 = vmatprep.mubr.f32.mxu0 0.0
    %736 = vmatmul.mubr.f32.gmra.mrb[0].mxu0 %v644
    %v737 = vpop.f32.mrb[0].mxu0
    %v738 = vadd.f32 %v669, %v737
    %v739 = vpop.f32.mrb[0].mxu0
    %740 = vmatprep.mubr.f32.mxu0 0.0
    %741 = vmatmul.mubr.f32.gmra.mrb[0].mxu0 %v645
    %v742 = vpop.f32.mrb[0].mxu0
    %v743 = vadd.f32 %v669, %v742
    %v744 = vpop.f32.mrb[0].mxu0
    %745 = vdwg.mxu0
    %vm746 = vcmp.ge.f32.partialorder %v738, 0.0
    %vm747 = vcmp.ge.f32.partialorder %v743, 0.0
    %v748 = vmul.f32 %v738, 0.01
    %v749 = vmul.f32 %v743, 0.01
    %v750 = vsel %vm746, %v738, %v748
    %v751 = vsel %vm747, %v743, %v749
    %s752 = scalar_lea.vmem [#allocation7], 640
    %v753 = vld [vmem:[%s752] sm:$0xff]
    %v754 = vld [vmem:[%s752 + $0x8] sm:$0xff]
    %v755 = vld [vmem:[%s752 + $0x10] sm:$0xff]
    %v756 = vld [vmem:[%s752 + $0x18] sm:$0xff]
    %v757 = vld [vmem:[%s752 + $0x20] sm:$0xff]
    %v758 = vld [vmem:[%s752 + $0x28] sm:$0xff]
    %v759 = vld [vmem:[%s752 + $0x30] sm:$0xff]
    %v760 = vld [vmem:[%s752 + $0x38] sm:$0xff]
    %v761 = vld [vmem:[%s752 + $0x40] sm:$0xff]
    %v762 = vld [vmem:[%s752 + $0x48] sm:$0xff]
    %v763 = vld [vmem:[%s752 + $0x50] sm:$0xff]
    %v764 = vld [vmem:[%s752 + $0x58] sm:$0xff]
    %v765 = vld [vmem:[%s752 + $0x60] sm:$0xff]
    %v766 = vld [vmem:[%s752 + $0x68] sm:$0xff]
    %v767 = vld [vmem:[%s752 + $0x70] sm:$0xff]
    %v768 = vld [vmem:[%s752 + $0x78] sm:$0xff]
    %769 = vmatprep.subr.mxu0 0.0
    %770 = vmatpush1.msra.mxu0 %v753
    %771 = vmatprep.subr.mxu0 0.0
    %772 = vmatpush1.msra.mxu0 %v754
    %773 = vmatprep.subr.mxu0 0.0
    %774 = vmatpush1.msra.mxu0 %v755
    %775 = vmatprep.subr.mxu0 0.0
    %776 = vmatpush1.msra.mxu0 %v756
    %777 = vmatprep.subr.mxu0 0.0
    %778 = vmatpush1.msra.mxu0 %v757
    %779 = vmatprep.subr.mxu0 0.0
    %780 = vmatpush1.msra.mxu0 %v758
    %781 = vmatprep.subr.mxu0 0.0
    %782 = vmatpush1.msra.mxu0 %v759
    %783 = vmatprep.subr.mxu0 0.0
    %784 = vmatpush1.msra.mxu0 %v760
    %785 = vmatprep.subr.mxu0 0.0
    %786 = vmatpush1.msra.mxu0 %v761
    %787 = vmatprep.subr.mxu0 0.0
    %788 = vmatpush1.msra.mxu0 %v762
    %789 = vmatprep.subr.mxu0 0.0
    %790 = vmatpush1.msra.mxu0 %v763
    %791 = vmatprep.subr.mxu0 0.0
    %792 = vmatpush1.msra.mxu0 %v764
    %793 = vmatprep.subr.mxu0 0.0
    %794 = vmatpush1.msra.mxu0 %v765
    %795 = vmatprep.subr.mxu0 0.0
    %796 = vmatpush1.msra.mxu0 %v766
    %797 = vmatprep.subr.mxu0 0.0
    %798 = vmatpush1.msra.mxu0 %v767
    %799 = vmatprep.subr.mxu0 0.0
    %800 = vmatpush1.msra.mxu0 %v768
    %801 = vmatprep.subr.mxu0 0.0
    %802 = vmatpush1.msra.mxu0 0.0
    %803 = vmatprep.subr.mxu0 0.0
    %804 = vmatpush1.msra.mxu0 0.0
    %805 = vmatprep.subr.mxu0 0.0
    %806 = vmatpush1.msra.mxu0 0.0
    %807 = vmatprep.subr.mxu0 0.0
    %808 = vmatpush1.msra.mxu0 0.0
    %809 = vmatprep.subr.mxu0 0.0
    %810 = vmatpush1.msra.mxu0 0.0
    %811 = vmatprep.subr.mxu0 0.0
    %812 = vmatpush1.msra.mxu0 0.0
    %813 = vmatprep.subr.mxu0 0.0
    %814 = vmatpush1.msra.mxu0 0.0
    %815 = vmatprep.subr.mxu0 0.0
    %816 = vmatpush1.msra.mxu0 0.0
    %817 = vmatprep.subr.mxu0 0.0
    %818 = vmatpush1.msra.mxu0 0.0
    %819 = vmatprep.subr.mxu0 0.0
    %820 = vmatpush1.msra.mxu0 0.0
    %821 = vmatprep.subr.mxu0 0.0
    %822 = vmatpush1.msra.mxu0 0.0
    %823 = vmatprep.subr.mxu0 0.0
    %824 = vmatpush1.msra.mxu0 0.0
    %825 = vmatprep.subr.mxu0 0.0
    %826 = vmatpush1.msra.mxu0 0.0
    %827 = vmatprep.subr.mxu0 0.0
    %828 = vmatpush1.msra.mxu0 0.0
    %829 = vmatprep.subr.mxu0 0.0
    %830 = vmatpush1.msra.mxu0 0.0
    %831 = vmatprep.subr.mxu0 0.0
    %832 = vmatpush1.msra.mxu0 0.0
    %833 = vmatprep.mubr.f32.mxu0 0.0
    %834 = vmatmul.mubr.f32.gmra.mrb[0].mxu0 %v750
    %v835 = vpop.f32.mrb[0].mxu0
    %v836 = vadd.f32 0.0, %v835
    %v837 = vpop.f32.mrb[0].mxu0
    %838 = vmatprep.mubr.f32.mxu0 0.0
    %839 = vmatmul.mubr.f32.gmra.mrb[0].mxu0 %v751
    %v840 = vpop.f32.mrb[0].mxu0
    %v841 = vadd.f32 0.0, %v840
    %v842 = vpop.f32.mrb[0].mxu0
    %843 = vdwg.mxu0
    %v844 = vadd.f32 %v644, %v836
    %v845 = vadd.f32 %v645, %v841
    %s846 = scalar_lea.vmem [#allocation8], 5
    %v847 = vld [vmem:[%s846] sm:$0x1]
    %v849 = vlaneseq
    %v850 = vshrl.u32 %v849, 7
    %v851 = vsub.s32 0, %v850
    %v852 = vrot.slane %v847, %v851
    %v854 = vadd.f32 %v844, %v852
    %v855 = vadd.f32 %v845, %v852
    %vm856 = vcmp.ge.f32.partialorder %v854, 0.0
    %vm857 = vcmp.ge.f32.partialorder %v855, 0.0
    %v858 = vmul.f32 %v854, 0.01
    %v859 = vmul.f32 %v855, 0.01
    %v860 = vsel %vm856, %v854, %v858
    %v861 = vsel %vm857, %v855, %v859
    %v862 = vld [vmem:[#allocation10] sm:$0xff]
    %v863 = vld [vmem:[#allocation10 + $0x8] sm:$0xff]
    %v864 = vld [vmem:[#allocation10 + $0x10] sm:$0xff]
    %v865 = vld [vmem:[#allocation10 + $0x18] sm:$0xff]
    %v866 = vld [vmem:[#allocation10 + $0x20] sm:$0xff]
    %v867 = vld [vmem:[#allocation10 + $0x28] sm:$0xff]
    %v868 = vld [vmem:[#allocation10 + $0x30] sm:$0xff]
    %v869 = vld [vmem:[#allocation10 + $0x38] sm:$0xff]
    %v870 = vld [vmem:[#allocation10 + $0x40] sm:$0xff]
    %v871 = vld [vmem:[#allocation10 + $0x48] sm:$0xff]
    %v872 = vld [vmem:[#allocation10 + $0x50] sm:$0xff]
    %v873 = vld [vmem:[#allocation10 + $0x58] sm:$0xff]
    %v874 = vld [vmem:[#allocation10 + $0x60] sm:$0xff]
    %v875 = vld [vmem:[#allocation10 + $0x68] sm:$0xff]
    %v876 = vld [vmem:[#allocation10 + $0x70] sm:$0xff]
    %v877 = vld [vmem:[#allocation10 + $0x78] sm:$0xff]
    %v878 = vld [vmem:[%s6] sm:$0x1]
    %v880 = vlaneseq
    %v881 = vshrl.u32 %v880, 7
    %v882 = vsub.s32 0, %v881
    %v883 = vrot.slane %v878, %v882
    %885 = vmatprep.subr.mxu0 0.0
    %886 = vmatpush1.msra.mxu0 %v862
    %887 = vmatprep.subr.mxu0 0.0
    %888 = vmatpush1.msra.mxu0 %v863
    %889 = vmatprep.subr.mxu0 0.0
    %890 = vmatpush1.msra.mxu0 %v864
    %891 = vmatprep.subr.mxu0 0.0
    %892 = vmatpush1.msra.mxu0 %v865
    %893 = vmatprep.subr.mxu0 0.0
    %894 = vmatpush1.msra.mxu0 %v866
    %895 = vmatprep.subr.mxu0 0.0
    %896 = vmatpush1.msra.mxu0 %v867
    %897 = vmatprep.subr.mxu0 0.0
    %898 = vmatpush1.msra.mxu0 %v868
    %899 = vmatprep.subr.mxu0 0.0
    %900 = vmatpush1.msra.mxu0 %v869
    %901 = vmatprep.subr.mxu0 0.0
    %902 = vmatpush1.msra.mxu0 %v870
    %903 = vmatprep.subr.mxu0 0.0
    %904 = vmatpush1.msra.mxu0 %v871
    %905 = vmatprep.subr.mxu0 0.0
    %906 = vmatpush1.msra.mxu0 %v872
    %907 = vmatprep.subr.mxu0 0.0
    %908 = vmatpush1.msra.mxu0 %v873
    %909 = vmatprep.subr.mxu0 0.0
    %910 = vmatpush1.msra.mxu0 %v874
    %911 = vmatprep.subr.mxu0 0.0
    %912 = vmatpush1.msra.mxu0 %v875
    %913 = vmatprep.subr.mxu0 0.0
    %914 = vmatpush1.msra.mxu0 %v876
    %915 = vmatprep.subr.mxu0 0.0
    %916 = vmatpush1.msra.mxu0 %v877
    %917 = vmatprep.subr.mxu0 0.0
    %918 = vmatpush1.msra.mxu0 0.0
    %919 = vmatprep.subr.mxu0 0.0
    %920 = vmatpush1.msra.mxu0 0.0
    %921 = vmatprep.subr.mxu0 0.0
    %922 = vmatpush1.msra.mxu0 0.0
    %923 = vmatprep.subr.mxu0 0.0
    %924 = vmatpush1.msra.mxu0 0.0
    %925 = vmatprep.subr.mxu0 0.0
    %926 = vmatpush1.msra.mxu0 0.0
    %927 = vmatprep.subr.mxu0 0.0
    %928 = vmatpush1.msra.mxu0 0.0
    %929 = vmatprep.subr.mxu0 0.0
    %930 = vmatpush1.msra.mxu0 0.0
    %931 = vmatprep.subr.mxu0 0.0
    %932 = vmatpush1.msra.mxu0 0.0
    %933 = vmatprep.subr.mxu0 0.0
    %934 = vmatpush1.msra.mxu0 0.0
    %935 = vmatprep.subr.mxu0 0.0
    %936 = vmatpush1.msra.mxu0 0.0
    %937 = vmatprep.subr.mxu0 0.0
    %938 = vmatpush1.msra.mxu0 0.0
    %939 = vmatprep.subr.mxu0 0.0
    %940 = vmatpush1.msra.mxu0 0.0
    %941 = vmatprep.subr.mxu0 0.0
    %942 = vmatpush1.msra.mxu0 0.0
    %943 = vmatprep.subr.mxu0 0.0
    %944 = vmatpush1.msra.mxu0 0.0
    %945 = vmatprep.subr.mxu0 0.0
    %946 = vmatpush1.msra.mxu0 0.0
    %947 = vmatprep.subr.mxu0 0.0
    %948 = vmatpush1.msra.mxu0 0.0
    %949 = vmatprep.mubr.f32.mxu0 0.0
    %950 = vmatmul.mubr.f32.gmra.mrb[0].mxu0 %v860
    %v951 = vpop.f32.mrb[0].mxu0
    %v952 = vadd.f32 %v883, %v951
    %v953 = vpop.f32.mrb[0].mxu0
    %954 = vmatprep.mubr.f32.mxu0 0.0
    %955 = vmatmul.mubr.f32.gmra.mrb[0].mxu0 %v861
    %v956 = vpop.f32.mrb[0].mxu0
    %v957 = vadd.f32 %v883, %v956
    %v958 = vpop.f32.mrb[0].mxu0
    %959 = vdwg.mxu0
    %vm960 = vcmp.ge.f32.partialorder %v952, 0.0
    %vm961 = vcmp.ge.f32.partialorder %v957, 0.0
    %v962 = vmul.f32 %v952, 0.01
    %v963 = vmul.f32 %v957, 0.01
    %v964 = vsel %vm960, %v952, %v962
    %v965 = vsel %vm961, %v957, %v963
    %v966 = vld [vmem:[#allocation11] sm:$0xff]
    %v967 = vld [vmem:[#allocation11 + $0x8] sm:$0xff]
    %v968 = vld [vmem:[#allocation11 + $0x10] sm:$0xff]
    %v969 = vld [vmem:[#allocation11 + $0x18] sm:$0xff]
    %v970 = vld [vmem:[#allocation11 + $0x20] sm:$0xff]
    %v971 = vld [vmem:[#allocation11 + $0x28] sm:$0xff]
    %v972 = vld [vmem:[#allocation11 + $0x30] sm:$0xff]
    %v973 = vld [vmem:[#allocation11 + $0x38] sm:$0xff]
    %v974 = vld [vmem:[#allocation11 + $0x40] sm:$0xff]
    %v975 = vld [vmem:[#allocation11 + $0x48] sm:$0xff]
    %v976 = vld [vmem:[#allocation11 + $0x50] sm:$0xff]
    %v977 = vld [vmem:[#allocation11 + $0x58] sm:$0xff]
    %v978 = vld [vmem:[#allocation11 + $0x60] sm:$0xff]
    %v979 = vld [vmem:[#allocation11 + $0x68] sm:$0xff]
    %v980 = vld [vmem:[#allocation11 + $0x70] sm:$0xff]
    %v981 = vld [vmem:[#allocation11 + $0x78] sm:$0xff]
    %s982 = scalar_lea.vmem [#allocation7], 768
    %v983 = vld [vmem:[%s982] sm:$0xff]
    %v984 = vld [vmem:[%s982 + $0x8] sm:$0xff]
    %v985 = vld [vmem:[%s982 + $0x10] sm:$0xff]
    %v986 = vld [vmem:[%s982 + $0x18] sm:$0xff]
    %v987 = vld [vmem:[%s982 + $0x20] sm:$0xff]
    %v988 = vld [vmem:[%s982 + $0x28] sm:$0xff]
    %v989 = vld [vmem:[%s982 + $0x30] sm:$0xff]
    %v990 = vld [vmem:[%s982 + $0x38] sm:$0xff]
    %v991 = vld [vmem:[%s982 + $0x40] sm:$0xff]
    %v992 = vld [vmem:[%s982 + $0x48] sm:$0xff]
    %v993 = vld [vmem:[%s982 + $0x50] sm:$0xff]
    %v994 = vld [vmem:[%s982 + $0x58] sm:$0xff]
    %v995 = vld [vmem:[%s982 + $0x60] sm:$0xff]
    %v996 = vld [vmem:[%s982 + $0x68] sm:$0xff]
    %v997 = vld [vmem:[%s982 + $0x70] sm:$0xff]
    %v998 = vld [vmem:[%s982 + $0x78] sm:$0xff]
    %s999 = scalar_lea.vmem [#allocation8], 6
    %v1000 = vld [vmem:[%s999] sm:$0x1]
    %v1002 = vlaneseq
    %v1003 = vshrl.u32 %v1002, 7
    %v1004 = vsub.s32 0, %v1003
    %v1005 = vrot.slane %v1000, %v1004
    %1007 = vmatprep.subr.mxu0 0.0
    %1008 = vmatpush1.msra.mxu0 %v983
    %1009 = vmatprep.subr.mxu0 0.0
    %1010 = vmatpush1.msra.mxu0 %v984
    %1011 = vmatprep.subr.mxu0 0.0
    %1012 = vmatpush1.msra.mxu0 %v985
    %1013 = vmatprep.subr.mxu0 0.0
    %1014 = vmatpush1.msra.mxu0 %v986
    %1015 = vmatprep.subr.mxu0 0.0
    %1016 = vmatpush1.msra.mxu0 %v987
    %1017 = vmatprep.subr.mxu0 0.0
    %1018 = vmatpush1.msra.mxu0 %v988
    %1019 = vmatprep.subr.mxu0 0.0
    %1020 = vmatpush1.msra.mxu0 %v989
    %1021 = vmatprep.subr.mxu0 0.0
    %1022 = vmatpush1.msra.mxu0 %v990
    %1023 = vmatprep.subr.mxu0 0.0
    %1024 = vmatpush1.msra.mxu0 %v991
    %1025 = vmatprep.subr.mxu0 0.0
    %1026 = vmatpush1.msra.mxu0 %v992
    %1027 = vmatprep.subr.mxu0 0.0
    %1028 = vmatpush1.msra.mxu0 %v993
    %1029 = vmatprep.subr.mxu0 0.0
    %1030 = vmatpush1.msra.mxu0 %v994
    %1031 = vmatprep.subr.mxu0 0.0
    %1032 = vmatpush1.msra.mxu0 %v995
    %1033 = vmatprep.subr.mxu0 0.0
    %1034 = vmatpush1.msra.mxu0 %v996
    %1035 = vmatprep.subr.mxu0 0.0
    %1036 = vmatpush1.msra.mxu0 %v997
    %1037 = vmatprep.subr.mxu0 0.0
    %1038 = vmatpush1.msra.mxu0 %v998
    %1039 = vmatprep.subr.mxu0 0.0
    %1040 = vmatpush1.msra.mxu0 0.0
    %1041 = vmatprep.subr.mxu0 0.0
    %1042 = vmatpush1.msra.mxu0 0.0
    %1043 = vmatprep.subr.mxu0 0.0
    %1044 = vmatpush1.msra.mxu0 0.0
    %1045 = vmatprep.subr.mxu0 0.0
    %1046 = vmatpush1.msra.mxu0 0.0
    %1047 = vmatprep.subr.mxu0 0.0
    %1048 = vmatpush1.msra.mxu0 0.0
    %1049 = vmatprep.subr.mxu0 0.0
    %1050 = vmatpush1.msra.mxu0 0.0
    %1051 = vmatprep.subr.mxu0 0.0
    %1052 = vmatpush1.msra.mxu0 0.0
    %1053 = vmatprep.subr.mxu0 0.0
    %1054 = vmatpush1.msra.mxu0 0.0
    %1055 = vmatprep.subr.mxu0 0.0
    %1056 = vmatpush1.msra.mxu0 0.0
    %1057 = vmatprep.subr.mxu0 0.0
    %1058 = vmatpush1.msra.mxu0 0.0
    %1059 = vmatprep.subr.mxu0 0.0
    %1060 = vmatpush1.msra.mxu0 0.0
    %1061 = vmatprep.subr.mxu0 0.0
    %1062 = vmatpush1.msra.mxu0 0.0
    %1063 = vmatprep.subr.mxu0 0.0
    %1064 = vmatpush1.msra.mxu0 0.0
    %1065 = vmatprep.subr.mxu0 0.0
    %1066 = vmatpush1.msra.mxu0 0.0
    %1067 = vmatprep.subr.mxu0 0.0
    %1068 = vmatpush1.msra.mxu0 0.0
    %1069 = vmatprep.subr.mxu0 0.0
    %1070 = vmatpush1.msra.mxu0 0.0
    %1071 = vmatprep.mubr.f32.mxu0 0.0
    %1072 = vmatmul.mubr.f32.gmra.mrb[0].mxu0 %v428
    %v1073 = vpop.f32.mrb[0].mxu0
    %v1074 = vadd.f32 %v1005, %v1073
    %v1075 = vpop.f32.mrb[0].mxu0
    %1076 = vmatprep.mubr.f32.mxu0 0.0
    %1077 = vmatmul.mubr.f32.gmra.mrb[0].mxu0 %v429
    %v1078 = vpop.f32.mrb[0].mxu0
    %v1079 = vadd.f32 %v1005, %v1078
    %v1080 = vpop.f32.mrb[0].mxu0
    %1081 = vdwg.mxu0
    %vm1082 = vcmp.ge.f32.partialorder %v1074, 0.0
    %vm1083 = vcmp.ge.f32.partialorder %v1079, 0.0
    %v1084 = vmul.f32 %v1074, 0.01
    %v1085 = vmul.f32 %v1079, 0.01
    %v1086 = vsel %vm1082, %v1074, %v1084
    %v1087 = vsel %vm1083, %v1079, %v1085
    %s1088 = scalar_lea.vmem [#allocation7], 896
    %v1089 = vld [vmem:[%s1088] sm:$0xff]
    %v1090 = vld [vmem:[%s1088 + $0x8] sm:$0xff]
    %v1091 = vld [vmem:[%s1088 + $0x10] sm:$0xff]
    %v1092 = vld [vmem:[%s1088 + $0x18] sm:$0xff]
    %v1093 = vld [vmem:[%s1088 + $0x20] sm:$0xff]
    %v1094 = vld [vmem:[%s1088 + $0x28] sm:$0xff]
    %v1095 = vld [vmem:[%s1088 + $0x30] sm:$0xff]
    %v1096 = vld [vmem:[%s1088 + $0x38] sm:$0xff]
    %v1097 = vld [vmem:[%s1088 + $0x40] sm:$0xff]
    %v1098 = vld [vmem:[%s1088 + $0x48] sm:$0xff]
    %v1099 = vld [vmem:[%s1088 + $0x50] sm:$0xff]
    %v1100 = vld [vmem:[%s1088 + $0x58] sm:$0xff]
    %v1101 = vld [vmem:[%s1088 + $0x60] sm:$0xff]
    %v1102 = vld [vmem:[%s1088 + $0x68] sm:$0xff]
    %v1103 = vld [vmem:[%s1088 + $0x70] sm:$0xff]
    %v1104 = vld [vmem:[%s1088 + $0x78] sm:$0xff]
    %1105 = vmatprep.subr.mxu0 0.0
    %1106 = vmatpush1.msra.mxu0 %v1089
    %1107 = vmatprep.subr.mxu0 0.0
    %1108 = vmatpush1.msra.mxu0 %v1090
    %1109 = vmatprep.subr.mxu0 0.0
    %1110 = vmatpush1.msra.mxu0 %v1091
    %1111 = vmatprep.subr.mxu0 0.0
    %1112 = vmatpush1.msra.mxu0 %v1092
    %1113 = vmatprep.subr.mxu0 0.0
    %1114 = vmatpush1.msra.mxu0 %v1093
    %1115 = vmatprep.subr.mxu0 0.0
    %1116 = vmatpush1.msra.mxu0 %v1094
    %1117 = vmatprep.subr.mxu0 0.0
    %1118 = vmatpush1.msra.mxu0 %v1095
    %1119 = vmatprep.subr.mxu0 0.0
    %1120 = vmatpush1.msra.mxu0 %v1096
    %1121 = vmatprep.subr.mxu0 0.0
    %1122 = vmatpush1.msra.mxu0 %v1097
    %1123 = vmatprep.subr.mxu0 0.0
    %1124 = vmatpush1.msra.mxu0 %v1098
    %1125 = vmatprep.subr.mxu0 0.0
    %1126 = vmatpush1.msra.mxu0 %v1099
    %1127 = vmatprep.subr.mxu0 0.0
    %1128 = vmatpush1.msra.mxu0 %v1100
    %1129 = vmatprep.subr.mxu0 0.0
    %1130 = vmatpush1.msra.mxu0 %v1101
    %1131 = vmatprep.subr.mxu0 0.0
    %1132 = vmatpush1.msra.mxu0 %v1102
    %1133 = vmatprep.subr.mxu0 0.0
    %1134 = vmatpush1.msra.mxu0 %v1103
    %1135 = vmatprep.subr.mxu0 0.0
    %1136 = vmatpush1.msra.mxu0 %v1104
    %1137 = vmatprep.subr.mxu0 0.0
    %1138 = vmatpush1.msra.mxu0 0.0
    %1139 = vmatprep.subr.mxu0 0.0
    %1140 = vmatpush1.msra.mxu0 0.0
    %1141 = vmatprep.subr.mxu0 0.0
    %1142 = vmatpush1.msra.mxu0 0.0
    %1143 = vmatprep.subr.mxu0 0.0
    %1144 = vmatpush1.msra.mxu0 0.0
    %1145 = vmatprep.subr.mxu0 0.0
    %1146 = vmatpush1.msra.mxu0 0.0
    %1147 = vmatprep.subr.mxu0 0.0
    %1148 = vmatpush1.msra.mxu0 0.0
    %1149 = vmatprep.subr.mxu0 0.0
    %1150 = vmatpush1.msra.mxu0 0.0
    %1151 = vmatprep.subr.mxu0 0.0
    %1152 = vmatpush1.msra.mxu0 0.0
    %1153 = vmatprep.subr.mxu0 0.0
    %1154 = vmatpush1.msra.mxu0 0.0
    %1155 = vmatprep.subr.mxu0 0.0
    %1156 = vmatpush1.msra.mxu0 0.0
    %1157 = vmatprep.subr.mxu0 0.0
    %1158 = vmatpush1.msra.mxu0 0.0
    %1159 = vmatprep.subr.mxu0 0.0
    %1160 = vmatpush1.msra.mxu0 0.0
    %1161 = vmatprep.subr.mxu0 0.0
    %1162 = vmatpush1.msra.mxu0 0.0
    %1163 = vmatprep.subr.mxu0 0.0
    %1164 = vmatpush1.msra.mxu0 0.0
    %1165 = vmatprep.subr.mxu0 0.0
    %1166 = vmatpush1.msra.mxu0 0.0
    %1167 = vmatprep.subr.mxu0 0.0
    %1168 = vmatpush1.msra.mxu0 0.0
    %1169 = vmatprep.mubr.f32.mxu0 0.0
    %1170 = vmatmul.mubr.f32.gmra.mrb[0].mxu0 %v1086
    %v1171 = vpop.f32.mrb[0].mxu0
    %v1172 = vadd.f32 0.0, %v1171
    %v1173 = vpop.f32.mrb[0].mxu0
    %1174 = vmatprep.mubr.f32.mxu0 0.0
    %1175 = vmatmul.mubr.f32.gmra.mrb[0].mxu0 %v1087
    %v1176 = vpop.f32.mrb[0].mxu0
    %v1177 = vadd.f32 0.0, %v1176
    %v1178 = vpop.f32.mrb[0].mxu0
    %1179 = vdwg.mxu0
    %v1180 = vadd.f32 %v428, %v1172
    %v1181 = vadd.f32 %v429, %v1177
    %s1182 = scalar_lea.vmem [#allocation8], 7
    %v1183 = vld [vmem:[%s1182] sm:$0x1]
    %v1185 = vlaneseq
    %v1186 = vshrl.u32 %v1185, 7
    %v1187 = vsub.s32 0, %v1186
    %v1188 = vrot.slane %v1183, %v1187
    %v1190 = vadd.f32 %v1180, %v1188
    %v1191 = vadd.f32 %v1181, %v1188
    %vm1192 = vcmp.ge.f32.partialorder %v1190, 0.0
    %vm1193 = vcmp.ge.f32.partialorder %v1191, 0.0
    %v1194 = vmul.f32 %v1190, 0.01
    %v1195 = vmul.f32 %v1191, 0.01
    %v1196 = vsel %vm1192, %v1190, %v1194
    %v1197 = vsel %vm1193, %v1191, %v1195
    %s1198 = scalar_lea.vmem [#allocation7], 1024
    %v1199 = vld [vmem:[%s1198] sm:$0xff]
    %v1200 = vld [vmem:[%s1198 + $0x8] sm:$0xff]
    %v1201 = vld [vmem:[%s1198 + $0x10] sm:$0xff]
    %v1202 = vld [vmem:[%s1198 + $0x18] sm:$0xff]
    %v1203 = vld [vmem:[%s1198 + $0x20] sm:$0xff]
    %v1204 = vld [vmem:[%s1198 + $0x28] sm:$0xff]
    %v1205 = vld [vmem:[%s1198 + $0x30] sm:$0xff]
    %v1206 = vld [vmem:[%s1198 + $0x38] sm:$0xff]
    %v1207 = vld [vmem:[%s1198 + $0x40] sm:$0xff]
    %v1208 = vld [vmem:[%s1198 + $0x48] sm:$0xff]
    %v1209 = vld [vmem:[%s1198 + $0x50] sm:$0xff]
    %v1210 = vld [vmem:[%s1198 + $0x58] sm:$0xff]
    %v1211 = vld [vmem:[%s1198 + $0x60] sm:$0xff]
    %v1212 = vld [vmem:[%s1198 + $0x68] sm:$0xff]
    %v1213 = vld [vmem:[%s1198 + $0x70] sm:$0xff]
    %v1214 = vld [vmem:[%s1198 + $0x78] sm:$0xff]
    %s1215 = scalar_lea.vmem [#allocation8], 8
    %v1216 = vld [vmem:[%s1215] sm:$0x1]
    %v1218 = vlaneseq
    %v1219 = vshrl.u32 %v1218, 7
    %v1220 = vsub.s32 0, %v1219
    %v1221 = vrot.slane %v1216, %v1220
    %1223 = vmatprep.subr.mxu0 0.0
    %1224 = vmatpush1.msra.mxu0 %v1199
    %1225 = vmatprep.subr.mxu0 0.0
    %1226 = vmatpush1.msra.mxu0 %v1200
    %1227 = vmatprep.subr.mxu0 0.0
    %1228 = vmatpush1.msra.mxu0 %v1201
    %1229 = vmatprep.subr.mxu0 0.0
    %1230 = vmatpush1.msra.mxu0 %v1202
    %1231 = vmatprep.subr.mxu0 0.0
    %1232 = vmatpush1.msra.mxu0 %v1203
    %1233 = vmatprep.subr.mxu0 0.0
    %1234 = vmatpush1.msra.mxu0 %v1204
    %1235 = vmatprep.subr.mxu0 0.0
    %1236 = vmatpush1.msra.mxu0 %v1205
    %1237 = vmatprep.subr.mxu0 0.0
    %1238 = vmatpush1.msra.mxu0 %v1206
    %1239 = vmatprep.subr.mxu0 0.0
    %1240 = vmatpush1.msra.mxu0 %v1207
    %1241 = vmatprep.subr.mxu0 0.0
    %1242 = vmatpush1.msra.mxu0 %v1208
    %1243 = vmatprep.subr.mxu0 0.0
    %1244 = vmatpush1.msra.mxu0 %v1209
    %1245 = vmatprep.subr.mxu0 0.0
    %1246 = vmatpush1.msra.mxu0 %v1210
    %1247 = vmatprep.subr.mxu0 0.0
    %1248 = vmatpush1.msra.mxu0 %v1211
    %1249 = vmatprep.subr.mxu0 0.0
    %1250 = vmatpush1.msra.mxu0 %v1212
    %1251 = vmatprep.subr.mxu0 0.0
    %1252 = vmatpush1.msra.mxu0 %v1213
    %1253 = vmatprep.subr.mxu0 0.0
    %1254 = vmatpush1.msra.mxu0 %v1214
    %1255 = vmatprep.subr.mxu0 0.0
    %1256 = vmatpush1.msra.mxu0 0.0
    %1257 = vmatprep.subr.mxu0 0.0
    %1258 = vmatpush1.msra.mxu0 0.0
    %1259 = vmatprep.subr.mxu0 0.0
    %1260 = vmatpush1.msra.mxu0 0.0
    %1261 = vmatprep.subr.mxu0 0.0
    %1262 = vmatpush1.msra.mxu0 0.0
    %1263 = vmatprep.subr.mxu0 0.0
    %1264 = vmatpush1.msra.mxu0 0.0
    %1265 = vmatprep.subr.mxu0 0.0
    %1266 = vmatpush1.msra.mxu0 0.0
    %1267 = vmatprep.subr.mxu0 0.0
    %1268 = vmatpush1.msra.mxu0 0.0
    %1269 = vmatprep.subr.mxu0 0.0
    %1270 = vmatpush1.msra.mxu0 0.0
    %1271 = vmatprep.subr.mxu0 0.0
    %1272 = vmatpush1.msra.mxu0 0.0
    %1273 = vmatprep.subr.mxu0 0.0
    %1274 = vmatpush1.msra.mxu0 0.0
    %1275 = vmatprep.subr.mxu0 0.0
    %1276 = vmatpush1.msra.mxu0 0.0
    %1277 = vmatprep.subr.mxu0 0.0
    %1278 = vmatpush1.msra.mxu0 0.0
    %1279 = vmatprep.subr.mxu0 0.0
    %1280 = vmatpush1.msra.mxu0 0.0
    %1281 = vmatprep.subr.mxu0 0.0
    %1282 = vmatpush1.msra.mxu0 0.0
    %1283 = vmatprep.subr.mxu0 0.0
    %1284 = vmatpush1.msra.mxu0 0.0
    %1285 = vmatprep.subr.mxu0 0.0
    %1286 = vmatpush1.msra.mxu0 0.0
    %1287 = vmatprep.mubr.f32.mxu0 0.0
    %1288 = vmatmul.mubr.f32.gmra.mrb[0].mxu0 %v1196
    %v1289 = vpop.f32.mrb[0].mxu0
    %v1290 = vadd.f32 %v1221, %v1289
    %v1291 = vpop.f32.mrb[0].mxu0
    %1292 = vmatprep.mubr.f32.mxu0 0.0
    %1293 = vmatmul.mubr.f32.gmra.mrb[0].mxu0 %v1197
    %v1294 = vpop.f32.mrb[0].mxu0
    %v1295 = vadd.f32 %v1221, %v1294
    %v1296 = vpop.f32.mrb[0].mxu0
    %1297 = vdwg.mxu0
    %vm1298 = vcmp.ge.f32.partialorder %v1290, 0.0
    %vm1299 = vcmp.ge.f32.partialorder %v1295, 0.0
    %v1300 = vmul.f32 %v1290, 0.01
    %v1301 = vmul.f32 %v1295, 0.01
    %v1302 = vsel %vm1298, %v1290, %v1300
    %v1303 = vsel %vm1299, %v1295, %v1301
    %s1304 = scalar_lea.vmem [#allocation7], 1152
    %v1305 = vld [vmem:[%s1304] sm:$0xff]
    %v1306 = vld [vmem:[%s1304 + $0x8] sm:$0xff]
    %v1307 = vld [vmem:[%s1304 + $0x10] sm:$0xff]
    %v1308 = vld [vmem:[%s1304 + $0x18] sm:$0xff]
    %v1309 = vld [vmem:[%s1304 + $0x20] sm:$0xff]
    %v1310 = vld [vmem:[%s1304 + $0x28] sm:$0xff]
    %v1311 = vld [vmem:[%s1304 + $0x30] sm:$0xff]
    %v1312 = vld [vmem:[%s1304 + $0x38] sm:$0xff]
    %v1313 = vld [vmem:[%s1304 + $0x40] sm:$0xff]
    %v1314 = vld [vmem:[%s1304 + $0x48] sm:$0xff]
    %v1315 = vld [vmem:[%s1304 + $0x50] sm:$0xff]
    %v1316 = vld [vmem:[%s1304 + $0x58] sm:$0xff]
    %v1317 = vld [vmem:[%s1304 + $0x60] sm:$0xff]
    %v1318 = vld [vmem:[%s1304 + $0x68] sm:$0xff]
    %v1319 = vld [vmem:[%s1304 + $0x70] sm:$0xff]
    %v1320 = vld [vmem:[%s1304 + $0x78] sm:$0xff]
    %1321 = vmatprep.subr.mxu0 0.0
    %1322 = vmatpush1.msra.mxu0 %v1305
    %1323 = vmatprep.subr.mxu0 0.0
    %1324 = vmatpush1.msra.mxu0 %v1306
    %1325 = vmatprep.subr.mxu0 0.0
    %1326 = vmatpush1.msra.mxu0 %v1307
    %1327 = vmatprep.subr.mxu0 0.0
    %1328 = vmatpush1.msra.mxu0 %v1308
    %1329 = vmatprep.subr.mxu0 0.0
    %1330 = vmatpush1.msra.mxu0 %v1309
    %1331 = vmatprep.subr.mxu0 0.0
    %1332 = vmatpush1.msra.mxu0 %v1310
    %1333 = vmatprep.subr.mxu0 0.0
    %1334 = vmatpush1.msra.mxu0 %v1311
    %1335 = vmatprep.subr.mxu0 0.0
    %1336 = vmatpush1.msra.mxu0 %v1312
    %1337 = vmatprep.subr.mxu0 0.0
    %1338 = vmatpush1.msra.mxu0 %v1313
    %1339 = vmatprep.subr.mxu0 0.0
    %1340 = vmatpush1.msra.mxu0 %v1314
    %1341 = vmatprep.subr.mxu0 0.0
    %1342 = vmatpush1.msra.mxu0 %v1315
    %1343 = vmatprep.subr.mxu0 0.0
    %1344 = vmatpush1.msra.mxu0 %v1316
    %1345 = vmatprep.subr.mxu0 0.0
    %1346 = vmatpush1.msra.mxu0 %v1317
    %1347 = vmatprep.subr.mxu0 0.0
    %1348 = vmatpush1.msra.mxu0 %v1318
    %1349 = vmatprep.subr.mxu0 0.0
    %1350 = vmatpush1.msra.mxu0 %v1319
    %1351 = vmatprep.subr.mxu0 0.0
    %1352 = vmatpush1.msra.mxu0 %v1320
    %1353 = vmatprep.subr.mxu0 0.0
    %1354 = vmatpush1.msra.mxu0 0.0
    %1355 = vmatprep.subr.mxu0 0.0
    %1356 = vmatpush1.msra.mxu0 0.0
    %1357 = vmatprep.subr.mxu0 0.0
    %1358 = vmatpush1.msra.mxu0 0.0
    %1359 = vmatprep.subr.mxu0 0.0
    %1360 = vmatpush1.msra.mxu0 0.0
    %1361 = vmatprep.subr.mxu0 0.0
    %1362 = vmatpush1.msra.mxu0 0.0
    %1363 = vmatprep.subr.mxu0 0.0
    %1364 = vmatpush1.msra.mxu0 0.0
    %1365 = vmatprep.subr.mxu0 0.0
    %1366 = vmatpush1.msra.mxu0 0.0
    %1367 = vmatprep.subr.mxu0 0.0
    %1368 = vmatpush1.msra.mxu0 0.0
    %1369 = vmatprep.subr.mxu0 0.0
    %1370 = vmatpush1.msra.mxu0 0.0
    %1371 = vmatprep.subr.mxu0 0.0
    %1372 = vmatpush1.msra.mxu0 0.0
    %1373 = vmatprep.subr.mxu0 0.0
    %1374 = vmatpush1.msra.mxu0 0.0
    %1375 = vmatprep.subr.mxu0 0.0
    %1376 = vmatpush1.msra.mxu0 0.0
    %1377 = vmatprep.subr.mxu0 0.0
    %1378 = vmatpush1.msra.mxu0 0.0
    %1379 = vmatprep.subr.mxu0 0.0
    %1380 = vmatpush1.msra.mxu0 0.0
    %1381 = vmatprep.subr.mxu0 0.0
    %1382 = vmatpush1.msra.mxu0 0.0
    %1383 = vmatprep.subr.mxu0 0.0
    %1384 = vmatpush1.msra.mxu0 0.0
    %1385 = vmatprep.mubr.f32.mxu0 0.0
    %1386 = vmatmul.mubr.f32.gmra.mrb[0].mxu0 %v1302
    %v1387 = vpop.f32.mrb[0].mxu0
    %v1388 = vadd.f32 0.0, %v1387
    %v1389 = vpop.f32.mrb[0].mxu0
    %1390 = vmatprep.mubr.f32.mxu0 0.0
    %1391 = vmatmul.mubr.f32.gmra.mrb[0].mxu0 %v1303
    %v1392 = vpop.f32.mrb[0].mxu0
    %v1393 = vadd.f32 0.0, %v1392
    %v1394 = vpop.f32.mrb[0].mxu0
    %1395 = vdwg.mxu0
    %v1396 = vadd.f32 %v1196, %v1388
    %v1397 = vadd.f32 %v1197, %v1393
    %s1398 = scalar_lea.vmem [#allocation8], 9
    %v1399 = vld [vmem:[%s1398] sm:$0x1]
    %v1401 = vlaneseq
    %v1402 = vshrl.u32 %v1401, 7
    %v1403 = vsub.s32 0, %v1402
    %v1404 = vrot.slane %v1399, %v1403
    %v1406 = vadd.f32 %v1396, %v1404
    %v1407 = vadd.f32 %v1397, %v1404
    %vm1408 = vcmp.ge.f32.partialorder %v1406, 0.0
    %vm1409 = vcmp.ge.f32.partialorder %v1407, 0.0
    %v1410 = vmul.f32 %v1406, 0.01
    %v1411 = vmul.f32 %v1407, 0.01
    %v1412 = vsel %vm1408, %v1406, %v1410
    %v1413 = vsel %vm1409, %v1407, %v1411
    %s1414 = scalar_lea.vmem [#allocation11], 128
    %v1415 = vld [vmem:[%s1414] sm:$0xff]
    %v1416 = vld [vmem:[%s1414 + $0x8] sm:$0xff]
    %v1417 = vld [vmem:[%s1414 + $0x10] sm:$0xff]
    %v1418 = vld [vmem:[%s1414 + $0x18] sm:$0xff]
    %v1419 = vld [vmem:[%s1414 + $0x20] sm:$0xff]
    %v1420 = vld [vmem:[%s1414 + $0x28] sm:$0xff]
    %v1421 = vld [vmem:[%s1414 + $0x30] sm:$0xff]
    %v1422 = vld [vmem:[%s1414 + $0x38] sm:$0xff]
    %v1423 = vld [vmem:[%s1414 + $0x40] sm:$0xff]
    %v1424 = vld [vmem:[%s1414 + $0x48] sm:$0xff]
    %v1425 = vld [vmem:[%s1414 + $0x50] sm:$0xff]
    %v1426 = vld [vmem:[%s1414 + $0x58] sm:$0xff]
    %v1427 = vld [vmem:[%s1414 + $0x60] sm:$0xff]
    %v1428 = vld [vmem:[%s1414 + $0x68] sm:$0xff]
    %v1429 = vld [vmem:[%s1414 + $0x70] sm:$0xff]
    %v1430 = vld [vmem:[%s1414 + $0x78] sm:$0xff]
    %1431 = vmatprep.subr.mxu0 0.0
    %1432 = vmatpush1.msra.mxu0 %v1415
    %1433 = vmatprep.subr.mxu0 0.0
    %1434 = vmatpush1.msra.mxu0 %v1416
    %1435 = vmatprep.subr.mxu0 0.0
    %1436 = vmatpush1.msra.mxu0 %v1417
    %1437 = vmatprep.subr.mxu0 0.0
    %1438 = vmatpush1.msra.mxu0 %v1418
    %1439 = vmatprep.subr.mxu0 0.0
    %1440 = vmatpush1.msra.mxu0 %v1419
    %1441 = vmatprep.subr.mxu0 0.0
    %1442 = vmatpush1.msra.mxu0 %v1420
    %1443 = vmatprep.subr.mxu0 0.0
    %1444 = vmatpush1.msra.mxu0 %v1421
    %1445 = vmatprep.subr.mxu0 0.0
    %1446 = vmatpush1.msra.mxu0 %v1422
    %1447 = vmatprep.subr.mxu0 0.0
    %1448 = vmatpush1.msra.mxu0 %v1423
    %1449 = vmatprep.subr.mxu0 0.0
    %1450 = vmatpush1.msra.mxu0 %v1424
    %1451 = vmatprep.subr.mxu0 0.0
    %1452 = vmatpush1.msra.mxu0 %v1425
    %1453 = vmatprep.subr.mxu0 0.0
    %1454 = vmatpush1.msra.mxu0 %v1426
    %1455 = vmatprep.subr.mxu0 0.0
    %1456 = vmatpush1.msra.mxu0 %v1427
    %1457 = vmatprep.subr.mxu0 0.0
    %1458 = vmatpush1.msra.mxu0 %v1428
    %1459 = vmatprep.subr.mxu0 0.0
    %1460 = vmatpush1.msra.mxu0 %v1429
    %1461 = vmatprep.subr.mxu0 0.0
    %1462 = vmatpush1.msra.mxu0 %v1430
    %1463 = vmatprep.subr.mxu0 0.0
    %1464 = vmatpush1.msra.mxu0 0.0
    %1465 = vmatprep.subr.mxu0 0.0
    %1466 = vmatpush1.msra.mxu0 0.0
    %1467 = vmatprep.subr.mxu0 0.0
    %1468 = vmatpush1.msra.mxu0 0.0
    %1469 = vmatprep.subr.mxu0 0.0
    %1470 = vmatpush1.msra.mxu0 0.0
    %1471 = vmatprep.subr.mxu0 0.0
    %1472 = vmatpush1.msra.mxu0 0.0
    %1473 = vmatprep.subr.mxu0 0.0
    %1474 = vmatpush1.msra.mxu0 0.0
    %1475 = vmatprep.subr.mxu0 0.0
    %1476 = vmatpush1.msra.mxu0 0.0
    %1477 = vmatprep.subr.mxu0 0.0
    %1478 = vmatpush1.msra.mxu0 0.0
    %1479 = vmatprep.subr.mxu0 0.0
    %1480 = vmatpush1.msra.mxu0 0.0
    %1481 = vmatprep.subr.mxu0 0.0
    %1482 = vmatpush1.msra.mxu0 0.0
    %1483 = vmatprep.subr.mxu0 0.0
    %1484 = vmatpush1.msra.mxu0 0.0
    %1485 = vmatprep.subr.mxu0 0.0
    %1486 = vmatpush1.msra.mxu0 0.0
    %1487 = vmatprep.subr.mxu0 0.0
    %1488 = vmatpush1.msra.mxu0 0.0
    %1489 = vmatprep.subr.mxu0 0.0
    %1490 = vmatpush1.msra.mxu0 0.0
    %1491 = vmatprep.subr.mxu0 0.0
    %1492 = vmatpush1.msra.mxu0 0.0
    %1493 = vmatprep.subr.mxu0 0.0
    %1494 = vmatpush1.msra.mxu0 0.0
    %1495 = vmatprep.mubr.f32.mxu0 0.0
    %1496 = vmatmul.mubr.f32.gmra.mrb[0].mxu0 %v1412
    %v1497 = vpop.f32.mrb[0].mxu0
    %v1498 = vadd.f32 0.0, %v1497
    %v1499 = vpop.f32.mrb[0].mxu0
    %1500 = vmatprep.mubr.f32.mxu0 0.0
    %1501 = vmatmul.mubr.f32.gmra.mrb[0].mxu0 %v1413
    %v1502 = vpop.f32.mrb[0].mxu0
    %v1503 = vadd.f32 0.0, %v1502
    %v1504 = vpop.f32.mrb[0].mxu0
    %1505 = vdwg.mxu0
    %1506 = vmatprep.subr.mxu0 0.0
    %1507 = vmatpush1.msra.mxu0 %v966
    %1508 = vmatprep.subr.mxu0 0.0
    %1509 = vmatpush1.msra.mxu0 %v967
    %1510 = vmatprep.subr.mxu0 0.0
    %1511 = vmatpush1.msra.mxu0 %v968
    %1512 = vmatprep.subr.mxu0 0.0
    %1513 = vmatpush1.msra.mxu0 %v969
    %1514 = vmatprep.subr.mxu0 0.0
    %1515 = vmatpush1.msra.mxu0 %v970
    %1516 = vmatprep.subr.mxu0 0.0
    %1517 = vmatpush1.msra.mxu0 %v971
    %1518 = vmatprep.subr.mxu0 0.0
    %1519 = vmatpush1.msra.mxu0 %v972
    %1520 = vmatprep.subr.mxu0 0.0
    %1521 = vmatpush1.msra.mxu0 %v973
    %1522 = vmatprep.subr.mxu0 0.0
    %1523 = vmatpush1.msra.mxu0 %v974
    %1524 = vmatprep.subr.mxu0 0.0
    %1525 = vmatpush1.msra.mxu0 %v975
    %1526 = vmatprep.subr.mxu0 0.0
    %1527 = vmatpush1.msra.mxu0 %v976
    %1528 = vmatprep.subr.mxu0 0.0
    %1529 = vmatpush1.msra.mxu0 %v977
    %1530 = vmatprep.subr.mxu0 0.0
    %1531 = vmatpush1.msra.mxu0 %v978
    %1532 = vmatprep.subr.mxu0 0.0
    %1533 = vmatpush1.msra.mxu0 %v979
    %1534 = vmatprep.subr.mxu0 0.0
    %1535 = vmatpush1.msra.mxu0 %v980
    %1536 = vmatprep.subr.mxu0 0.0
    %1537 = vmatpush1.msra.mxu0 %v981
    %1538 = vmatprep.subr.mxu0 0.0
    %1539 = vmatpush1.msra.mxu0 0.0
    %1540 = vmatprep.subr.mxu0 0.0
    %1541 = vmatpush1.msra.mxu0 0.0
    %1542 = vmatprep.subr.mxu0 0.0
    %1543 = vmatpush1.msra.mxu0 0.0
    %1544 = vmatprep.subr.mxu0 0.0
    %1545 = vmatpush1.msra.mxu0 0.0
    %1546 = vmatprep.subr.mxu0 0.0
    %1547 = vmatpush1.msra.mxu0 0.0
    %1548 = vmatprep.subr.mxu0 0.0
    %1549 = vmatpush1.msra.mxu0 0.0
    %1550 = vmatprep.subr.mxu0 0.0
    %1551 = vmatpush1.msra.mxu0 0.0
    %1552 = vmatprep.subr.mxu0 0.0
    %1553 = vmatpush1.msra.mxu0 0.0
    %1554 = vmatprep.subr.mxu0 0.0
    %1555 = vmatpush1.msra.mxu0 0.0
    %1556 = vmatprep.subr.mxu0 0.0
    %1557 = vmatpush1.msra.mxu0 0.0
    %1558 = vmatprep.subr.mxu0 0.0
    %1559 = vmatpush1.msra.mxu0 0.0
    %1560 = vmatprep.subr.mxu0 0.0
    %1561 = vmatpush1.msra.mxu0 0.0
    %1562 = vmatprep.subr.mxu0 0.0
    %1563 = vmatpush1.msra.mxu0 0.0
    %1564 = vmatprep.subr.mxu0 0.0
    %1565 = vmatpush1.msra.mxu0 0.0
    %1566 = vmatprep.subr.mxu0 0.0
    %1567 = vmatpush1.msra.mxu0 0.0
    %1568 = vmatprep.subr.mxu0 0.0
    %1569 = vmatpush1.msra.mxu0 0.0
    %1570 = vmatprep.mubr.f32.mxu0 0.0
    %1571 = vmatmul.mubr.f32.gmra.mrb[0].mxu0 %v964
    %v1572 = vpop.f32.mrb[0].mxu0
    %v1573 = vadd.f32 %v1498, %v1572
    %v1574 = vpop.f32.mrb[0].mxu0
    %1575 = vmatprep.mubr.f32.mxu0 0.0
    %1576 = vmatmul.mubr.f32.gmra.mrb[0].mxu0 %v965
    %v1577 = vpop.f32.mrb[0].mxu0
    %v1578 = vadd.f32 %v1503, %v1577
    %v1579 = vpop.f32.mrb[0].mxu0
    %1580 = vdwg.mxu0
    %v1581 = vld [vmem:[%s8] sm:$0x1]
    %v1583 = vlaneseq
    %v1584 = vshrl.u32 %v1583, 7
    %v1585 = vsub.s32 0, %v1584
    %v1586 = vrot.slane %v1581, %v1585
    %v1588 = vadd.f32 %v1573, %v1586
    %v1589 = vadd.f32 %v1578, %v1586
    %1590 = vst [vmem:[#allocation13] sm:$0xff] %v1588
    %1591 = vst [vmem:[#allocation13 + $0x8] sm:$0xff] %v1589
    // Predicated region
    $region62: #{regression_forward.1} parent=1 // pred_check
      _
    $region63: #{regression_forward.1} parent=1 // pred_check_branch
      %1593 = sbr.rel (0) target = $region65
    $region64: #{regression_forward.1} parent=1 // pred_region
      %s1595 = ssub.s32 256, 256
      %1596 = vsyncadd [#allocation4], %s1595
      %s1597 = sshll.u32 [#allocation13], 4
      %s1598 = int_to_ptr.vmem [resolvable:$true] %s1597
      %1603 = dma.vmem_to_hbm [thread:$0]  %s1598, 256, %s9, [#allocation4], 128, 128, 8
    $region65: #{regression_forward.1} parent=1 // pred_fallthru
      _
    // Predicated region
    $region66: #{regression_forward.1} parent=1 // pred_check
      _
    $region67: #{regression_forward.1} parent=1 // pred_check_branch
      %1605 = sbr.rel (0) target = $region69
    $region68: #{regression_forward.1} parent=1 // pred_region
      %1606 = dma.done [#allocation4], 256
    $region69: #{regression_forward.1} parent=1 // pred_fallthru
      _
    %1607 = vsyncpa [#allocation3], 1
    %1608 = vsyncpa [#allocation6], 1
    %1609 = vsyncpa [#allocation9], 1
    %1610 = vsyncpa [#allocation12], 1
    %1611 = vsyncpa [#allocation4], 1

</llo_original>
